<compile_context>
chip_gen: v5e
topology: v5e:2x2
jax: 0.10.0
libtpu: 0.0.40
codegen_flags: <defaults>
</compile_context>

<pallas_src>
import functools

import jax
import jax.numpy as jnp
from jax.experimental import pallas as pl
from jax.experimental.pallas import tpu as pltpu


def _round_up(n, m):
    return (n + m - 1) // m * m


def _padded_lanes(n):
    """Fused lane-axis length.

    For production sizes pad to a multiple of 512 so the tile chooser always
    finds a divisor in the 256–2048-lane sweet spot AND >=4 grid steps; tiny
    problems just round to the 128-lane vreg width.
    """
    return _round_up(n, 512 if n >= 2048 else 128)


def _choose_lane_tile(L, rows_x, rows_w, rows_o, x_itemsize, w_itemsize,
                      budget_bytes=20 * 1024 * 1024):
    """Largest lane tile (multiple of 128 dividing L) whose double-buffered I/O
    blocks (+2 MiB allowance for in-kernel temporaries) fit `budget_bytes`.

    Preference order: (a) tile >= 512 lanes AND >= 4 grid steps (so a v7x
    megacore gets >= 2 pipelined steps per TensorCore), (b) >= 4 steps,
    (c) >= 2 steps, (d) largest feasible.  Fails loudly if nothing fits
    (v7x has only 64 MiB VMEM per TensorCore).
    """
    assert L % 128 == 0
    k = L // 128
    per_lane = 2 * (rows_x * x_itemsize + rows_w * w_itemsize + rows_o * 4)
    temp_allowance = 2 * 1024 * 1024
    divs = [d for d in range(1, k + 1) if k % d == 0]
    feasible = [d for d in divs
                if per_lane * d * 128 + temp_allowance <= budget_bytes]
    if not feasible:
        raise ValueError(
            "SpectralConv3d_Uno: even a 128-lane tile exceeds the VMEM budget "
            f"(rows_x={rows_x}, rows_w={rows_w}, rows_o={rows_o}). "
            "TODO(synk): add a channel/batch grid axis for very large models.")
    for want in (lambda d: d * 128 >= 512 and k // d >= 4,
                 lambda d: k // d >= 4,
                 lambda d: k // d >= 2,
                 lambda d: True):
        cands = [d for d in feasible if want(d)]
        if cands:
            return max(cands) * 128


def _choose_chunk(tl, co):
    """Lane sub-block so the two (co, CH) f32 accumulators plus the two (co, CH)
    weight operands stay within ~half the 64 x 4 KiB vreg file."""
    limit = max(128, ((128 * 1024) // (16 * max(co, 1))) // 128 * 128)
    best, c = 128, 128
    while c <= tl:
        if tl % c == 0 and c <= limit:
            best = c
        c += 128
    return best


def _make_kernel(B, Ci, Co, TL, CH):
    """Complex channel contraction out[b,o,l] = sum_i x[b,i,l] * w[i,o,l] on one
    lane tile (all 4 spectral corners and real/imag fused onto the refs).

      x_ref : (2*B*Ci,  TL)  rows = [real(b,i)... , imag(b,i)...]
      w_ref : (2*Ci*Co, TL)  rows = [real(i,o)... , imag(i,o)...]
      o_ref : (2*B*Co,  TL)  rows = [real(b,o)... , imag(b,o)...]   (f32)
    """
    n_chunks = TL // CH
    BCi, CiCo, BCo = B * Ci, Ci * Co, B * Co

    def kernel(x_ref, w_ref, o_ref):
        # Lane sub-blocking keeps the (Co, CH) accumulators register-resident:
        # the Ci accumulation never round-trips through VMEM, so the single
        # vst slot (v5e) is not the bottleneck.  All slice starts are static.
        for c in range(n_chunks):
            sl = pl.ds(c * CH, CH)
            for b in range(B):
                acc_r = jnp.zeros((Co, CH), jnp.float32)
                acc_i = jnp.zeros((Co, CH), jnp.float32)
                for i in range(Ci):
                    # Ref-sliced loads (no whole-tile materialization).  The
                    # (1, CH) x rows broadcast against (Co, CH) weights inside
                    # the VPU ops; temporaries are a few vregs at most.
                    # (A pl.ds(..., stride=0) sublane-broadcast load would push
                    # the broadcast into the vld slot; avoided for portability.)
                    xr = x_ref[pl.ds(b * Ci + i, 1), sl].astype(jnp.float32)
                    xi = x_ref[pl.ds(BCi + b * Ci + i, 1), sl].astype(jnp.float32)
                    wr = w_ref[pl.ds(i * Co, Co), sl].astype(jnp.float32)
                    wi = w_ref[pl.ds(CiCo + i * Co, Co), sl].astype(jnp.float32)
                    acc_r = acc_r + xr * wr - xi * wi
                    acc_i = acc_i + xr * wi + xi * wr
                o_ref[pl.ds(b * Co, Co), sl] = acc_r
                o_ref[pl.ds(BCo + b * Co, Co), sl] = acc_i

    return kernel


def _compl_mul_fused(x_p, w_p, B, Ci, Co):
    """Single pallas_call over lane tiles of the fused (r/i x corners x modes) axis."""
    rows_x, L = x_p.shape
    rows_w = w_p.shape[0]
    rows_o = 2 * B * Co
    TL = _choose_lane_tile(L, rows_x, rows_w, rows_o,
                           jnp.dtype(x_p.dtype).itemsize,
                           jnp.dtype(w_p.dtype).itemsize)
    CH = _choose_chunk(TL, Co)
    kernel = _make_kernel(B, Ci, Co, TL, CH)

    return pl.pallas_call(
        kernel,
        out_shape=jax.ShapeDtypeStruct((rows_o, L), jnp.float32),
        grid_spec=pltpu.PrefetchScalarGridSpec(
            num_scalar_prefetch=0,
            grid=(L // TL,),
            in_specs=[pl.BlockSpec((rows_x, TL), lambda l: (0, l)),
                      pl.BlockSpec((rows_w, TL), lambda l: (0, l))],
            out_specs=pl.BlockSpec((rows_o, TL), lambda l: (0, l)),
        ),
        compiler_params=pltpu.CompilerParams(
            dimension_semantics=("parallel",),      # shard lane tiles across TCs
            vmem_limit_bytes=32 * 1024 * 1024,      # safe on v7x (64 MiB / TC)
        ),
    )(x_p, w_p)


def pack_weights(weights, modes, storage_dtype=jnp.float32):
    """One-time packing: 4 x (Ci, Co, m1, m2, m3, 2) -> lane-fused (2*Ci*Co, L).

    Rows = [real(i,o)..., imag(i,o)...]; lanes = the 4 corners' modes
    concatenated (corner-major, (m1,m2,m3) row-major), zero-padded to L.
    Call OUTSIDE the jitted forward.  storage_dtype=jnp.bfloat16 halves weight
    HBM traffic on v5e/v6e/v7x (accumulation stays f32 in the kernel); default
    f32 keeps results within ~1e-5 of the complex64 reference.
    """
    m1, m2, m3 = modes
    M = m1 * m2 * m3
    M4 = 4 * M
    Ci, Co = int(weights[0].shape[0]), int(weights[0].shape[1])
    L = _padded_lanes(M4)

    parts = [jnp.asarray(w, jnp.float32).reshape(Ci, Co, M, 2) for w in weights]
    w_all = jnp.concatenate(parts, axis=2)                  # (Ci, Co, 4M, 2)
    w_p = jnp.moveaxis(w_all, -1, 0).reshape(2 * Ci * Co, M4)
    if L > M4:
        w_p = jnp.pad(w_p, ((0, 0), (0, L - M4)))
    return w_p.astype(storage_dtype)


@functools.partial(jax.jit, static_argnames=("dim1", "dim2", "dim3", "modes"))
def spectral_conv3d_uno(x, w_packed, dim1, dim2, dim3, modes):
    """Forward pass of SpectralConv3d_Uno.

    x        : (B, in_codim, D1, D2, D3) float32
    w_packed : (2*in_codim*out_codim, L) — from pack_weights()
    returns  : (B, out_codim, dim1, dim2, dim3) float32

    Like the PyTorch module, corners overlap if 2*m1 > dim1 (or 2*m2 > dim2);
    later assignments win, and the assignment order matches the reference.
    """
    m1, m2, m3 = modes
    B, Ci = x.shape[0], x.shape[1]
    L = w_packed.shape[-1]
    Co = w_packed.shape[0] // (2 * Ci)
    M = m1 * m2 * m3
    M4 = 4 * M

    # TODO(synk): rfftn / irfftn have no Pallas equivalent; they remain XLA ops.
    x_ft = jnp.fft.rfftn(x.astype(jnp.float32), axes=(-3, -2, -1), norm="forward")

    # Gather the 4 spectral corners, fuse them onto one lane-dense axis and put
    # real/imag on the (sublane) row axis -> ONE kernel input stream.
    corners = [
        x_ft[:, :, :m1, :m2, :m3],
        x_ft[:, :, -m1:, :m2, :m3],
        x_ft[:, :, :m1, -m2:, :m3],
        x_ft[:, :, -m1:, -m2:, :m3],
    ]
    xc = jnp.concatenate([c.reshape(B, Ci, M) for c in corners], axis=-1)  # (B,Ci,4M) c64
    x_p = jnp.concatenate([jnp.real(xc).reshape(B * Ci, M4),
                           jnp.imag(xc).reshape(B * Ci, M4)], axis=0)      # (2*B*Ci, 4M)
    if L > M4:
        x_p = jnp.pad(x_p, ((0, 0), (0, L - M4)))
    x_p = x_p.astype(w_packed.dtype)   # bf16 storage halves x HBM bytes if enabled

    out_p = _compl_mul_fused(x_p, w_packed, B, Ci, Co)        # (2*B*Co, L) f32

    out_ri = out_p[:, :M4].reshape(2, B, Co, 4, m1, m2, m3)
    out_c = jax.lax.complex(out_ri[0], out_ri[1])             # (B, Co, 4, m1, m2, m3)

    # Scatter the 4 corners back into the (zero) output spectrum.
    # TODO(synk): for large grids these 4 dynamic-update-slices could be done as
    # in-kernel DMAs (pl.ANY + make_async_copy) to save HBM passes.
    out_ft = jnp.zeros((B, Co, dim1, dim2, dim3 // 2 + 1), jnp.complex64)
    out_ft = out_ft.at[:, :, :m1, :m2, :m3].set(out_c[:, :, 0])
    out_ft = out_ft.at[:, :, -m1:, :m2, :m3].set(out_c[:, :, 1])
    out_ft = out_ft.at[:, :, :m1, -m2:, :m3].set(out_c[:, :, 2])
    out_ft = out_ft.at[:, :, -m1:, -m2:, :m3].set(out_c[:, :, 3])

    return jnp.fft.irfftn(out_ft, s=(dim1, dim2, dim3), axes=(-3, -2, -1),
                          norm="forward").astype(jnp.float32)


def _reference_forward(x, weights, dim1, dim2, dim3, modes):
    """Pure-JAX reference mirroring the PyTorch forward (for verification)."""
    m1, m2, m3 = modes
    B = x.shape[0]
    Co = weights[0].shape[1]
    x_ft = jnp.fft.rfftn(x, axes=(-3, -2, -1), norm="forward")

    def cmul(inp, w):
        wc = (w[..., 0] + 1j * w[..., 1]).astype(jnp.complex64)
        return jnp.einsum("bixyz,ioxyz->boxyz", inp, wc)

    out_ft = jnp.zeros((B, Co, dim1, dim2, dim3 // 2 + 1), jnp.complex64)
    out_ft = out_ft.at[:, :, :m1, :m2, :m3].set(cmul(x_ft[:, :, :m1, :m2, :m3], weights[0]))
    out_ft = out_ft.at[:, :, -m1:, :m2, :m3].set(cmul(x_ft[:, :, -m1:, :m2, :m3], weights[1]))
    out_ft = out_ft.at[:, :, :m1, -m2:, :m3].set(cmul(x_ft[:, :, :m1, -m2:, :m3], weights[2]))
    out_ft = out_ft.at[:, :, -m1:, -m2:, :m3].set(cmul(x_ft[:, :, -m1:, -m2:, :m3], weights[3]))
    return jnp.fft.irfftn(out_ft, s=(dim1, dim2, dim3), axes=(-3, -2, -1), norm="forward")


if __name__ == "__main__":
    # Small, deterministic configuration.
    B = 2
    in_codim, out_codim = 4, 4
    D1 = D2 = D3 = 16          # input grid
    dim1 = dim2 = dim3 = 16    # output grid
    modes = (4, 4, 4)          # modes1, modes2, modes3

    key = jax.random.PRNGKey(0)
    kx, k1, k2, k3, k4 = jax.random.split(key, 5)

    scale = (1.0 / (2.0 * in_codim)) ** 0.5
    wshape = (in_codim, out_codim, modes[0], modes[1], modes[2], 2)
    weights = tuple(
        scale * jax.random.normal(k, wshape, dtype=jnp.float32)
        for k in (k1, k2, k3, k4)
    )
    x = jax.random.normal(kx, (B, in_codim, D1, D2, D3), dtype=jnp.float32)

    # One-time weight packing (outside jit / outside the hot path).
    # Pass storage_dtype=jnp.bfloat16 on v6e/v7x for a bandwidth-bound speedup
    # (re-validate tolerance); default f32 to match the reference at 1e-5.
    w_packed = pack_weights(weights, modes)

    out = spectral_conv3d_uno(x, w_packed, dim1, dim2, dim3, modes)
    out = jax.block_until_ready(out)

    ref = jax.block_until_ready(
        _reference_forward(x, weights, dim1, dim2, dim3, modes))

    assert out.shape == (B, out_codim, dim1, dim2, dim3), out.shape
    assert jnp.allclose(out, ref, atol=1e-5, rtol=1e-5), float(
        jnp.max(jnp.abs(out - ref)))
    print("KERNEL_OK")
</pallas_src>

<mosaic_0001>
module attributes {stable_mosaic.version = 11 : i64} {
  func.func @kernel(%arg0: i32, %arg1: memref<16x128xf32, #tpu.memory_space<vmem>>, %arg2: memref<32x128xf32, #tpu.memory_space<vmem>>, %arg3: memref<16x128xf32, #tpu.memory_space<vmem>>) attributes {dimension_semantics = [#tpu.dimension_semantics<parallel>], iteration_bounds = array<i64: 2>, scalar_prefetch = 0 : i64, scratch_operands = 0 : i64, tpu.core_type = #tpu.core_type<tc>, window_params = [{transform_indices = @transform_0, window_bounds = array<i64: 16, 128>}, {transform_indices = @transform_1, window_bounds = array<i64: 32, 128>}, {transform_indices = @transform_2, window_bounds = array<i64: 16, 128>}]} {
    %cst = arith.constant 0.000000e+00 : f32
    %0 = vector.broadcast %cst : f32 to vector<4x128xf32>
    %cst_0 = arith.constant 0.000000e+00 : f32
    %1 = vector.broadcast %cst_0 : f32 to vector<4x128xf32>
    %c0 = arith.constant 0 : index
    %c0_1 = arith.constant 0 : index
    %2 = vector.load %arg1[%c0, %c0_1] : memref<16x128xf32, #tpu.memory_space<vmem>>, vector<1x128xf32>
    %c8 = arith.constant 8 : index
    %c0_2 = arith.constant 0 : index
    %3 = vector.load %arg1[%c8, %c0_2] : memref<16x128xf32, #tpu.memory_space<vmem>>, vector<1x128xf32>
    %c0_3 = arith.constant 0 : index
    %c0_4 = arith.constant 0 : index
    %4 = vector.load %arg2[%c0_3, %c0_4] : memref<32x128xf32, #tpu.memory_space<vmem>>, vector<4x128xf32>
    %c16 = arith.constant 16 : index
    %c0_5 = arith.constant 0 : index
    %5 = vector.load %arg2[%c16, %c0_5] : memref<32x128xf32, #tpu.memory_space<vmem>>, vector<4x128xf32>
    %6 = vector.broadcast %2 : vector<1x128xf32> to vector<4x128xf32>
    %7 = arith.mulf %6, %4 : vector<4x128xf32>
    %8 = arith.addf %0, %7 : vector<4x128xf32>
    %9 = vector.broadcast %3 : vector<1x128xf32> to vector<4x128xf32>
    %10 = arith.mulf %9, %5 : vector<4x128xf32>
    %11 = arith.subf %8, %10 : vector<4x128xf32>
    %12 = vector.broadcast %2 : vector<1x128xf32> to vector<4x128xf32>
    %13 = arith.mulf %12, %5 : vector<4x128xf32>
    %14 = arith.addf %1, %13 : vector<4x128xf32>
    %15 = vector.broadcast %3 : vector<1x128xf32> to vector<4x128xf32>
    %16 = arith.mulf %15, %4 : vector<4x128xf32>
    %17 = arith.addf %14, %16 : vector<4x128xf32>
    %c1 = arith.constant 1 : index
    %c0_6 = arith.constant 0 : index
    %18 = vector.load %arg1[%c1, %c0_6] : memref<16x128xf32, #tpu.memory_space<vmem>>, vector<1x128xf32>
    %c9 = arith.constant 9 : index
    %c0_7 = arith.constant 0 : index
    %19 = vector.load %arg1[%c9, %c0_7] : memref<16x128xf32, #tpu.memory_space<vmem>>, vector<1x128xf32>
    %c4 = arith.constant 4 : index
    %c0_8 = arith.constant 0 : index
    %20 = vector.load %arg2[%c4, %c0_8] : memref<32x128xf32, #tpu.memory_space<vmem>>, vector<4x128xf32>
    %c20 = arith.constant 20 : index
    %c0_9 = arith.constant 0 : index
    %21 = vector.load %arg2[%c20, %c0_9] : memref<32x128xf32, #tpu.memory_space<vmem>>, vector<4x128xf32>
    %22 = vector.broadcast %18 : vector<1x128xf32> to vector<4x128xf32>
    %23 = arith.mulf %22, %20 : vector<4x128xf32>
    %24 = arith.addf %11, %23 : vector<4x128xf32>
    %25 = vector.broadcast %19 : vector<1x128xf32> to vector<4x128xf32>
    %26 = arith.mulf %25, %21 : vector<4x128xf32>
    %27 = arith.subf %24, %26 : vector<4x128xf32>
    %28 = vector.broadcast %18 : vector<1x128xf32> to vector<4x128xf32>
    %29 = arith.mulf %28, %21 : vector<4x128xf32>
    %30 = arith.addf %17, %29 : vector<4x128xf32>
    %31 = vector.broadcast %19 : vector<1x128xf32> to vector<4x128xf32>
    %32 = arith.mulf %31, %20 : vector<4x128xf32>
    %33 = arith.addf %30, %32 : vector<4x128xf32>
    %c2 = arith.constant 2 : index
    %c0_10 = arith.constant 0 : index
    %34 = vector.load %arg1[%c2, %c0_10] : memref<16x128xf32, #tpu.memory_space<vmem>>, vector<1x128xf32>
    %c10 = arith.constant 10 : index
    %c0_11 = arith.constant 0 : index
    %35 = vector.load %arg1[%c10, %c0_11] : memref<16x128xf32, #tpu.memory_space<vmem>>, vector<1x128xf32>
    %c8_12 = arith.constant 8 : index
    %c0_13 = arith.constant 0 : index
    %36 = vector.load %arg2[%c8_12, %c0_13] : memref<32x128xf32, #tpu.memory_space<vmem>>, vector<4x128xf32>
    %c24 = arith.constant 24 : index
    %c0_14 = arith.constant 0 : index
    %37 = vector.load %arg2[%c24, %c0_14] : memref<32x128xf32, #tpu.memory_space<vmem>>, vector<4x128xf32>
    %38 = vector.broadcast %34 : vector<1x128xf32> to vector<4x128xf32>
    %39 = arith.mulf %38, %36 : vector<4x128xf32>
    %40 = arith.addf %27, %39 : vector<4x128xf32>
    %41 = vector.broadcast %35 : vector<1x128xf32> to vector<4x128xf32>
    %42 = arith.mulf %41, %37 : vector<4x128xf32>
    %43 = arith.subf %40, %42 : vector<4x128xf32>
    %44 = vector.broadcast %34 : vector<1x128xf32> to vector<4x128xf32>
    %45 = arith.mulf %44, %37 : vector<4x128xf32>
    %46 = arith.addf %33, %45 : vector<4x128xf32>
    %47 = vector.broadcast %35 : vector<1x128xf32> to vector<4x128xf32>
    %48 = arith.mulf %47, %36 : vector<4x128xf32>
    %49 = arith.addf %46, %48 : vector<4x128xf32>
    %c3 = arith.constant 3 : index
    %c0_15 = arith.constant 0 : index
    %50 = vector.load %arg1[%c3, %c0_15] : memref<16x128xf32, #tpu.memory_space<vmem>>, vector<1x128xf32>
    %c11 = arith.constant 11 : index
    %c0_16 = arith.constant 0 : index
    %51 = vector.load %arg1[%c11, %c0_16] : memref<16x128xf32, #tpu.memory_space<vmem>>, vector<1x128xf32>
    %c12 = arith.constant 12 : index
    %c0_17 = arith.constant 0 : index
    %52 = vector.load %arg2[%c12, %c0_17] : memref<32x128xf32, #tpu.memory_space<vmem>>, vector<4x128xf32>
    %c28 = arith.constant 28 : index
    %c0_18 = arith.constant 0 : index
    %53 = vector.load %arg2[%c28, %c0_18] : memref<32x128xf32, #tpu.memory_space<vmem>>, vector<4x128xf32>
    %54 = vector.broadcast %50 : vector<1x128xf32> to vector<4x128xf32>
    %55 = arith.mulf %54, %52 : vector<4x128xf32>
    %56 = arith.addf %43, %55 : vector<4x128xf32>
    %57 = vector.broadcast %51 : vector<1x128xf32> to vector<4x128xf32>
    %58 = arith.mulf %57, %53 : vector<4x128xf32>
    %59 = arith.subf %56, %58 : vector<4x128xf32>
    %60 = vector.broadcast %50 : vector<1x128xf32> to vector<4x128xf32>
    %61 = arith.mulf %60, %53 : vector<4x128xf32>
    %62 = arith.addf %49, %61 : vector<4x128xf32>
    %63 = vector.broadcast %51 : vector<1x128xf32> to vector<4x128xf32>
    %64 = arith.mulf %63, %52 : vector<4x128xf32>
    %65 = arith.addf %62, %64 : vector<4x128xf32>
    %c0_19 = arith.constant 0 : index
    %c0_20 = arith.constant 0 : index
    %66 = vector.load %arg3[%c0_19, %c0_20] : memref<16x128xf32, #tpu.memory_space<vmem>>, vector<4x128xf32>
    tpu.vector_store %arg3[%c0_19, %c0_20], %59 {strides = array<i32>} : memref<16x128xf32, #tpu.memory_space<vmem>>, vector<4x128xf32>,
    %c8_21 = arith.constant 8 : index
    %c0_22 = arith.constant 0 : index
    %67 = vector.load %arg3[%c8_21, %c0_22] : memref<16x128xf32, #tpu.memory_space<vmem>>, vector<4x128xf32>
    tpu.vector_store %arg3[%c8_21, %c0_22], %65 {strides = array<i32>} : memref<16x128xf32, #tpu.memory_space<vmem>>, vector<4x128xf32>,
    %cst_23 = arith.constant 0.000000e+00 : f32
    %68 = vector.broadcast %cst_23 : f32 to vector<4x128xf32>
    %cst_24 = arith.constant 0.000000e+00 : f32
    %69 = vector.broadcast %cst_24 : f32 to vector<4x128xf32>
    %c4_25 = arith.constant 4 : index
    %c0_26 = arith.constant 0 : index
    %70 = vector.load %arg1[%c4_25, %c0_26] : memref<16x128xf32, #tpu.memory_space<vmem>>, vector<1x128xf32>
    %c12_27 = arith.constant 12 : index
    %c0_28 = arith.constant 0 : index
    %71 = vector.load %arg1[%c12_27, %c0_28] : memref<16x128xf32, #tpu.memory_space<vmem>>, vector<1x128xf32>
    %c0_29 = arith.constant 0 : index
    %c0_30 = arith.constant 0 : index
    %72 = vector.load %arg2[%c0_29, %c0_30] : memref<32x128xf32, #tpu.memory_space<vmem>>, vector<4x128xf32>
    %c16_31 = arith.constant 16 : index
    %c0_32 = arith.constant 0 : index
    %73 = vector.load %arg2[%c16_31, %c0_32] : memref<32x128xf32, #tpu.memory_space<vmem>>, vector<4x128xf32>
    %74 = vector.broadcast %70 : vector<1x128xf32> to vector<4x128xf32>
    %75 = arith.mulf %74, %72 : vector<4x128xf32>
    %76 = arith.addf %68, %75 : vector<4x128xf32>
    %77 = vector.broadcast %71 : vector<1x128xf32> to vector<4x128xf32>
    %78 = arith.mulf %77, %73 : vector<4x128xf32>
    %79 = arith.subf %76, %78 : vector<4x128xf32>
    %80 = vector.broadcast %70 : vector<1x128xf32> to vector<4x128xf32>
    %81 = arith.mulf %80, %73 : vector<4x128xf32>
    %82 = arith.addf %69, %81 : vector<4x128xf32>
    %83 = vector.broadcast %71 : vector<1x128xf32> to vector<4x128xf32>
    %84 = arith.mulf %83, %72 : vector<4x128xf32>
    %85 = arith.addf %82, %84 : vector<4x128xf32>
    %c5 = arith.constant 5 : index
    %c0_33 = arith.constant 0 : index
    %86 = vector.load %arg1[%c5, %c0_33] : memref<16x128xf32, #tpu.memory_space<vmem>>, vector<1x128xf32>
    %c13 = arith.constant 13 : index
    %c0_34 = arith.constant 0 : index
    %87 = vector.load %arg1[%c13, %c0_34] : memref<16x128xf32, #tpu.memory_space<vmem>>, vector<1x128xf32>
    %c4_35 = arith.constant 4 : index
    %c0_36 = arith.constant 0 : index
    %88 = vector.load %arg2[%c4_35, %c0_36] : memref<32x128xf32, #tpu.memory_space<vmem>>, vector<4x128xf32>
    %c20_37 = arith.constant 20 : index
    %c0_38 = arith.constant 0 : index
    %89 = vector.load %arg2[%c20_37, %c0_38] : memref<32x128xf32, #tpu.memory_space<vmem>>, vector<4x128xf32>
    %90 = vector.broadcast %86 : vector<1x128xf32> to vector<4x128xf32>
    %91 = arith.mulf %90, %88 : vector<4x128xf32>
    %92 = arith.addf %79, %91 : vector<4x128xf32>
    %93 = vector.broadcast %87 : vector<1x128xf32> to vector<4x128xf32>
    %94 = arith.mulf %93, %89 : vector<4x128xf32>
    %95 = arith.subf %92, %94 : vector<4x128xf32>
    %96 = vector.broadcast %86 : vector<1x128xf32> to vector<4x128xf32>
    %97 = arith.mulf %96, %89 : vector<4x128xf32>
    %98 = arith.addf %85, %97 : vector<4x128xf32>
    %99 = vector.broadcast %87 : vector<1x128xf32> to vector<4x128xf32>
    %100 = arith.mulf %99, %88 : vector<4x128xf32>
    %101 = arith.addf %98, %100 : vector<4x128xf32>
    %c6 = arith.constant 6 : index
    %c0_39 = arith.constant 0 : index
    %102 = vector.load %arg1[%c6, %c0_39] : memref<16x128xf32, #tpu.memory_space<vmem>>, vector<1x128xf32>
    %c14 = arith.constant 14 : index
    %c0_40 = arith.constant 0 : index
    %103 = vector.load %arg1[%c14, %c0_40] : memref<16x128xf32, #tpu.memory_space<vmem>>, vector<1x128xf32>
    %c8_41 = arith.constant 8 : index
    %c0_42 = arith.constant 0 : index
    %104 = vector.load %arg2[%c8_41, %c0_42] : memref<32x128xf32, #tpu.memory_space<vmem>>, vector<4x128xf32>
    %c24_43 = arith.constant 24 : index
    %c0_44 = arith.constant 0 : index
    %105 = vector.load %arg2[%c24_43, %c0_44] : memref<32x128xf32, #tpu.memory_space<vmem>>, vector<4x128xf32>
    %106 = vector.broadcast %102 : vector<1x128xf32> to vector<4x128xf32>
    %107 = arith.mulf %106, %104 : vector<4x128xf32>
    %108 = arith.addf %95, %107 : vector<4x128xf32>
    %109 = vector.broadcast %103 : vector<1x128xf32> to vector<4x128xf32>
    %110 = arith.mulf %109, %105 : vector<4x128xf32>
    %111 = arith.subf %108, %110 : vector<4x128xf32>
    %112 = vector.broadcast %102 : vector<1x128xf32> to vector<4x128xf32>
    %113 = arith.mulf %112, %105 : vector<4x128xf32>
    %114 = arith.addf %101, %113 : vector<4x128xf32>
    %115 = vector.broadcast %103 : vector<1x128xf32> to vector<4x128xf32>
    %116 = arith.mulf %115, %104 : vector<4x128xf32>
    %117 = arith.addf %114, %116 : vector<4x128xf32>
    %c7 = arith.constant 7 : index
    %c0_45 = arith.constant 0 : index
    %118 = vector.load %arg1[%c7, %c0_45] : memref<16x128xf32, #tpu.memory_space<vmem>>, vector<1x128xf32>
    %c15 = arith.constant 15 : index
    %c0_46 = arith.constant 0 : index
    %119 = vector.load %arg1[%c15, %c0_46] : memref<16x128xf32, #tpu.memory_space<vmem>>, vector<1x128xf32>
    %c12_47 = arith.constant 12 : index
    %c0_48 = arith.constant 0 : index
    %120 = vector.load %arg2[%c12_47, %c0_48] : memref<32x128xf32, #tpu.memory_space<vmem>>, vector<4x128xf32>
    %c28_49 = arith.constant 28 : index
    %c0_50 = arith.constant 0 : index
    %121 = vector.load %arg2[%c28_49, %c0_50] : memref<32x128xf32, #tpu.memory_space<vmem>>, vector<4x128xf32>
    %122 = vector.broadcast %118 : vector<1x128xf32> to vector<4x128xf32>
    %123 = arith.mulf %122, %120 : vector<4x128xf32>
    %124 = arith.addf %111, %123 : vector<4x128xf32>
    %125 = vector.broadcast %119 : vector<1x128xf32> to vector<4x128xf32>
    %126 = arith.mulf %125, %121 : vector<4x128xf32>
    %127 = arith.subf %124, %126 : vector<4x128xf32>
    %128 = vector.broadcast %118 : vector<1x128xf32> to vector<4x128xf32>
    %129 = arith.mulf %128, %121 : vector<4x128xf32>
    %130 = arith.addf %117, %129 : vector<4x128xf32>
    %131 = vector.broadcast %119 : vector<1x128xf32> to vector<4x128xf32>
    %132 = arith.mulf %131, %120 : vector<4x128xf32>
    %133 = arith.addf %130, %132 : vector<4x128xf32>
    %c4_51 = arith.constant 4 : index
    %c0_52 = arith.constant 0 : index
    %134 = vector.load %arg3[%c4_51, %c0_52] : memref<16x128xf32, #tpu.memory_space<vmem>>, vector<4x128xf32>
    tpu.vector_store %arg3[%c4_51, %c0_52], %127 {strides = array<i32>} : memref<16x128xf32, #tpu.memory_space<vmem>>, vector<4x128xf32>,
    %c12_53 = arith.constant 12 : index
    %c0_54 = arith.constant 0 : index
    %135 = vector.load %arg3[%c12_53, %c0_54] : memref<16x128xf32, #tpu.memory_space<vmem>>, vector<4x128xf32>
    tpu.vector_store %arg3[%c12_53, %c0_54], %133 {strides = array<i32>} : memref<16x128xf32, #tpu.memory_space<vmem>>, vector<4x128xf32>,
    return
  }
  func.func @transform_0(%arg0: i32) -> (i32, i32) {
    %c0_i32 = arith.constant 0 : i32
    %c0_i32_0 = arith.constant 0 : i32
    return %c0_i32, %arg0 : i32, i32
  }
  func.func @transform_1(%arg0: i32) -> (i32, i32) {
    %c0_i32 = arith.constant 0 : i32
    %c0_i32_0 = arith.constant 0 : i32
    return %c0_i32, %arg0 : i32, i32
  }
  func.func @transform_2(%arg0: i32) -> (i32, i32) {
    %c0_i32 = arith.constant 0 : i32
    %c0_i32_0 = arith.constant 0 : i32
    return %c0_i32, %arg0 : i32, i32
  }
}

</mosaic_0001>

<llo_original>
// kernel: spectral_conv3d_uno.1
$region0: #{spectral_conv3d_uno.1}
  #allocation0 [shape = 'u32[]', space=smem, size = 0x4, offset = 0x4, fixed_abs, tag = 'smem constant byte address 0x4 - core index']
  #allocation1 [shape = 'u32[72,128]{1,0:T(1,128)}', space=vmem, size = 0x9000, scoped, tag = 'internal scratch']
  %s0 = inlined_call_operand.vmem [shape: f32[16,256], index: 0, kind: input, shape index: {}]
  %s1 = inlined_call_operand.vmem [shape: f32[32,256], index: 1, kind: input, shape index: {}]
  %s2 = inlined_call_operand.vmem [shape: f32[16,256], index: 2, kind: output, shape index: {}]
  %s3 = sld [smem:[#allocation0]]
  $region151: #{spectral_conv3d_uno.1} parent=0
    _
  %s5 = ssub.s32 1, %s3
  %s6 = scalar_select 0, %s5, %s3
  $region1: #{spectral_conv3d_uno.1} parent=0
    #allocation2 [shape = 'u8[16384]{0}', space=vmem, size = 0x4000, scoped, tag = 'input window, operand 0']
    #allocation3 [shape = 'u8[32768]{0}', space=vmem, size = 0x8000, scoped, tag = 'input window, operand 1']
    #allocation4 [shape = 'u8[16384]{0}', space=vmem, size = 0x4000, scoped, tag = 'output window, operand 0']
    loop: start=0, step=1, limit=4
    $region2: #{spectral_conv3d_uno.1} parent=1 // loop_pre_header
      _
    $region3: #{spectral_conv3d_uno.1} parent=1 // loop_header
      %s8 = sphi 0, %s12
      %p9 = scmp.ge.s32.totalorder %s8, 4
      %s18 = sphi 0, %s20
      %s21 = sphi 0, %s18
      %s22 = sphi 0, %s21
      %s38 = sphi 0, %s22
      %s44 = sphi 0, %s46
      %s47 = sphi 0, %s44
      %s48 = sphi 0, %s47
      %s64 = sphi 0, %s48
      %s70 = sphi 0, %s72
      %s73 = sphi 0, %s70
      %s74 = sphi 0, %s73
      %s90 = sphi 0, %s74
    $region4: #{spectral_conv3d_uno.1} parent=1 // loop_header_branch
      %11 = sbr.rel (%p9) target = $region8
    $region5: #{spectral_conv3d_uno.1} parent=1 // loop_body
      %s13 = ssub.s32 %s8, 1
      %s14 = ssub.s32 %s8, 2
      %s15 = sadd.s32 %s8, 1
      %s16 = ssub.s32 %s8, %s15
      %p17 = scmp.eq.s32.totalorder %s16, 0
      %s19 = sadd.s32 %s18, 1
      %s20 = scalar_select %p17, %s18, %s19
      %p23 = pneg %p17
      %p24 = scmp.eq.s32.totalorder %s8, 1
      %p25 = por %p23, %p24
      %p26 = scmp.ne.s32.totalorder %s18, %s21
      %p27 = scmp.eq.s32.totalorder %s8, 0
      %p28 = por %p26, %p27
      %p29 = scmp.ne.s32.totalorder %s18, %s21
      %p30 = scmp.eq.s32.totalorder %s13, 1
      %p31 = por %p29, %p30
      %p32 = scmp.ne.s32.totalorder %s21, %s22
      %p33 = scmp.eq.s32.totalorder %s13, 0
      %p34 = por %p32, %p33
      %p35 = scmp.ne.s32.totalorder %s21, %s22
      %p36 = scmp.eq.s32.totalorder %s14, 1
      %p37 = por %p35, %p36
      %p39 = scmp.ne.s32.totalorder %s22, %s38
      %p40 = scmp.eq.s32.totalorder %s14, 0
      %p41 = por %p39, %p40
      %s42 = ssub.s32 %s8, %s15
      %p43 = scmp.eq.s32.totalorder %s42, 0
      %s45 = sadd.s32 %s44, 1
      %s46 = scalar_select %p43, %s44, %s45
      %p49 = pneg %p43
      %p50 = scmp.eq.s32.totalorder %s8, 1
      %p51 = por %p49, %p50
      %p52 = scmp.ne.s32.totalorder %s44, %s47
      %p53 = scmp.eq.s32.totalorder %s8, 0
      %p54 = por %p52, %p53
      %p55 = scmp.ne.s32.totalorder %s44, %s47
      %p56 = scmp.eq.s32.totalorder %s13, 1
      %p57 = por %p55, %p56
      %p58 = scmp.ne.s32.totalorder %s47, %s48
      %p59 = scmp.eq.s32.totalorder %s13, 0
      %p60 = por %p58, %p59
      %p61 = scmp.ne.s32.totalorder %s47, %s48
      %p62 = scmp.eq.s32.totalorder %s14, 1
      %p63 = por %p61, %p62
      %p65 = scmp.ne.s32.totalorder %s48, %s64
      %p66 = scmp.eq.s32.totalorder %s14, 0
      %p67 = por %p65, %p66
      %s68 = ssub.s32 %s8, %s15
      %p69 = scmp.eq.s32.totalorder %s68, 0
      %s71 = sadd.s32 %s70, 1
      %s72 = scalar_select %p69, %s70, %s71
      %p75 = pneg %p69
      %p76 = scmp.eq.s32.totalorder %s8, 1
      %p77 = por %p75, %p76
      %p78 = scmp.ne.s32.totalorder %s70, %s73
      %p79 = scmp.eq.s32.totalorder %s8, 0
      %p80 = por %p78, %p79
      %p81 = scmp.ne.s32.totalorder %s70, %s73
      %p82 = scmp.eq.s32.totalorder %s13, 1
      %p83 = por %p81, %p82
      %p84 = scmp.ne.s32.totalorder %s73, %s74
      %p85 = scmp.eq.s32.totalorder %s13, 0
      %p86 = por %p84, %p85
      %p87 = scmp.ne.s32.totalorder %s73, %s74
      %p88 = scmp.eq.s32.totalorder %s14, 1
      %p89 = por %p87, %p88
      %p91 = scmp.ne.s32.totalorder %s74, %s90
      %p92 = scmp.eq.s32.totalorder %s14, 0
      %p93 = por %p91, %p92
      %p94 = scmp.le.s32.totalorder 1, %s8
      %p95 = scmp.lt.s32.totalorder %s8, 3
      %p96 = pnand %p94, %p95
      %p97 = pneg %p96
      // Predicated region
      $region9: #{spectral_conv3d_uno.1} parent=5 // pred_check
        _
      $region10: #{spectral_conv3d_uno.1} parent=5 // pred_check_branch
        %99 = sbr.rel (%p96) target = $region12
      $region11: #{spectral_conv3d_uno.1} parent=5 // pred_region
        %s100 = ssub.s32 %s8, 1
      $region12: #{spectral_conv3d_uno.1} parent=5 // pred_fallthru
        _
      %p101 = scmp.lt.s32.totalorder %s8, 2
      // Predicated region
      $region13: #{spectral_conv3d_uno.1} parent=5 // pred_check
        %p102 = pneg %p101
      $region14: #{spectral_conv3d_uno.1} parent=5 // pred_check_branch
        %104 = sbr.rel (%p102) target = $region16
      $region15: #{spectral_conv3d_uno.1} parent=5 // pred_region
        // Predicated region
        $region17: #{spectral_conv3d_uno.1} parent=15 // pred_check
          %p105 = pneg %p28
        $region18: #{spectral_conv3d_uno.1} parent=15 // pred_check_branch
          %107 = sbr.rel (%p105) target = $region20
        $region19: #{spectral_conv3d_uno.1} parent=15 // pred_region
          %s108 = sand.u32 %s18, 1
          %s109 = sand.u32 %s18, 1
          %s110 = smul.addr %s109, 16
          %s111 = scalar_lea.vmem [#allocation2], %s110
          %s112 = smul.addr %s8, 8
          %s113 = scalar_lea.vmem %s0, %s112
          // Predicated region
          $region21: #{spectral_conv3d_uno.1} parent=19 // pred_check
            _
          $region22: #{spectral_conv3d_uno.1} parent=19 // pred_check_branch
            %115 = sbr.rel (0) target = $region24
          $region23: #{spectral_conv3d_uno.1} parent=19 // pred_region
            // Predicated region
            $region25: #{spectral_conv3d_uno.1} parent=23 // pred_check
              _
            $region26: #{spectral_conv3d_uno.1} parent=23 // pred_check_branch
              %117 = sbr.rel (0) target = $region28
            $region27: #{spectral_conv3d_uno.1} parent=23 // pred_region
              // Predicated region
              $region40: #{spectral_conv3d_uno.1} parent=27 // pred_check
                _
              $region41: #{spectral_conv3d_uno.1} parent=27 // pred_check_branch
                %135 = sbr.rel (0) target = $region43
              $region42: #{spectral_conv3d_uno.1} parent=27 // pred_region
                loop: start=0, step=1, limit=1
                $region44: #{spectral_conv3d_uno.1} parent=42 // loop_pre_header
                  _
                $region45: #{spectral_conv3d_uno.1} parent=42 // loop_header
                  %s137 = sphi 0, %s141
                  %p138 = scmp.ge.s32.totalorder %s137, 1
                  %s142 = sphi %s113, %s113
                  %s143 = sphi %s111, %s111
                $region46: #{spectral_conv3d_uno.1} parent=42 // loop_header_branch
                  %140 = sbr.rel (%p138) target = $region50
                $region47: #{spectral_conv3d_uno.1} parent=42 // loop_body
                  %v144 = vld [vmem:[%s142] sm:$0xff]
                  %145 = vst [vmem:[%s143] sm:$0xff] %v144
                  %v146 = vld [vmem:[%s142 + $0x10] sm:$0xff]
                  %147 = vst [vmem:[%s143 + $0x8] sm:$0xff] %v146
                $region48: #{spectral_conv3d_uno.1} parent=42 // loop_footer
                  %s141 = sadd.s32 1, %s137
                $region49: #{spectral_conv3d_uno.1} parent=42 // loop_footer_branch
                  %136 = sbr.rel target = $region45
                $region50: #{spectral_conv3d_uno.1} parent=42 // loop_exit
                  _
              $region43: #{spectral_conv3d_uno.1} parent=27 // pred_fallthru
                _
              // Predicated region
              $region51: #{spectral_conv3d_uno.1} parent=27 // pred_check
                _
              $region52: #{spectral_conv3d_uno.1} parent=27 // pred_check_branch
                %149 = sbr.rel target = $region54
              $region53: #{spectral_conv3d_uno.1} parent=27 // pred_region
                _
              $region54: #{spectral_conv3d_uno.1} parent=27 // pred_fallthru
                _
            $region28: #{spectral_conv3d_uno.1} parent=23 // pred_fallthru
              _
            // Predicated region
            $region29: #{spectral_conv3d_uno.1} parent=23 // pred_check
              _
            $region30: #{spectral_conv3d_uno.1} parent=23 // pred_check_branch
              %119 = sbr.rel target = $region32
            $region31: #{spectral_conv3d_uno.1} parent=23 // pred_region
              %s121 = ssub.s32 256, 1
              loop: start=0, step=1, limit=1
              $region33: #{spectral_conv3d_uno.1} parent=31 // loop_pre_header
                _
              $region34: #{spectral_conv3d_uno.1} parent=31 // loop_header
                %s123 = sphi 0, %s127
                %p124 = scmp.ge.s32.totalorder %s123, 1
                %s128 = sphi %s113, %s113
                %s129 = sphi %s111, %s111
              $region35: #{spectral_conv3d_uno.1} parent=31 // loop_header_branch
                %126 = sbr.rel (%p124) target = $region39
              $region36: #{spectral_conv3d_uno.1} parent=31 // loop_body
                %v130 = vld [vmem:[%s128] sm:%s121]
                %131 = vst [vmem:[%s129] sm:%s121] %v130
                %v132 = vld [vmem:[%s128 + $0x10] sm:%s121]
                %133 = vst [vmem:[%s129 + $0x8] sm:%s121] %v132
              $region37: #{spectral_conv3d_uno.1} parent=31 // loop_footer
                %s127 = sadd.s32 1, %s123
              $region38: #{spectral_conv3d_uno.1} parent=31 // loop_footer_branch
                %122 = sbr.rel target = $region34
              $region39: #{spectral_conv3d_uno.1} parent=31 // loop_exit
                _
            $region32: #{spectral_conv3d_uno.1} parent=23 // pred_fallthru
              _
          $region24: #{spectral_conv3d_uno.1} parent=19 // pred_fallthru
            _
          %150 = vnop
        $region20: #{spectral_conv3d_uno.1} parent=15 // pred_fallthru
          _
        // Predicated region
        $region55: #{spectral_conv3d_uno.1} parent=15 // pred_check
          %p151 = pneg %p54
        $region56: #{spectral_conv3d_uno.1} parent=15 // pred_check_branch
          %153 = sbr.rel (%p151) target = $region58
        $region57: #{spectral_conv3d_uno.1} parent=15 // pred_region
          %s154 = sand.u32 %s44, 1
          %s155 = sand.u32 %s44, 1
          %s156 = smul.addr %s155, 32
          %s157 = scalar_lea.vmem [#allocation3], %s156
          %s158 = smul.addr %s8, 8
          %s159 = scalar_lea.vmem %s1, %s158
          // Predicated region
          $region59: #{spectral_conv3d_uno.1} parent=57 // pred_check
            _
          $region60: #{spectral_conv3d_uno.1} parent=57 // pred_check_branch
            %161 = sbr.rel (0) target = $region62
          $region61: #{spectral_conv3d_uno.1} parent=57 // pred_region
            // Predicated region
            $region63: #{spectral_conv3d_uno.1} parent=61 // pred_check
              _
            $region64: #{spectral_conv3d_uno.1} parent=61 // pred_check_branch
              %163 = sbr.rel (0) target = $region66
            $region65: #{spectral_conv3d_uno.1} parent=61 // pred_region
              // Predicated region
              $region78: #{spectral_conv3d_uno.1} parent=65 // pred_check
                _
              $region79: #{spectral_conv3d_uno.1} parent=65 // pred_check_branch
                %185 = sbr.rel (0) target = $region81
              $region80: #{spectral_conv3d_uno.1} parent=65 // pred_region
                loop: start=0, step=1, limit=1
                $region82: #{spectral_conv3d_uno.1} parent=80 // loop_pre_header
                  _
                $region83: #{spectral_conv3d_uno.1} parent=80 // loop_header
                  %s187 = sphi 0, %s191
                  %p188 = scmp.ge.s32.totalorder %s187, 1
                  %s192 = sphi %s159, %s159
                  %s193 = sphi %s157, %s157
                $region84: #{spectral_conv3d_uno.1} parent=80 // loop_header_branch
                  %190 = sbr.rel (%p188) target = $region88
                $region85: #{spectral_conv3d_uno.1} parent=80 // loop_body
                  %v194 = vld [vmem:[%s192] sm:$0xff]
                  %195 = vst [vmem:[%s193] sm:$0xff] %v194
                  %v196 = vld [vmem:[%s192 + $0x10] sm:$0xff]
                  %197 = vst [vmem:[%s193 + $0x8] sm:$0xff] %v196
                  %v198 = vld [vmem:[%s192 + $0x20] sm:$0xff]
                  %199 = vst [vmem:[%s193 + $0x10] sm:$0xff] %v198
                  %v200 = vld [vmem:[%s192 + $0x30] sm:$0xff]
                  %201 = vst [vmem:[%s193 + $0x18] sm:$0xff] %v200
                $region86: #{spectral_conv3d_uno.1} parent=80 // loop_footer
                  %s191 = sadd.s32 1, %s187
                $region87: #{spectral_conv3d_uno.1} parent=80 // loop_footer_branch
                  %186 = sbr.rel target = $region83
                $region88: #{spectral_conv3d_uno.1} parent=80 // loop_exit
                  _
              $region81: #{spectral_conv3d_uno.1} parent=65 // pred_fallthru
                _
              // Predicated region
              $region89: #{spectral_conv3d_uno.1} parent=65 // pred_check
                _
              $region90: #{spectral_conv3d_uno.1} parent=65 // pred_check_branch
                %203 = sbr.rel target = $region92
              $region91: #{spectral_conv3d_uno.1} parent=65 // pred_region
                _
              $region92: #{spectral_conv3d_uno.1} parent=65 // pred_fallthru
                _
            $region66: #{spectral_conv3d_uno.1} parent=61 // pred_fallthru
              _
            // Predicated region
            $region67: #{spectral_conv3d_uno.1} parent=61 // pred_check
              _
            $region68: #{spectral_conv3d_uno.1} parent=61 // pred_check_branch
              %165 = sbr.rel target = $region70
            $region69: #{spectral_conv3d_uno.1} parent=61 // pred_region
              %s167 = ssub.s32 256, 1
              loop: start=0, step=1, limit=1
              $region71: #{spectral_conv3d_uno.1} parent=69 // loop_pre_header
                _
              $region72: #{spectral_conv3d_uno.1} parent=69 // loop_header
                %s169 = sphi 0, %s173
                %p170 = scmp.ge.s32.totalorder %s169, 1
                %s174 = sphi %s159, %s159
                %s175 = sphi %s157, %s157
              $region73: #{spectral_conv3d_uno.1} parent=69 // loop_header_branch
                %172 = sbr.rel (%p170) target = $region77
              $region74: #{spectral_conv3d_uno.1} parent=69 // loop_body
                %v176 = vld [vmem:[%s174] sm:%s167]
                %177 = vst [vmem:[%s175] sm:%s167] %v176
                %v178 = vld [vmem:[%s174 + $0x10] sm:%s167]
                %179 = vst [vmem:[%s175 + $0x8] sm:%s167] %v178
                %v180 = vld [vmem:[%s174 + $0x20] sm:%s167]
                %181 = vst [vmem:[%s175 + $0x10] sm:%s167] %v180
                %v182 = vld [vmem:[%s174 + $0x30] sm:%s167]
                %183 = vst [vmem:[%s175 + $0x18] sm:%s167] %v182
              $region75: #{spectral_conv3d_uno.1} parent=69 // loop_footer
                %s173 = sadd.s32 1, %s169
              $region76: #{spectral_conv3d_uno.1} parent=69 // loop_footer_branch
                %168 = sbr.rel target = $region72
              $region77: #{spectral_conv3d_uno.1} parent=69 // loop_exit
                _
            $region70: #{spectral_conv3d_uno.1} parent=61 // pred_fallthru
              _
          $region62: #{spectral_conv3d_uno.1} parent=57 // pred_fallthru
            _
          %204 = vnop
        $region58: #{spectral_conv3d_uno.1} parent=15 // pred_fallthru
          _
      $region16: #{spectral_conv3d_uno.1} parent=5 // pred_fallthru
        _
      %p205 = scmp.le.s32.totalorder 1, %s8
      %p206 = scmp.lt.s32.totalorder %s8, 3
      %p207 = pnand %p205, %p206
      %p208 = pneg %p207
      // Predicated region
      $region93: #{spectral_conv3d_uno.1} parent=5 // pred_check
        _
      $region94: #{spectral_conv3d_uno.1} parent=5 // pred_check_branch
        %210 = sbr.rel (%p207) target = $region96
      $region95: #{spectral_conv3d_uno.1} parent=5 // pred_region
        %s211 = ssub.s32 %s8, 1
        %s212 = sand.u32 %s21, 1
        %s213 = sand.u32 %s21, 1
        %s214 = smul.addr %s213, 16
        %s215 = scalar_lea.vmem [#allocation2], %s214
        // Predicated region
        $region97: #{spectral_conv3d_uno.1} parent=95 // pred_check
          %p216 = pneg %p34
        $region98: #{spectral_conv3d_uno.1} parent=95 // pred_check_branch
          %218 = sbr.rel (%p216) target = $region100
        $region99: #{spectral_conv3d_uno.1} parent=95 // pred_region
          _
        $region100: #{spectral_conv3d_uno.1} parent=95 // pred_fallthru
          _
        %s219 = sand.u32 %s47, 1
        %s220 = sand.u32 %s47, 1
        %s221 = smul.addr %s220, 32
        %s222 = scalar_lea.vmem [#allocation3], %s221
        // Predicated region
        $region101: #{spectral_conv3d_uno.1} parent=95 // pred_check
          %p223 = pneg %p60
        $region102: #{spectral_conv3d_uno.1} parent=95 // pred_check_branch
          %225 = sbr.rel (%p223) target = $region104
        $region103: #{spectral_conv3d_uno.1} parent=95 // pred_region
          _
        $region104: #{spectral_conv3d_uno.1} parent=95 // pred_fallthru
          _
        %s226 = sand.u32 %s21, 1
        %s227 = sand.u32 %s21, 1
        %s228 = smul.addr %s227, 16
        %s229 = scalar_lea.vmem [#allocation2], %s228
        %p230 = pneg %p34
        %p231 = pneg %p31
        %s232 = sand.u32 %s47, 1
        %s233 = sand.u32 %s47, 1
        %s234 = smul.addr %s233, 32
        %s235 = scalar_lea.vmem [#allocation3], %s234
        %p236 = pneg %p60
        %p237 = pneg %p57
        %p238 = pneg %p86
        %p239 = pneg %p83
        %s240 = sand.u32 %s73, 1
        %s241 = sand.u32 %s73, 1
        %s242 = smul.addr %s241, 16
        %s243 = scalar_lea.vmem [#allocation4], %s242
        %v244 = vld [vmem:[%s215] sm:$0x1]
        %v245 = vld [vmem:[%s215 + $0x8] sm:$0x1]
        %v246 = vld [vmem:[%s222] sm:$0xf]
        %v247 = vld [vmem:[%s222 + $0x10] sm:$0xf]
        %v248 = vperm.slane %v244, 0
        %v249 = vmul.f32 %v248, %v246
        %v250 = vadd.f32 %v249, 0.0
        %v251 = vperm.slane %v245, 0
        %v252 = vmul.f32 %v251, %v247
        %v253 = vsub.f32 %v250, %v252
        %v254 = vmul.f32 %v248, %v247
        %v255 = vadd.f32 %v254, 0.0
        %v256 = vmul.f32 %v251, %v246
        %v257 = vadd.f32 %v255, %v256
        %v258 = vld [vmem:[%s215 + $0x1] sm:$0x1]
        %v259 = vld [vmem:[%s215 + $0x9] sm:$0x1]
        %v260 = vld [vmem:[%s222 + $0x4] sm:$0xf]
        %v261 = vld [vmem:[%s222 + $0x14] sm:$0xf]
        %v262 = vperm.slane %v258, 0
        %v263 = vmul.f32 %v262, %v260
        %v264 = vadd.f32 %v253, %v263
        %v265 = vperm.slane %v259, 0
        %v266 = vmul.f32 %v265, %v261
        %v267 = vsub.f32 %v264, %v266
        %v268 = vmul.f32 %v262, %v261
        %v269 = vadd.f32 %v257, %v268
        %v270 = vmul.f32 %v265, %v260
        %v271 = vadd.f32 %v269, %v270
        %v272 = vld [vmem:[%s215 + $0x2] sm:$0x1]
        %v273 = vld [vmem:[%s215 + $0xa] sm:$0x1]
        %v274 = vld [vmem:[%s222 + $0x8] sm:$0xf]
        %v275 = vld [vmem:[%s222 + $0x18] sm:$0xf]
        %v276 = vperm.slane %v272, 0
        %v277 = vmul.f32 %v276, %v274
        %v278 = vadd.f32 %v267, %v277
        %v279 = vperm.slane %v273, 0
        %v280 = vmul.f32 %v279, %v275
        %v281 = vsub.f32 %v278, %v280
        %v282 = vmul.f32 %v276, %v275
        %v283 = vadd.f32 %v271, %v282
        %v284 = vmul.f32 %v279, %v274
        %v285 = vadd.f32 %v283, %v284
        %v286 = vld [vmem:[%s215 + $0x3] sm:$0x1]
        %v287 = vld [vmem:[%s215 + $0xb] sm:$0x1]
        %v288 = vld [vmem:[%s222 + $0xc] sm:$0xf]
        %v289 = vld [vmem:[%s222 + $0x1c] sm:$0xf]
        %v290 = vperm.slane %v286, 0
        %v291 = vmul.f32 %v290, %v288
        %v292 = vadd.f32 %v281, %v291
        %v293 = vperm.slane %v287, 0
        %v294 = vmul.f32 %v293, %v289
        %v295 = vsub.f32 %v292, %v294
        %v296 = vmul.f32 %v290, %v289
        %v297 = vadd.f32 %v285, %v296
        %v298 = vmul.f32 %v293, %v288
        %v299 = vadd.f32 %v297, %v298
        %300 = vst [vmem:[%s243] sm:$0xf] %v295
        %301 = vst [vmem:[%s243 + $0x8] sm:$0xf] %v299
        %v302 = vld [vmem:[%s215 + $0x4] sm:$0x1]
        %v303 = vld [vmem:[%s215 + $0xc] sm:$0x1]
        %v304 = vld [vmem:[%s222] sm:$0xf]
        %v305 = vld [vmem:[%s222 + $0x10] sm:$0xf]
        %v306 = vperm.slane %v302, 0
        %v307 = vmul.f32 %v306, %v304
        %v308 = vadd.f32 %v307, 0.0
        %v309 = vperm.slane %v303, 0
        %v310 = vmul.f32 %v309, %v305
        %v311 = vsub.f32 %v308, %v310
        %v312 = vmul.f32 %v306, %v305
        %v313 = vadd.f32 %v312, 0.0
        %v314 = vmul.f32 %v309, %v304
        %v315 = vadd.f32 %v313, %v314
        %v316 = vld [vmem:[%s215 + $0x5] sm:$0x1]
        %v317 = vld [vmem:[%s215 + $0xd] sm:$0x1]
        %v318 = vld [vmem:[%s222 + $0x4] sm:$0xf]
        %v319 = vld [vmem:[%s222 + $0x14] sm:$0xf]
        %v320 = vperm.slane %v316, 0
        %v321 = vmul.f32 %v320, %v318
        %v322 = vadd.f32 %v311, %v321
        %v323 = vperm.slane %v317, 0
        %v324 = vmul.f32 %v323, %v319
        %v325 = vsub.f32 %v322, %v324
        %v326 = vmul.f32 %v320, %v319
        %v327 = vadd.f32 %v315, %v326
        %v328 = vmul.f32 %v323, %v318
        %v329 = vadd.f32 %v327, %v328
        %v330 = vld [vmem:[%s215 + $0x6] sm:$0x1]
        %v331 = vld [vmem:[%s215 + $0xe] sm:$0x1]
        %v332 = vld [vmem:[%s222 + $0x8] sm:$0xf]
        %v333 = vld [vmem:[%s222 + $0x18] sm:$0xf]
        %v334 = vperm.slane %v330, 0
        %v335 = vmul.f32 %v334, %v332
        %v336 = vadd.f32 %v325, %v335
        %v337 = vperm.slane %v331, 0
        %v338 = vmul.f32 %v337, %v333
        %v339 = vsub.f32 %v336, %v338
        %v340 = vmul.f32 %v334, %v333
        %v341 = vadd.f32 %v329, %v340
        %v342 = vmul.f32 %v337, %v332
        %v343 = vadd.f32 %v341, %v342
        %v344 = vld [vmem:[%s215 + $0x7] sm:$0x1]
        %v345 = vld [vmem:[%s215 + $0xf] sm:$0x1]
        %v346 = vld [vmem:[%s222 + $0xc] sm:$0xf]
        %v347 = vld [vmem:[%s222 + $0x1c] sm:$0xf]
        %v348 = vperm.slane %v344, 0
        %v349 = vmul.f32 %v348, %v346
        %v350 = vadd.f32 %v339, %v349
        %v351 = vperm.slane %v345, 0
        %v352 = vmul.f32 %v351, %v347
        %v353 = vsub.f32 %v350, %v352
        %v354 = vmul.f32 %v348, %v347
        %v355 = vadd.f32 %v343, %v354
        %v356 = vmul.f32 %v351, %v346
        %v357 = vadd.f32 %v355, %v356
        %358 = vst [vmem:[%s243 + $0x4] sm:$0xf] %v353
        %359 = vst [vmem:[%s243 + $0xc] sm:$0xf] %v357
        %s360 = sand.u32 %s73, 1
        %s361 = sand.u32 %s73, 1
        %s362 = smul.addr %s361, 16
        %s363 = scalar_lea.vmem [#allocation4], %s362
        // Predicated region
        $region105: #{spectral_conv3d_uno.1} parent=95 // pred_check
          %p364 = pneg %p83
        $region106: #{spectral_conv3d_uno.1} parent=95 // pred_check_branch
          %366 = sbr.rel (%p364) target = $region108
        $region107: #{spectral_conv3d_uno.1} parent=95 // pred_region
          %s367 = smul.addr %s13, 8
          %s368 = scalar_lea.vmem %s2, %s367
          // Predicated region
          $region109: #{spectral_conv3d_uno.1} parent=107 // pred_check
            _
          $region110: #{spectral_conv3d_uno.1} parent=107 // pred_check_branch
            %370 = sbr.rel (0) target = $region112
          $region111: #{spectral_conv3d_uno.1} parent=107 // pred_region
            // Predicated region
            $region113: #{spectral_conv3d_uno.1} parent=111 // pred_check
              _
            $region114: #{spectral_conv3d_uno.1} parent=111 // pred_check_branch
              %372 = sbr.rel (0) target = $region116
            $region115: #{spectral_conv3d_uno.1} parent=111 // pred_region
              // Predicated region
              $region128: #{spectral_conv3d_uno.1} parent=115 // pred_check
                _
              $region129: #{spectral_conv3d_uno.1} parent=115 // pred_check_branch
                %390 = sbr.rel (0) target = $region131
              $region130: #{spectral_conv3d_uno.1} parent=115 // pred_region
                loop: start=0, step=1, limit=1
                $region132: #{spectral_conv3d_uno.1} parent=130 // loop_pre_header
                  _
                $region133: #{spectral_conv3d_uno.1} parent=130 // loop_header
                  %s392 = sphi 0, %s396
                  %p393 = scmp.ge.s32.totalorder %s392, 1
                  %s397 = sphi %s363, %s363
                  %s398 = sphi %s368, %s368
                $region134: #{spectral_conv3d_uno.1} parent=130 // loop_header_branch
                  %395 = sbr.rel (%p393) target = $region138
                $region135: #{spectral_conv3d_uno.1} parent=130 // loop_body
                  %v399 = vld [vmem:[%s397] sm:$0xff]
                  %400 = vst [vmem:[%s398] sm:$0xff] %v399
                  %v401 = vld [vmem:[%s397 + $0x8] sm:$0xff]
                  %402 = vst [vmem:[%s398 + $0x10] sm:$0xff] %v401
                $region136: #{spectral_conv3d_uno.1} parent=130 // loop_footer
                  %s396 = sadd.s32 1, %s392
                $region137: #{spectral_conv3d_uno.1} parent=130 // loop_footer_branch
                  %391 = sbr.rel target = $region133
                $region138: #{spectral_conv3d_uno.1} parent=130 // loop_exit
                  _
              $region131: #{spectral_conv3d_uno.1} parent=115 // pred_fallthru
                _
              // Predicated region
              $region139: #{spectral_conv3d_uno.1} parent=115 // pred_check
                _
              $region140: #{spectral_conv3d_uno.1} parent=115 // pred_check_branch
                %404 = sbr.rel target = $region142
              $region141: #{spectral_conv3d_uno.1} parent=115 // pred_region
                _
              $region142: #{spectral_conv3d_uno.1} parent=115 // pred_fallthru
                _
            $region116: #{spectral_conv3d_uno.1} parent=111 // pred_fallthru
              _
            // Predicated region
            $region117: #{spectral_conv3d_uno.1} parent=111 // pred_check
              _
            $region118: #{spectral_conv3d_uno.1} parent=111 // pred_check_branch
              %374 = sbr.rel target = $region120
            $region119: #{spectral_conv3d_uno.1} parent=111 // pred_region
              %s376 = ssub.s32 256, 1
              loop: start=0, step=1, limit=1
              $region121: #{spectral_conv3d_uno.1} parent=119 // loop_pre_header
                _
              $region122: #{spectral_conv3d_uno.1} parent=119 // loop_header
                %s378 = sphi 0, %s382
                %p379 = scmp.ge.s32.totalorder %s378, 1
                %s383 = sphi %s363, %s363
                %s384 = sphi %s368, %s368
              $region123: #{spectral_conv3d_uno.1} parent=119 // loop_header_branch
                %381 = sbr.rel (%p379) target = $region127
              $region124: #{spectral_conv3d_uno.1} parent=119 // loop_body
                %v385 = vld [vmem:[%s383] sm:%s376]
                %386 = vst [vmem:[%s384] sm:%s376] %v385
                %v387 = vld [vmem:[%s383 + $0x8] sm:%s376]
                %388 = vst [vmem:[%s384 + $0x10] sm:%s376] %v387
              $region125: #{spectral_conv3d_uno.1} parent=119 // loop_footer
                %s382 = sadd.s32 1, %s378
              $region126: #{spectral_conv3d_uno.1} parent=119 // loop_footer_branch
                %377 = sbr.rel target = $region122
              $region127: #{spectral_conv3d_uno.1} parent=119 // loop_exit
                _
            $region120: #{spectral_conv3d_uno.1} parent=111 // pred_fallthru
              _
          $region112: #{spectral_conv3d_uno.1} parent=107 // pred_fallthru
            _
          %405 = vnop
        $region108: #{spectral_conv3d_uno.1} parent=95 // pred_fallthru
          _
      $region96: #{spectral_conv3d_uno.1} parent=5 // pred_fallthru
        _
      %p406 = scmp.le.s32.totalorder 2, %s8
      // Predicated region
      $region143: #{spectral_conv3d_uno.1} parent=5 // pred_check
        %p407 = pneg %p406
      $region144: #{spectral_conv3d_uno.1} parent=5 // pred_check_branch
        %409 = sbr.rel (%p407) target = $region146
      $region145: #{spectral_conv3d_uno.1} parent=5 // pred_region
        %s410 = ssub.s32 %s8, 2
        // Predicated region
        $region147: #{spectral_conv3d_uno.1} parent=145 // pred_check
          %p411 = pneg %p89
        $region148: #{spectral_conv3d_uno.1} parent=145 // pred_check_branch
          %413 = sbr.rel (%p411) target = $region150
        $region149: #{spectral_conv3d_uno.1} parent=145 // pred_region
          %s414 = sand.u32 %s74, 1
          %s415 = sand.u32 %s74, 1
          %s416 = smul.addr %s415, 16
          %s417 = scalar_lea.vmem [#allocation4], %s416
        $region150: #{spectral_conv3d_uno.1} parent=145 // pred_fallthru
          _
      $region146: #{spectral_conv3d_uno.1} parent=5 // pred_fallthru
        _
    $region6: #{spectral_conv3d_uno.1} parent=1 // loop_footer
      %s12 = sadd.s32 1, %s8
    $region7: #{spectral_conv3d_uno.1} parent=1 // loop_footer_branch
      %7 = sbr.rel target = $region3
    $region8: #{spectral_conv3d_uno.1} parent=1 // loop_exit
      _

// kernel: squeeze.6
$region0: #{squeeze.6}
  %s0 = inlined_call_operand.vmem [shape: f32[8,256], index: 0, kind: input, shape index: {}]
  %s1 = inlined_call_operand.vmem [shape: f32[2,4,4,4,4,4], index: 1, kind: output, shape index: {}]
  $region1: #{squeeze.6} parent=0
    #allocation0 [shape = 'u8[524288]{0}', space=vmem, size = 0x80000, scoped, tag = 'scoped mem for output reshape']
    %v2 = vld [vmem:[%s0] sm:$0xff]
    %vm3 = vcmask 31744
    %4 = vst.msk [vmem:[#allocation0] sm:$0x1] %vm3, %v2
    %s5 = scalar_lea.vmem [#allocation0], 127
    %6 = vst.msk [vmem:[%s5] sm:$0x2] %vm3, %v2
    %s7 = scalar_lea.vmem [#allocation0], 254
    %8 = vst.msk [vmem:[%s7] sm:$0x4] %vm3, %v2
    %s9 = scalar_lea.vmem [#allocation0], 381
    %10 = vst.msk [vmem:[%s9] sm:$0x8] %vm3, %v2
    %s11 = scalar_lea.vmem [#allocation0], 508
    %12 = vst.msk [vmem:[%s11] sm:$0x10] %vm3, %v2
    %s13 = scalar_lea.vmem [#allocation0], 635
    %14 = vst.msk [vmem:[%s13] sm:$0x20] %vm3, %v2
    %s15 = scalar_lea.vmem [#allocation0], 762
    %16 = vst.msk [vmem:[%s15] sm:$0x40] %vm3, %v2
    %s17 = scalar_lea.vmem [#allocation0], 889
    %18 = vst.msk [vmem:[%s17] sm:$0x80] %vm3, %v2
    %s19 = scalar_lea.vmem %s0, 8
    %v20 = vld [vmem:[%s19] sm:$0xff]
    %vm21 = vcmask 31744
    %s22 = scalar_lea.vmem [#allocation0], 64
    %23 = vst.msk [vmem:[%s22] sm:$0x1] %vm21, %v20
    %s24 = scalar_lea.vmem [#allocation0], 191
    %25 = vst.msk [vmem:[%s24] sm:$0x2] %vm21, %v20
    %s26 = scalar_lea.vmem [#allocation0], 318
    %27 = vst.msk [vmem:[%s26] sm:$0x4] %vm21, %v20
    %s28 = scalar_lea.vmem [#allocation0], 445
    %29 = vst.msk [vmem:[%s28] sm:$0x8] %vm21, %v20
    %s30 = scalar_lea.vmem [#allocation0], 572
    %31 = vst.msk [vmem:[%s30] sm:$0x10] %vm21, %v20
    %s32 = scalar_lea.vmem [#allocation0], 699
    %33 = vst.msk [vmem:[%s32] sm:$0x20] %vm21, %v20
    %s34 = scalar_lea.vmem [#allocation0], 826
    %35 = vst.msk [vmem:[%s34] sm:$0x40] %vm21, %v20
    %s36 = scalar_lea.vmem [#allocation0], 953
    %37 = vst.msk [vmem:[%s36] sm:$0x80] %vm21, %v20
    %v38 = vld [vmem:[%s0] sm:$0xff]
    %39 = vrot.lane.b32.xlu0 %v38, 124
    %v40 = vpop.permute.xlu0 %39
    %vm41 = vcmask 31744
    %s42 = scalar_lea.vmem [#allocation0], 1
    %43 = vst.msk [vmem:[%s42] sm:$0x1] %vm41, %v40
    %s44 = scalar_lea.vmem [#allocation0], 128
    %45 = vst.msk [vmem:[%s44] sm:$0x2] %vm41, %v40
    %s46 = scalar_lea.vmem [#allocation0], 255
    %47 = vst.msk [vmem:[%s46] sm:$0x4] %vm41, %v40
    %s48 = scalar_lea.vmem [#allocation0], 382
    %49 = vst.msk [vmem:[%s48] sm:$0x8] %vm41, %v40
    %s50 = scalar_lea.vmem [#allocation0], 509
    %51 = vst.msk [vmem:[%s50] sm:$0x10] %vm41, %v40
    %s52 = scalar_lea.vmem [#allocation0], 636
    %53 = vst.msk [vmem:[%s52] sm:$0x20] %vm41, %v40
    %s54 = scalar_lea.vmem [#allocation0], 763
    %55 = vst.msk [vmem:[%s54] sm:$0x40] %vm41, %v40
    %s56 = scalar_lea.vmem [#allocation0], 890
    %57 = vst.msk [vmem:[%s56] sm:$0x80] %vm41, %v40
    %s58 = scalar_lea.vmem %s0, 8
    %v59 = vld [vmem:[%s58] sm:$0xff]
    %60 = vrot.lane.b32.xlu0 %v59, 124
    %v61 = vpop.permute.xlu0 %60
    %vm62 = vcmask 31744
    %s63 = scalar_lea.vmem [#allocation0], 65
    %64 = vst.msk [vmem:[%s63] sm:$0x1] %vm62, %v61
    %s65 = scalar_lea.vmem [#allocation0], 192
    %66 = vst.msk [vmem:[%s65] sm:$0x2] %vm62, %v61
    %s67 = scalar_lea.vmem [#allocation0], 319
    %68 = vst.msk [vmem:[%s67] sm:$0x4] %vm62, %v61
    %s69 = scalar_lea.vmem [#allocation0], 446
    %70 = vst.msk [vmem:[%s69] sm:$0x8] %vm62, %v61
    %s71 = scalar_lea.vmem [#allocation0], 573
    %72 = vst.msk [vmem:[%s71] sm:$0x10] %vm62, %v61
    %s73 = scalar_lea.vmem [#allocation0], 700
    %74 = vst.msk [vmem:[%s73] sm:$0x20] %vm62, %v61
    %s75 = scalar_lea.vmem [#allocation0], 827
    %76 = vst.msk [vmem:[%s75] sm:$0x40] %vm62, %v61
    %s77 = scalar_lea.vmem [#allocation0], 954
    %78 = vst.msk [vmem:[%s77] sm:$0x80] %vm62, %v61
    %v79 = vld [vmem:[%s0] sm:$0xff]
    %80 = vrot.lane.b32.xlu0 %v79, 120
    %v81 = vpop.permute.xlu0 %80
    %vm82 = vcmask 31744
    %s83 = scalar_lea.vmem [#allocation0], 2
    %84 = vst.msk [vmem:[%s83] sm:$0x1] %vm82, %v81
    %s85 = scalar_lea.vmem [#allocation0], 129
    %86 = vst.msk [vmem:[%s85] sm:$0x2] %vm82, %v81
    %s87 = scalar_lea.vmem [#allocation0], 256
    %88 = vst.msk [vmem:[%s87] sm:$0x4] %vm82, %v81
    %s89 = scalar_lea.vmem [#allocation0], 383
    %90 = vst.msk [vmem:[%s89] sm:$0x8] %vm82, %v81
    %s91 = scalar_lea.vmem [#allocation0], 510
    %92 = vst.msk [vmem:[%s91] sm:$0x10] %vm82, %v81
    %s93 = scalar_lea.vmem [#allocation0], 637
    %94 = vst.msk [vmem:[%s93] sm:$0x20] %vm82, %v81
    %s95 = scalar_lea.vmem [#allocation0], 764
    %96 = vst.msk [vmem:[%s95] sm:$0x40] %vm82, %v81
    %s97 = scalar_lea.vmem [#allocation0], 891
    %98 = vst.msk [vmem:[%s97] sm:$0x80] %vm82, %v81
    %s99 = scalar_lea.vmem %s0, 8
    %v100 = vld [vmem:[%s99] sm:$0xff]
    %101 = vrot.lane.b32.xlu0 %v100, 120
    %v102 = vpop.permute.xlu0 %101
    %vm103 = vcmask 31744
    %s104 = scalar_lea.vmem [#allocation0], 66
    %105 = vst.msk [vmem:[%s104] sm:$0x1] %vm103, %v102
    %s106 = scalar_lea.vmem [#allocation0], 193
    %107 = vst.msk [vmem:[%s106] sm:$0x2] %vm103, %v102
    %s108 = scalar_lea.vmem [#allocation0], 320
    %109 = vst.msk [vmem:[%s108] sm:$0x4] %vm103, %v102
    %s110 = scalar_lea.vmem [#allocation0], 447
    %111 = vst.msk [vmem:[%s110] sm:$0x8] %vm103, %v102
    %s112 = scalar_lea.vmem [#allocation0], 574
    %113 = vst.msk [vmem:[%s112] sm:$0x10] %vm103, %v102
    %s114 = scalar_lea.vmem [#allocation0], 701
    %115 = vst.msk [vmem:[%s114] sm:$0x20] %vm103, %v102
    %s116 = scalar_lea.vmem [#allocation0], 828
    %117 = vst.msk [vmem:[%s116] sm:$0x40] %vm103, %v102
    %s118 = scalar_lea.vmem [#allocation0], 955
    %119 = vst.msk [vmem:[%s118] sm:$0x80] %vm103, %v102
    %v120 = vld [vmem:[%s0] sm:$0xff]
    %121 = vrot.lane.b32.xlu0 %v120, 116
    %v122 = vpop.permute.xlu0 %121
    %vm123 = vcmask 31744
    %s124 = scalar_lea.vmem [#allocation0], 3
    %125 = vst.msk [vmem:[%s124] sm:$0x1] %vm123, %v122
    %s126 = scalar_lea.vmem [#allocation0], 130
    %127 = vst.msk [vmem:[%s126] sm:$0x2] %vm123, %v122
    %s128 = scalar_lea.vmem [#allocation0], 257
    %129 = vst.msk [vmem:[%s128] sm:$0x4] %vm123, %v122
    %s130 = scalar_lea.vmem [#allocation0], 384
    %131 = vst.msk [vmem:[%s130] sm:$0x8] %vm123, %v122
    %s132 = scalar_lea.vmem [#allocation0], 511
    %133 = vst.msk [vmem:[%s132] sm:$0x10] %vm123, %v122
    %s134 = scalar_lea.vmem [#allocation0], 638
    %135 = vst.msk [vmem:[%s134] sm:$0x20] %vm123, %v122
    %s136 = scalar_lea.vmem [#allocation0], 765
    %137 = vst.msk [vmem:[%s136] sm:$0x40] %vm123, %v122
    %s138 = scalar_lea.vmem [#allocation0], 892
    %139 = vst.msk [vmem:[%s138] sm:$0x80] %vm123, %v122
    %s140 = scalar_lea.vmem %s0, 8
    %v141 = vld [vmem:[%s140] sm:$0xff]
    %142 = vrot.lane.b32.xlu0 %v141, 116
    %v143 = vpop.permute.xlu0 %142
    %vm144 = vcmask 31744
    %s145 = scalar_lea.vmem [#allocation0], 67
    %146 = vst.msk [vmem:[%s145] sm:$0x1] %vm144, %v143
    %s147 = scalar_lea.vmem [#allocation0], 194
    %148 = vst.msk [vmem:[%s147] sm:$0x2] %vm144, %v143
    %s149 = scalar_lea.vmem [#allocation0], 321
    %150 = vst.msk [vmem:[%s149] sm:$0x4] %vm144, %v143
    %s151 = scalar_lea.vmem [#allocation0], 448
    %152 = vst.msk [vmem:[%s151] sm:$0x8] %vm144, %v143
    %s153 = scalar_lea.vmem [#allocation0], 575
    %154 = vst.msk [vmem:[%s153] sm:$0x10] %vm144, %v143
    %s155 = scalar_lea.vmem [#allocation0], 702
    %156 = vst.msk [vmem:[%s155] sm:$0x20] %vm144, %v143
    %s157 = scalar_lea.vmem [#allocation0], 829
    %158 = vst.msk [vmem:[%s157] sm:$0x40] %vm144, %v143
    %s159 = scalar_lea.vmem [#allocation0], 956
    %160 = vst.msk [vmem:[%s159] sm:$0x80] %vm144, %v143
    %v161 = vld [vmem:[%s0] sm:$0xff]
    %162 = vrot.lane.b32.xlu0 %v161, 112
    %v163 = vpop.permute.xlu0 %162
    %vm164 = vcmask 31744
    %s165 = scalar_lea.vmem [#allocation0], 8
    %166 = vst.msk [vmem:[%s165] sm:$0x1] %vm164, %v163
    %s167 = scalar_lea.vmem [#allocation0], 135
    %168 = vst.msk [vmem:[%s167] sm:$0x2] %vm164, %v163
    %s169 = scalar_lea.vmem [#allocation0], 262
    %170 = vst.msk [vmem:[%s169] sm:$0x4] %vm164, %v163
    %s171 = scalar_lea.vmem [#allocation0], 389
    %172 = vst.msk [vmem:[%s171] sm:$0x8] %vm164, %v163
    %s173 = scalar_lea.vmem [#allocation0], 516
    %174 = vst.msk [vmem:[%s173] sm:$0x10] %vm164, %v163
    %s175 = scalar_lea.vmem [#allocation0], 643
    %176 = vst.msk [vmem:[%s175] sm:$0x20] %vm164, %v163
    %s177 = scalar_lea.vmem [#allocation0], 770
    %178 = vst.msk [vmem:[%s177] sm:$0x40] %vm164, %v163
    %s179 = scalar_lea.vmem [#allocation0], 897
    %180 = vst.msk [vmem:[%s179] sm:$0x80] %vm164, %v163
    %s181 = scalar_lea.vmem %s0, 8
    %v182 = vld [vmem:[%s181] sm:$0xff]
    %183 = vrot.lane.b32.xlu0 %v182, 112
    %v184 = vpop.permute.xlu0 %183
    %vm185 = vcmask 31744
    %s186 = scalar_lea.vmem [#allocation0], 72
    %187 = vst.msk [vmem:[%s186] sm:$0x1] %vm185, %v184
    %s188 = scalar_lea.vmem [#allocation0], 199
    %189 = vst.msk [vmem:[%s188] sm:$0x2] %vm185, %v184
    %s190 = scalar_lea.vmem [#allocation0], 326
    %191 = vst.msk [vmem:[%s190] sm:$0x4] %vm185, %v184
    %s192 = scalar_lea.vmem [#allocation0], 453
    %193 = vst.msk [vmem:[%s192] sm:$0x8] %vm185, %v184
    %s194 = scalar_lea.vmem [#allocation0], 580
    %195 = vst.msk [vmem:[%s194] sm:$0x10] %vm185, %v184
    %s196 = scalar_lea.vmem [#allocation0], 707
    %197 = vst.msk [vmem:[%s196] sm:$0x20] %vm185, %v184
    %s198 = scalar_lea.vmem [#allocation0], 834
    %199 = vst.msk [vmem:[%s198] sm:$0x40] %vm185, %v184
    %s200 = scalar_lea.vmem [#allocation0], 961
    %201 = vst.msk [vmem:[%s200] sm:$0x80] %vm185, %v184
    %v202 = vld [vmem:[%s0] sm:$0xff]
    %203 = vrot.lane.b32.xlu0 %v202, 108
    %v204 = vpop.permute.xlu0 %203
    %vm205 = vcmask 31744
    %s206 = scalar_lea.vmem [#allocation0], 9
    %207 = vst.msk [vmem:[%s206] sm:$0x1] %vm205, %v204
    %s208 = scalar_lea.vmem [#allocation0], 136
    %209 = vst.msk [vmem:[%s208] sm:$0x2] %vm205, %v204
    %s210 = scalar_lea.vmem [#allocation0], 263
    %211 = vst.msk [vmem:[%s210] sm:$0x4] %vm205, %v204
    %s212 = scalar_lea.vmem [#allocation0], 390
    %213 = vst.msk [vmem:[%s212] sm:$0x8] %vm205, %v204
    %s214 = scalar_lea.vmem [#allocation0], 517
    %215 = vst.msk [vmem:[%s214] sm:$0x10] %vm205, %v204
    %s216 = scalar_lea.vmem [#allocation0], 644
    %217 = vst.msk [vmem:[%s216] sm:$0x20] %vm205, %v204
    %s218 = scalar_lea.vmem [#allocation0], 771
    %219 = vst.msk [vmem:[%s218] sm:$0x40] %vm205, %v204
    %s220 = scalar_lea.vmem [#allocation0], 898
    %221 = vst.msk [vmem:[%s220] sm:$0x80] %vm205, %v204
    %s222 = scalar_lea.vmem %s0, 8
    %v223 = vld [vmem:[%s222] sm:$0xff]
    %224 = vrot.lane.b32.xlu0 %v223, 108
    %v225 = vpop.permute.xlu0 %224
    %vm226 = vcmask 31744
    %s227 = scalar_lea.vmem [#allocation0], 73
    %228 = vst.msk [vmem:[%s227] sm:$0x1] %vm226, %v225
    %s229 = scalar_lea.vmem [#allocation0], 200
    %230 = vst.msk [vmem:[%s229] sm:$0x2] %vm226, %v225
    %s231 = scalar_lea.vmem [#allocation0], 327
    %232 = vst.msk [vmem:[%s231] sm:$0x4] %vm226, %v225
    %s233 = scalar_lea.vmem [#allocation0], 454
    %234 = vst.msk [vmem:[%s233] sm:$0x8] %vm226, %v225
    %s235 = scalar_lea.vmem [#allocation0], 581
    %236 = vst.msk [vmem:[%s235] sm:$0x10] %vm226, %v225
    %s237 = scalar_lea.vmem [#allocation0], 708
    %238 = vst.msk [vmem:[%s237] sm:$0x20] %vm226, %v225
    %s239 = scalar_lea.vmem [#allocation0], 835
    %240 = vst.msk [vmem:[%s239] sm:$0x40] %vm226, %v225
    %s241 = scalar_lea.vmem [#allocation0], 962
    %242 = vst.msk [vmem:[%s241] sm:$0x80] %vm226, %v225
    %v243 = vld [vmem:[%s0] sm:$0xff]
    %244 = vrot.lane.b32.xlu0 %v243, 104
    %v245 = vpop.permute.xlu0 %244
    %vm246 = vcmask 31744
    %s247 = scalar_lea.vmem [#allocation0], 10
    %248 = vst.msk [vmem:[%s247] sm:$0x1] %vm246, %v245
    %s249 = scalar_lea.vmem [#allocation0], 137
    %250 = vst.msk [vmem:[%s249] sm:$0x2] %vm246, %v245
    %s251 = scalar_lea.vmem [#allocation0], 264
    %252 = vst.msk [vmem:[%s251] sm:$0x4] %vm246, %v245
    %s253 = scalar_lea.vmem [#allocation0], 391
    %254 = vst.msk [vmem:[%s253] sm:$0x8] %vm246, %v245
    %s255 = scalar_lea.vmem [#allocation0], 518
    %256 = vst.msk [vmem:[%s255] sm:$0x10] %vm246, %v245
    %s257 = scalar_lea.vmem [#allocation0], 645
    %258 = vst.msk [vmem:[%s257] sm:$0x20] %vm246, %v245
    %s259 = scalar_lea.vmem [#allocation0], 772
    %260 = vst.msk [vmem:[%s259] sm:$0x40] %vm246, %v245
    %s261 = scalar_lea.vmem [#allocation0], 899
    %262 = vst.msk [vmem:[%s261] sm:$0x80] %vm246, %v245
    %s263 = scalar_lea.vmem %s0, 8
    %v264 = vld [vmem:[%s263] sm:$0xff]
    %265 = vrot.lane.b32.xlu0 %v264, 104
    %v266 = vpop.permute.xlu0 %265
    %vm267 = vcmask 31744
    %s268 = scalar_lea.vmem [#allocation0], 74
    %269 = vst.msk [vmem:[%s268] sm:$0x1] %vm267, %v266
    %s270 = scalar_lea.vmem [#allocation0], 201
    %271 = vst.msk [vmem:[%s270] sm:$0x2] %vm267, %v266
    %s272 = scalar_lea.vmem [#allocation0], 328
    %273 = vst.msk [vmem:[%s272] sm:$0x4] %vm267, %v266
    %s274 = scalar_lea.vmem [#allocation0], 455
    %275 = vst.msk [vmem:[%s274] sm:$0x8] %vm267, %v266
    %s276 = scalar_lea.vmem [#allocation0], 582
    %277 = vst.msk [vmem:[%s276] sm:$0x10] %vm267, %v266
    %s278 = scalar_lea.vmem [#allocation0], 709
    %279 = vst.msk [vmem:[%s278] sm:$0x20] %vm267, %v266
    %s280 = scalar_lea.vmem [#allocation0], 836
    %281 = vst.msk [vmem:[%s280] sm:$0x40] %vm267, %v266
    %s282 = scalar_lea.vmem [#allocation0], 963
    %283 = vst.msk [vmem:[%s282] sm:$0x80] %vm267, %v266
    %v284 = vld [vmem:[%s0] sm:$0xff]
    %285 = vrot.lane.b32.xlu0 %v284, 100
    %v286 = vpop.permute.xlu0 %285
    %vm287 = vcmask 31744
    %s288 = scalar_lea.vmem [#allocation0], 11
    %289 = vst.msk [vmem:[%s288] sm:$0x1] %vm287, %v286
    %s290 = scalar_lea.vmem [#allocation0], 138
    %291 = vst.msk [vmem:[%s290] sm:$0x2] %vm287, %v286
    %s292 = scalar_lea.vmem [#allocation0], 265
    %293 = vst.msk [vmem:[%s292] sm:$0x4] %vm287, %v286
    %s294 = scalar_lea.vmem [#allocation0], 392
    %295 = vst.msk [vmem:[%s294] sm:$0x8] %vm287, %v286
    %s296 = scalar_lea.vmem [#allocation0], 519
    %297 = vst.msk [vmem:[%s296] sm:$0x10] %vm287, %v286
    %s298 = scalar_lea.vmem [#allocation0], 646
    %299 = vst.msk [vmem:[%s298] sm:$0x20] %vm287, %v286
    %s300 = scalar_lea.vmem [#allocation0], 773
    %301 = vst.msk [vmem:[%s300] sm:$0x40] %vm287, %v286
    %s302 = scalar_lea.vmem [#allocation0], 900
    %303 = vst.msk [vmem:[%s302] sm:$0x80] %vm287, %v286
    %s304 = scalar_lea.vmem %s0, 8
    %v305 = vld [vmem:[%s304] sm:$0xff]
    %306 = vrot.lane.b32.xlu0 %v305, 100
    %v307 = vpop.permute.xlu0 %306
    %vm308 = vcmask 31744
    %s309 = scalar_lea.vmem [#allocation0], 75
    %310 = vst.msk [vmem:[%s309] sm:$0x1] %vm308, %v307
    %s311 = scalar_lea.vmem [#allocation0], 202
    %312 = vst.msk [vmem:[%s311] sm:$0x2] %vm308, %v307
    %s313 = scalar_lea.vmem [#allocation0], 329
    %314 = vst.msk [vmem:[%s313] sm:$0x4] %vm308, %v307
    %s315 = scalar_lea.vmem [#allocation0], 456
    %316 = vst.msk [vmem:[%s315] sm:$0x8] %vm308, %v307
    %s317 = scalar_lea.vmem [#allocation0], 583
    %318 = vst.msk [vmem:[%s317] sm:$0x10] %vm308, %v307
    %s319 = scalar_lea.vmem [#allocation0], 710
    %320 = vst.msk [vmem:[%s319] sm:$0x20] %vm308, %v307
    %s321 = scalar_lea.vmem [#allocation0], 837
    %322 = vst.msk [vmem:[%s321] sm:$0x40] %vm308, %v307
    %s323 = scalar_lea.vmem [#allocation0], 964
    %324 = vst.msk [vmem:[%s323] sm:$0x80] %vm308, %v307
    %v325 = vld [vmem:[%s0] sm:$0xff]
    %326 = vrot.lane.b32.xlu0 %v325, 96
    %v327 = vpop.permute.xlu0 %326
    %vm328 = vcmask 31744
    %s329 = scalar_lea.vmem [#allocation0], 16
    %330 = vst.msk [vmem:[%s329] sm:$0x1] %vm328, %v327
    %s331 = scalar_lea.vmem [#allocation0], 143
    %332 = vst.msk [vmem:[%s331] sm:$0x2] %vm328, %v327
    %s333 = scalar_lea.vmem [#allocation0], 270
    %334 = vst.msk [vmem:[%s333] sm:$0x4] %vm328, %v327
    %s335 = scalar_lea.vmem [#allocation0], 397
    %336 = vst.msk [vmem:[%s335] sm:$0x8] %vm328, %v327
    %s337 = scalar_lea.vmem [#allocation0], 524
    %338 = vst.msk [vmem:[%s337] sm:$0x10] %vm328, %v327
    %s339 = scalar_lea.vmem [#allocation0], 651
    %340 = vst.msk [vmem:[%s339] sm:$0x20] %vm328, %v327
    %s341 = scalar_lea.vmem [#allocation0], 778
    %342 = vst.msk [vmem:[%s341] sm:$0x40] %vm328, %v327
    %s343 = scalar_lea.vmem [#allocation0], 905
    %344 = vst.msk [vmem:[%s343] sm:$0x80] %vm328, %v327
    %s345 = scalar_lea.vmem %s0, 8
    %v346 = vld [vmem:[%s345] sm:$0xff]
    %347 = vrot.lane.b32.xlu0 %v346, 96
    %v348 = vpop.permute.xlu0 %347
    %vm349 = vcmask 31744
    %s350 = scalar_lea.vmem [#allocation0], 80
    %351 = vst.msk [vmem:[%s350] sm:$0x1] %vm349, %v348
    %s352 = scalar_lea.vmem [#allocation0], 207
    %353 = vst.msk [vmem:[%s352] sm:$0x2] %vm349, %v348
    %s354 = scalar_lea.vmem [#allocation0], 334
    %355 = vst.msk [vmem:[%s354] sm:$0x4] %vm349, %v348
    %s356 = scalar_lea.vmem [#allocation0], 461
    %357 = vst.msk [vmem:[%s356] sm:$0x8] %vm349, %v348
    %s358 = scalar_lea.vmem [#allocation0], 588
    %359 = vst.msk [vmem:[%s358] sm:$0x10] %vm349, %v348
    %s360 = scalar_lea.vmem [#allocation0], 715
    %361 = vst.msk [vmem:[%s360] sm:$0x20] %vm349, %v348
    %s362 = scalar_lea.vmem [#allocation0], 842
    %363 = vst.msk [vmem:[%s362] sm:$0x40] %vm349, %v348
    %s364 = scalar_lea.vmem [#allocation0], 969
    %365 = vst.msk [vmem:[%s364] sm:$0x80] %vm349, %v348
    %v366 = vld [vmem:[%s0] sm:$0xff]
    %367 = vrot.lane.b32.xlu0 %v366, 92
    %v368 = vpop.permute.xlu0 %367
    %vm369 = vcmask 31744
    %s370 = scalar_lea.vmem [#allocation0], 17
    %371 = vst.msk [vmem:[%s370] sm:$0x1] %vm369, %v368
    %s372 = scalar_lea.vmem [#allocation0], 144
    %373 = vst.msk [vmem:[%s372] sm:$0x2] %vm369, %v368
    %s374 = scalar_lea.vmem [#allocation0], 271
    %375 = vst.msk [vmem:[%s374] sm:$0x4] %vm369, %v368
    %s376 = scalar_lea.vmem [#allocation0], 398
    %377 = vst.msk [vmem:[%s376] sm:$0x8] %vm369, %v368
    %s378 = scalar_lea.vmem [#allocation0], 525
    %379 = vst.msk [vmem:[%s378] sm:$0x10] %vm369, %v368
    %s380 = scalar_lea.vmem [#allocation0], 652
    %381 = vst.msk [vmem:[%s380] sm:$0x20] %vm369, %v368
    %s382 = scalar_lea.vmem [#allocation0], 779
    %383 = vst.msk [vmem:[%s382] sm:$0x40] %vm369, %v368
    %s384 = scalar_lea.vmem [#allocation0], 906
    %385 = vst.msk [vmem:[%s384] sm:$0x80] %vm369, %v368
    %s386 = scalar_lea.vmem %s0, 8
    %v387 = vld [vmem:[%s386] sm:$0xff]
    %388 = vrot.lane.b32.xlu0 %v387, 92
    %v389 = vpop.permute.xlu0 %388
    %vm390 = vcmask 31744
    %s391 = scalar_lea.vmem [#allocation0], 81
    %392 = vst.msk [vmem:[%s391] sm:$0x1] %vm390, %v389
    %s393 = scalar_lea.vmem [#allocation0], 208
    %394 = vst.msk [vmem:[%s393] sm:$0x2] %vm390, %v389
    %s395 = scalar_lea.vmem [#allocation0], 335
    %396 = vst.msk [vmem:[%s395] sm:$0x4] %vm390, %v389
    %s397 = scalar_lea.vmem [#allocation0], 462
    %398 = vst.msk [vmem:[%s397] sm:$0x8] %vm390, %v389
    %s399 = scalar_lea.vmem [#allocation0], 589
    %400 = vst.msk [vmem:[%s399] sm:$0x10] %vm390, %v389
    %s401 = scalar_lea.vmem [#allocation0], 716
    %402 = vst.msk [vmem:[%s401] sm:$0x20] %vm390, %v389
    %s403 = scalar_lea.vmem [#allocation0], 843
    %404 = vst.msk [vmem:[%s403] sm:$0x40] %vm390, %v389
    %s405 = scalar_lea.vmem [#allocation0], 970
    %406 = vst.msk [vmem:[%s405] sm:$0x80] %vm390, %v389
    %v407 = vld [vmem:[%s0] sm:$0xff]
    %408 = vrot.lane.b32.xlu0 %v407, 88
    %v409 = vpop.permute.xlu0 %408
    %vm410 = vcmask 31744
    %s411 = scalar_lea.vmem [#allocation0], 18
    %412 = vst.msk [vmem:[%s411] sm:$0x1] %vm410, %v409
    %s413 = scalar_lea.vmem [#allocation0], 145
    %414 = vst.msk [vmem:[%s413] sm:$0x2] %vm410, %v409
    %s415 = scalar_lea.vmem [#allocation0], 272
    %416 = vst.msk [vmem:[%s415] sm:$0x4] %vm410, %v409
    %s417 = scalar_lea.vmem [#allocation0], 399
    %418 = vst.msk [vmem:[%s417] sm:$0x8] %vm410, %v409
    %s419 = scalar_lea.vmem [#allocation0], 526
    %420 = vst.msk [vmem:[%s419] sm:$0x10] %vm410, %v409
    %s421 = scalar_lea.vmem [#allocation0], 653
    %422 = vst.msk [vmem:[%s421] sm:$0x20] %vm410, %v409
    %s423 = scalar_lea.vmem [#allocation0], 780
    %424 = vst.msk [vmem:[%s423] sm:$0x40] %vm410, %v409
    %s425 = scalar_lea.vmem [#allocation0], 907
    %426 = vst.msk [vmem:[%s425] sm:$0x80] %vm410, %v409
    %s427 = scalar_lea.vmem %s0, 8
    %v428 = vld [vmem:[%s427] sm:$0xff]
    %429 = vrot.lane.b32.xlu0 %v428, 88
    %v430 = vpop.permute.xlu0 %429
    %vm431 = vcmask 31744
    %s432 = scalar_lea.vmem [#allocation0], 82
    %433 = vst.msk [vmem:[%s432] sm:$0x1] %vm431, %v430
    %s434 = scalar_lea.vmem [#allocation0], 209
    %435 = vst.msk [vmem:[%s434] sm:$0x2] %vm431, %v430
    %s436 = scalar_lea.vmem [#allocation0], 336
    %437 = vst.msk [vmem:[%s436] sm:$0x4] %vm431, %v430
    %s438 = scalar_lea.vmem [#allocation0], 463
    %439 = vst.msk [vmem:[%s438] sm:$0x8] %vm431, %v430
    %s440 = scalar_lea.vmem [#allocation0], 590
    %441 = vst.msk [vmem:[%s440] sm:$0x10] %vm431, %v430
    %s442 = scalar_lea.vmem [#allocation0], 717
    %443 = vst.msk [vmem:[%s442] sm:$0x20] %vm431, %v430
    %s444 = scalar_lea.vmem [#allocation0], 844
    %445 = vst.msk [vmem:[%s444] sm:$0x40] %vm431, %v430
    %s446 = scalar_lea.vmem [#allocation0], 971
    %447 = vst.msk [vmem:[%s446] sm:$0x80] %vm431, %v430
    %v448 = vld [vmem:[%s0] sm:$0xff]
    %449 = vrot.lane.b32.xlu0 %v448, 84
    %v450 = vpop.permute.xlu0 %449
    %vm451 = vcmask 31744
    %s452 = scalar_lea.vmem [#allocation0], 19
    %453 = vst.msk [vmem:[%s452] sm:$0x1] %vm451, %v450
    %s454 = scalar_lea.vmem [#allocation0], 146
    %455 = vst.msk [vmem:[%s454] sm:$0x2] %vm451, %v450
    %s456 = scalar_lea.vmem [#allocation0], 273
    %457 = vst.msk [vmem:[%s456] sm:$0x4] %vm451, %v450
    %s458 = scalar_lea.vmem [#allocation0], 400
    %459 = vst.msk [vmem:[%s458] sm:$0x8] %vm451, %v450
    %s460 = scalar_lea.vmem [#allocation0], 527
    %461 = vst.msk [vmem:[%s460] sm:$0x10] %vm451, %v450
    %s462 = scalar_lea.vmem [#allocation0], 654
    %463 = vst.msk [vmem:[%s462] sm:$0x20] %vm451, %v450
    %s464 = scalar_lea.vmem [#allocation0], 781
    %465 = vst.msk [vmem:[%s464] sm:$0x40] %vm451, %v450
    %s466 = scalar_lea.vmem [#allocation0], 908
    %467 = vst.msk [vmem:[%s466] sm:$0x80] %vm451, %v450
    %s468 = scalar_lea.vmem %s0, 8
    %v469 = vld [vmem:[%s468] sm:$0xff]
    %470 = vrot.lane.b32.xlu0 %v469, 84
    %v471 = vpop.permute.xlu0 %470
    %vm472 = vcmask 31744
    %s473 = scalar_lea.vmem [#allocation0], 83
    %474 = vst.msk [vmem:[%s473] sm:$0x1] %vm472, %v471
    %s475 = scalar_lea.vmem [#allocation0], 210
    %476 = vst.msk [vmem:[%s475] sm:$0x2] %vm472, %v471
    %s477 = scalar_lea.vmem [#allocation0], 337
    %478 = vst.msk [vmem:[%s477] sm:$0x4] %vm472, %v471
    %s479 = scalar_lea.vmem [#allocation0], 464
    %480 = vst.msk [vmem:[%s479] sm:$0x8] %vm472, %v471
    %s481 = scalar_lea.vmem [#allocation0], 591
    %482 = vst.msk [vmem:[%s481] sm:$0x10] %vm472, %v471
    %s483 = scalar_lea.vmem [#allocation0], 718
    %484 = vst.msk [vmem:[%s483] sm:$0x20] %vm472, %v471
    %s485 = scalar_lea.vmem [#allocation0], 845
    %486 = vst.msk [vmem:[%s485] sm:$0x40] %vm472, %v471
    %s487 = scalar_lea.vmem [#allocation0], 972
    %488 = vst.msk [vmem:[%s487] sm:$0x80] %vm472, %v471
    %v489 = vld [vmem:[%s0] sm:$0xff]
    %490 = vrot.lane.b32.xlu0 %v489, 80
    %v491 = vpop.permute.xlu0 %490
    %vm492 = vcmask 31744
    %s493 = scalar_lea.vmem [#allocation0], 24
    %494 = vst.msk [vmem:[%s493] sm:$0x1] %vm492, %v491
    %s495 = scalar_lea.vmem [#allocation0], 151
    %496 = vst.msk [vmem:[%s495] sm:$0x2] %vm492, %v491
    %s497 = scalar_lea.vmem [#allocation0], 278
    %498 = vst.msk [vmem:[%s497] sm:$0x4] %vm492, %v491
    %s499 = scalar_lea.vmem [#allocation0], 405
    %500 = vst.msk [vmem:[%s499] sm:$0x8] %vm492, %v491
    %s501 = scalar_lea.vmem [#allocation0], 532
    %502 = vst.msk [vmem:[%s501] sm:$0x10] %vm492, %v491
    %s503 = scalar_lea.vmem [#allocation0], 659
    %504 = vst.msk [vmem:[%s503] sm:$0x20] %vm492, %v491
    %s505 = scalar_lea.vmem [#allocation0], 786
    %506 = vst.msk [vmem:[%s505] sm:$0x40] %vm492, %v491
    %s507 = scalar_lea.vmem [#allocation0], 913
    %508 = vst.msk [vmem:[%s507] sm:$0x80] %vm492, %v491
    %s509 = scalar_lea.vmem %s0, 8
    %v510 = vld [vmem:[%s509] sm:$0xff]
    %511 = vrot.lane.b32.xlu0 %v510, 80
    %v512 = vpop.permute.xlu0 %511
    %vm513 = vcmask 31744
    %s514 = scalar_lea.vmem [#allocation0], 88
    %515 = vst.msk [vmem:[%s514] sm:$0x1] %vm513, %v512
    %s516 = scalar_lea.vmem [#allocation0], 215
    %517 = vst.msk [vmem:[%s516] sm:$0x2] %vm513, %v512
    %s518 = scalar_lea.vmem [#allocation0], 342
    %519 = vst.msk [vmem:[%s518] sm:$0x4] %vm513, %v512
    %s520 = scalar_lea.vmem [#allocation0], 469
    %521 = vst.msk [vmem:[%s520] sm:$0x8] %vm513, %v512
    %s522 = scalar_lea.vmem [#allocation0], 596
    %523 = vst.msk [vmem:[%s522] sm:$0x10] %vm513, %v512
    %s524 = scalar_lea.vmem [#allocation0], 723
    %525 = vst.msk [vmem:[%s524] sm:$0x20] %vm513, %v512
    %s526 = scalar_lea.vmem [#allocation0], 850
    %527 = vst.msk [vmem:[%s526] sm:$0x40] %vm513, %v512
    %s528 = scalar_lea.vmem [#allocation0], 977
    %529 = vst.msk [vmem:[%s528] sm:$0x80] %vm513, %v512
    %v530 = vld [vmem:[%s0] sm:$0xff]
    %531 = vrot.lane.b32.xlu0 %v530, 76
    %v532 = vpop.permute.xlu0 %531
    %vm533 = vcmask 31744
    %s534 = scalar_lea.vmem [#allocation0], 25
    %535 = vst.msk [vmem:[%s534] sm:$0x1] %vm533, %v532
    %s536 = scalar_lea.vmem [#allocation0], 152
    %537 = vst.msk [vmem:[%s536] sm:$0x2] %vm533, %v532
    %s538 = scalar_lea.vmem [#allocation0], 279
    %539 = vst.msk [vmem:[%s538] sm:$0x4] %vm533, %v532
    %s540 = scalar_lea.vmem [#allocation0], 406
    %541 = vst.msk [vmem:[%s540] sm:$0x8] %vm533, %v532
    %s542 = scalar_lea.vmem [#allocation0], 533
    %543 = vst.msk [vmem:[%s542] sm:$0x10] %vm533, %v532
    %s544 = scalar_lea.vmem [#allocation0], 660
    %545 = vst.msk [vmem:[%s544] sm:$0x20] %vm533, %v532
    %s546 = scalar_lea.vmem [#allocation0], 787
    %547 = vst.msk [vmem:[%s546] sm:$0x40] %vm533, %v532
    %s548 = scalar_lea.vmem [#allocation0], 914
    %549 = vst.msk [vmem:[%s548] sm:$0x80] %vm533, %v532
    %s550 = scalar_lea.vmem %s0, 8
    %v551 = vld [vmem:[%s550] sm:$0xff]
    %552 = vrot.lane.b32.xlu0 %v551, 76
    %v553 = vpop.permute.xlu0 %552
    %vm554 = vcmask 31744
    %s555 = scalar_lea.vmem [#allocation0], 89
    %556 = vst.msk [vmem:[%s555] sm:$0x1] %vm554, %v553
    %s557 = scalar_lea.vmem [#allocation0], 216
    %558 = vst.msk [vmem:[%s557] sm:$0x2] %vm554, %v553
    %s559 = scalar_lea.vmem [#allocation0], 343
    %560 = vst.msk [vmem:[%s559] sm:$0x4] %vm554, %v553
    %s561 = scalar_lea.vmem [#allocation0], 470
    %562 = vst.msk [vmem:[%s561] sm:$0x8] %vm554, %v553
    %s563 = scalar_lea.vmem [#allocation0], 597
    %564 = vst.msk [vmem:[%s563] sm:$0x10] %vm554, %v553
    %s565 = scalar_lea.vmem [#allocation0], 724
    %566 = vst.msk [vmem:[%s565] sm:$0x20] %vm554, %v553
    %s567 = scalar_lea.vmem [#allocation0], 851
    %568 = vst.msk [vmem:[%s567] sm:$0x40] %vm554, %v553
    %s569 = scalar_lea.vmem [#allocation0], 978
    %570 = vst.msk [vmem:[%s569] sm:$0x80] %vm554, %v553
    %v571 = vld [vmem:[%s0] sm:$0xff]
    %572 = vrot.lane.b32.xlu0 %v571, 72
    %v573 = vpop.permute.xlu0 %572
    %vm574 = vcmask 31744
    %s575 = scalar_lea.vmem [#allocation0], 26
    %576 = vst.msk [vmem:[%s575] sm:$0x1] %vm574, %v573
    %s577 = scalar_lea.vmem [#allocation0], 153
    %578 = vst.msk [vmem:[%s577] sm:$0x2] %vm574, %v573
    %s579 = scalar_lea.vmem [#allocation0], 280
    %580 = vst.msk [vmem:[%s579] sm:$0x4] %vm574, %v573
    %s581 = scalar_lea.vmem [#allocation0], 407
    %582 = vst.msk [vmem:[%s581] sm:$0x8] %vm574, %v573
    %s583 = scalar_lea.vmem [#allocation0], 534
    %584 = vst.msk [vmem:[%s583] sm:$0x10] %vm574, %v573
    %s585 = scalar_lea.vmem [#allocation0], 661
    %586 = vst.msk [vmem:[%s585] sm:$0x20] %vm574, %v573
    %s587 = scalar_lea.vmem [#allocation0], 788
    %588 = vst.msk [vmem:[%s587] sm:$0x40] %vm574, %v573
    %s589 = scalar_lea.vmem [#allocation0], 915
    %590 = vst.msk [vmem:[%s589] sm:$0x80] %vm574, %v573
    %s591 = scalar_lea.vmem %s0, 8
    %v592 = vld [vmem:[%s591] sm:$0xff]
    %593 = vrot.lane.b32.xlu0 %v592, 72
    %v594 = vpop.permute.xlu0 %593
    %vm595 = vcmask 31744
    %s596 = scalar_lea.vmem [#allocation0], 90
    %597 = vst.msk [vmem:[%s596] sm:$0x1] %vm595, %v594
    %s598 = scalar_lea.vmem [#allocation0], 217
    %599 = vst.msk [vmem:[%s598] sm:$0x2] %vm595, %v594
    %s600 = scalar_lea.vmem [#allocation0], 344
    %601 = vst.msk [vmem:[%s600] sm:$0x4] %vm595, %v594
    %s602 = scalar_lea.vmem [#allocation0], 471
    %603 = vst.msk [vmem:[%s602] sm:$0x8] %vm595, %v594
    %s604 = scalar_lea.vmem [#allocation0], 598
    %605 = vst.msk [vmem:[%s604] sm:$0x10] %vm595, %v594
    %s606 = scalar_lea.vmem [#allocation0], 725
    %607 = vst.msk [vmem:[%s606] sm:$0x20] %vm595, %v594
    %s608 = scalar_lea.vmem [#allocation0], 852
    %609 = vst.msk [vmem:[%s608] sm:$0x40] %vm595, %v594
    %s610 = scalar_lea.vmem [#allocation0], 979
    %611 = vst.msk [vmem:[%s610] sm:$0x80] %vm595, %v594
    %v612 = vld [vmem:[%s0] sm:$0xff]
    %613 = vrot.lane.b32.xlu0 %v612, 68
    %v614 = vpop.permute.xlu0 %613
    %vm615 = vcmask 31744
    %s616 = scalar_lea.vmem [#allocation0], 27
    %617 = vst.msk [vmem:[%s616] sm:$0x1] %vm615, %v614
    %s618 = scalar_lea.vmem [#allocation0], 154
    %619 = vst.msk [vmem:[%s618] sm:$0x2] %vm615, %v614
    %s620 = scalar_lea.vmem [#allocation0], 281
    %621 = vst.msk [vmem:[%s620] sm:$0x4] %vm615, %v614
    %s622 = scalar_lea.vmem [#allocation0], 408
    %623 = vst.msk [vmem:[%s622] sm:$0x8] %vm615, %v614
    %s624 = scalar_lea.vmem [#allocation0], 535
    %625 = vst.msk [vmem:[%s624] sm:$0x10] %vm615, %v614
    %s626 = scalar_lea.vmem [#allocation0], 662
    %627 = vst.msk [vmem:[%s626] sm:$0x20] %vm615, %v614
    %s628 = scalar_lea.vmem [#allocation0], 789
    %629 = vst.msk [vmem:[%s628] sm:$0x40] %vm615, %v614
    %s630 = scalar_lea.vmem [#allocation0], 916
    %631 = vst.msk [vmem:[%s630] sm:$0x80] %vm615, %v614
    %s632 = scalar_lea.vmem %s0, 8
    %v633 = vld [vmem:[%s632] sm:$0xff]
    %634 = vrot.lane.b32.xlu0 %v633, 68
    %v635 = vpop.permute.xlu0 %634
    %vm636 = vcmask 31744
    %s637 = scalar_lea.vmem [#allocation0], 91
    %638 = vst.msk [vmem:[%s637] sm:$0x1] %vm636, %v635
    %s639 = scalar_lea.vmem [#allocation0], 218
    %640 = vst.msk [vmem:[%s639] sm:$0x2] %vm636, %v635
    %s641 = scalar_lea.vmem [#allocation0], 345
    %642 = vst.msk [vmem:[%s641] sm:$0x4] %vm636, %v635
    %s643 = scalar_lea.vmem [#allocation0], 472
    %644 = vst.msk [vmem:[%s643] sm:$0x8] %vm636, %v635
    %s645 = scalar_lea.vmem [#allocation0], 599
    %646 = vst.msk [vmem:[%s645] sm:$0x10] %vm636, %v635
    %s647 = scalar_lea.vmem [#allocation0], 726
    %648 = vst.msk [vmem:[%s647] sm:$0x20] %vm636, %v635
    %s649 = scalar_lea.vmem [#allocation0], 853
    %650 = vst.msk [vmem:[%s649] sm:$0x40] %vm636, %v635
    %s651 = scalar_lea.vmem [#allocation0], 980
    %652 = vst.msk [vmem:[%s651] sm:$0x80] %vm636, %v635
    %v653 = vld [vmem:[%s0] sm:$0xff]
    %654 = vrot.lane.b32.xlu0 %v653, 64
    %v655 = vpop.permute.xlu0 %654
    %vm656 = vcmask 31744
    %s657 = scalar_lea.vmem [#allocation0], 32
    %658 = vst.msk [vmem:[%s657] sm:$0x1] %vm656, %v655
    %s659 = scalar_lea.vmem [#allocation0], 159
    %660 = vst.msk [vmem:[%s659] sm:$0x2] %vm656, %v655
    %s661 = scalar_lea.vmem [#allocation0], 286
    %662 = vst.msk [vmem:[%s661] sm:$0x4] %vm656, %v655
    %s663 = scalar_lea.vmem [#allocation0], 413
    %664 = vst.msk [vmem:[%s663] sm:$0x8] %vm656, %v655
    %s665 = scalar_lea.vmem [#allocation0], 540
    %666 = vst.msk [vmem:[%s665] sm:$0x10] %vm656, %v655
    %s667 = scalar_lea.vmem [#allocation0], 667
    %668 = vst.msk [vmem:[%s667] sm:$0x20] %vm656, %v655
    %s669 = scalar_lea.vmem [#allocation0], 794
    %670 = vst.msk [vmem:[%s669] sm:$0x40] %vm656, %v655
    %s671 = scalar_lea.vmem [#allocation0], 921
    %672 = vst.msk [vmem:[%s671] sm:$0x80] %vm656, %v655
    %s673 = scalar_lea.vmem %s0, 8
    %v674 = vld [vmem:[%s673] sm:$0xff]
    %675 = vrot.lane.b32.xlu0 %v674, 64
    %v676 = vpop.permute.xlu0 %675
    %vm677 = vcmask 31744
    %s678 = scalar_lea.vmem [#allocation0], 96
    %679 = vst.msk [vmem:[%s678] sm:$0x1] %vm677, %v676
    %s680 = scalar_lea.vmem [#allocation0], 223
    %681 = vst.msk [vmem:[%s680] sm:$0x2] %vm677, %v676
    %s682 = scalar_lea.vmem [#allocation0], 350
    %683 = vst.msk [vmem:[%s682] sm:$0x4] %vm677, %v676
    %s684 = scalar_lea.vmem [#allocation0], 477
    %685 = vst.msk [vmem:[%s684] sm:$0x8] %vm677, %v676
    %s686 = scalar_lea.vmem [#allocation0], 604
    %687 = vst.msk [vmem:[%s686] sm:$0x10] %vm677, %v676
    %s688 = scalar_lea.vmem [#allocation0], 731
    %689 = vst.msk [vmem:[%s688] sm:$0x20] %vm677, %v676
    %s690 = scalar_lea.vmem [#allocation0], 858
    %691 = vst.msk [vmem:[%s690] sm:$0x40] %vm677, %v676
    %s692 = scalar_lea.vmem [#allocation0], 985
    %693 = vst.msk [vmem:[%s692] sm:$0x80] %vm677, %v676
    %v694 = vld [vmem:[%s0] sm:$0xff]
    %695 = vrot.lane.b32.xlu0 %v694, 60
    %v696 = vpop.permute.xlu0 %695
    %vm697 = vcmask 31744
    %s698 = scalar_lea.vmem [#allocation0], 33
    %699 = vst.msk [vmem:[%s698] sm:$0x1] %vm697, %v696
    %s700 = scalar_lea.vmem [#allocation0], 160
    %701 = vst.msk [vmem:[%s700] sm:$0x2] %vm697, %v696
    %s702 = scalar_lea.vmem [#allocation0], 287
    %703 = vst.msk [vmem:[%s702] sm:$0x4] %vm697, %v696
    %s704 = scalar_lea.vmem [#allocation0], 414
    %705 = vst.msk [vmem:[%s704] sm:$0x8] %vm697, %v696
    %s706 = scalar_lea.vmem [#allocation0], 541
    %707 = vst.msk [vmem:[%s706] sm:$0x10] %vm697, %v696
    %s708 = scalar_lea.vmem [#allocation0], 668
    %709 = vst.msk [vmem:[%s708] sm:$0x20] %vm697, %v696
    %s710 = scalar_lea.vmem [#allocation0], 795
    %711 = vst.msk [vmem:[%s710] sm:$0x40] %vm697, %v696
    %s712 = scalar_lea.vmem [#allocation0], 922
    %713 = vst.msk [vmem:[%s712] sm:$0x80] %vm697, %v696
    %s714 = scalar_lea.vmem %s0, 8
    %v715 = vld [vmem:[%s714] sm:$0xff]
    %716 = vrot.lane.b32.xlu0 %v715, 60
    %v717 = vpop.permute.xlu0 %716
    %vm718 = vcmask 31744
    %s719 = scalar_lea.vmem [#allocation0], 97
    %720 = vst.msk [vmem:[%s719] sm:$0x1] %vm718, %v717
    %s721 = scalar_lea.vmem [#allocation0], 224
    %722 = vst.msk [vmem:[%s721] sm:$0x2] %vm718, %v717
    %s723 = scalar_lea.vmem [#allocation0], 351
    %724 = vst.msk [vmem:[%s723] sm:$0x4] %vm718, %v717
    %s725 = scalar_lea.vmem [#allocation0], 478
    %726 = vst.msk [vmem:[%s725] sm:$0x8] %vm718, %v717
    %s727 = scalar_lea.vmem [#allocation0], 605
    %728 = vst.msk [vmem:[%s727] sm:$0x10] %vm718, %v717
    %s729 = scalar_lea.vmem [#allocation0], 732
    %730 = vst.msk [vmem:[%s729] sm:$0x20] %vm718, %v717
    %s731 = scalar_lea.vmem [#allocation0], 859
    %732 = vst.msk [vmem:[%s731] sm:$0x40] %vm718, %v717
    %s733 = scalar_lea.vmem [#allocation0], 986
    %734 = vst.msk [vmem:[%s733] sm:$0x80] %vm718, %v717
    %v735 = vld [vmem:[%s0] sm:$0xff]
    %736 = vrot.lane.b32.xlu0 %v735, 56
    %v737 = vpop.permute.xlu0 %736
    %vm738 = vcmask 31744
    %s739 = scalar_lea.vmem [#allocation0], 34
    %740 = vst.msk [vmem:[%s739] sm:$0x1] %vm738, %v737
    %s741 = scalar_lea.vmem [#allocation0], 161
    %742 = vst.msk [vmem:[%s741] sm:$0x2] %vm738, %v737
    %s743 = scalar_lea.vmem [#allocation0], 288
    %744 = vst.msk [vmem:[%s743] sm:$0x4] %vm738, %v737
    %s745 = scalar_lea.vmem [#allocation0], 415
    %746 = vst.msk [vmem:[%s745] sm:$0x8] %vm738, %v737
    %s747 = scalar_lea.vmem [#allocation0], 542
    %748 = vst.msk [vmem:[%s747] sm:$0x10] %vm738, %v737
    %s749 = scalar_lea.vmem [#allocation0], 669
    %750 = vst.msk [vmem:[%s749] sm:$0x20] %vm738, %v737
    %s751 = scalar_lea.vmem [#allocation0], 796
    %752 = vst.msk [vmem:[%s751] sm:$0x40] %vm738, %v737
    %s753 = scalar_lea.vmem [#allocation0], 923
    %754 = vst.msk [vmem:[%s753] sm:$0x80] %vm738, %v737
    %s755 = scalar_lea.vmem %s0, 8
    %v756 = vld [vmem:[%s755] sm:$0xff]
    %757 = vrot.lane.b32.xlu0 %v756, 56
    %v758 = vpop.permute.xlu0 %757
    %vm759 = vcmask 31744
    %s760 = scalar_lea.vmem [#allocation0], 98
    %761 = vst.msk [vmem:[%s760] sm:$0x1] %vm759, %v758
    %s762 = scalar_lea.vmem [#allocation0], 225
    %763 = vst.msk [vmem:[%s762] sm:$0x2] %vm759, %v758
    %s764 = scalar_lea.vmem [#allocation0], 352
    %765 = vst.msk [vmem:[%s764] sm:$0x4] %vm759, %v758
    %s766 = scalar_lea.vmem [#allocation0], 479
    %767 = vst.msk [vmem:[%s766] sm:$0x8] %vm759, %v758
    %s768 = scalar_lea.vmem [#allocation0], 606
    %769 = vst.msk [vmem:[%s768] sm:$0x10] %vm759, %v758
    %s770 = scalar_lea.vmem [#allocation0], 733
    %771 = vst.msk [vmem:[%s770] sm:$0x20] %vm759, %v758
    %s772 = scalar_lea.vmem [#allocation0], 860
    %773 = vst.msk [vmem:[%s772] sm:$0x40] %vm759, %v758
    %s774 = scalar_lea.vmem [#allocation0], 987
    %775 = vst.msk [vmem:[%s774] sm:$0x80] %vm759, %v758
    %v776 = vld [vmem:[%s0] sm:$0xff]
    %777 = vrot.lane.b32.xlu0 %v776, 52
    %v778 = vpop.permute.xlu0 %777
    %vm779 = vcmask 31744
    %s780 = scalar_lea.vmem [#allocation0], 35
    %781 = vst.msk [vmem:[%s780] sm:$0x1] %vm779, %v778
    %s782 = scalar_lea.vmem [#allocation0], 162
    %783 = vst.msk [vmem:[%s782] sm:$0x2] %vm779, %v778
    %s784 = scalar_lea.vmem [#allocation0], 289
    %785 = vst.msk [vmem:[%s784] sm:$0x4] %vm779, %v778
    %s786 = scalar_lea.vmem [#allocation0], 416
    %787 = vst.msk [vmem:[%s786] sm:$0x8] %vm779, %v778
    %s788 = scalar_lea.vmem [#allocation0], 543
    %789 = vst.msk [vmem:[%s788] sm:$0x10] %vm779, %v778
    %s790 = scalar_lea.vmem [#allocation0], 670
    %791 = vst.msk [vmem:[%s790] sm:$0x20] %vm779, %v778
    %s792 = scalar_lea.vmem [#allocation0], 797
    %793 = vst.msk [vmem:[%s792] sm:$0x40] %vm779, %v778
    %s794 = scalar_lea.vmem [#allocation0], 924
    %795 = vst.msk [vmem:[%s794] sm:$0x80] %vm779, %v778
    %s796 = scalar_lea.vmem %s0, 8
    %v797 = vld [vmem:[%s796] sm:$0xff]
    %798 = vrot.lane.b32.xlu0 %v797, 52
    %v799 = vpop.permute.xlu0 %798
    %vm800 = vcmask 31744
    %s801 = scalar_lea.vmem [#allocation0], 99
    %802 = vst.msk [vmem:[%s801] sm:$0x1] %vm800, %v799
    %s803 = scalar_lea.vmem [#allocation0], 226
    %804 = vst.msk [vmem:[%s803] sm:$0x2] %vm800, %v799
    %s805 = scalar_lea.vmem [#allocation0], 353
    %806 = vst.msk [vmem:[%s805] sm:$0x4] %vm800, %v799
    %s807 = scalar_lea.vmem [#allocation0], 480
    %808 = vst.msk [vmem:[%s807] sm:$0x8] %vm800, %v799
    %s809 = scalar_lea.vmem [#allocation0], 607
    %810 = vst.msk [vmem:[%s809] sm:$0x10] %vm800, %v799
    %s811 = scalar_lea.vmem [#allocation0], 734
    %812 = vst.msk [vmem:[%s811] sm:$0x20] %vm800, %v799
    %s813 = scalar_lea.vmem [#allocation0], 861
    %814 = vst.msk [vmem:[%s813] sm:$0x40] %vm800, %v799
    %s815 = scalar_lea.vmem [#allocation0], 988
    %816 = vst.msk [vmem:[%s815] sm:$0x80] %vm800, %v799
    %v817 = vld [vmem:[%s0] sm:$0xff]
    %818 = vrot.lane.b32.xlu0 %v817, 48
    %v819 = vpop.permute.xlu0 %818
    %vm820 = vcmask 31744
    %s821 = scalar_lea.vmem [#allocation0], 40
    %822 = vst.msk [vmem:[%s821] sm:$0x1] %vm820, %v819
    %s823 = scalar_lea.vmem [#allocation0], 167
    %824 = vst.msk [vmem:[%s823] sm:$0x2] %vm820, %v819
    %s825 = scalar_lea.vmem [#allocation0], 294
    %826 = vst.msk [vmem:[%s825] sm:$0x4] %vm820, %v819
    %s827 = scalar_lea.vmem [#allocation0], 421
    %828 = vst.msk [vmem:[%s827] sm:$0x8] %vm820, %v819
    %s829 = scalar_lea.vmem [#allocation0], 548
    %830 = vst.msk [vmem:[%s829] sm:$0x10] %vm820, %v819
    %s831 = scalar_lea.vmem [#allocation0], 675
    %832 = vst.msk [vmem:[%s831] sm:$0x20] %vm820, %v819
    %s833 = scalar_lea.vmem [#allocation0], 802
    %834 = vst.msk [vmem:[%s833] sm:$0x40] %vm820, %v819
    %s835 = scalar_lea.vmem [#allocation0], 929
    %836 = vst.msk [vmem:[%s835] sm:$0x80] %vm820, %v819
    %s837 = scalar_lea.vmem %s0, 8
    %v838 = vld [vmem:[%s837] sm:$0xff]
    %839 = vrot.lane.b32.xlu0 %v838, 48
    %v840 = vpop.permute.xlu0 %839
    %vm841 = vcmask 31744
    %s842 = scalar_lea.vmem [#allocation0], 104
    %843 = vst.msk [vmem:[%s842] sm:$0x1] %vm841, %v840
    %s844 = scalar_lea.vmem [#allocation0], 231
    %845 = vst.msk [vmem:[%s844] sm:$0x2] %vm841, %v840
    %s846 = scalar_lea.vmem [#allocation0], 358
    %847 = vst.msk [vmem:[%s846] sm:$0x4] %vm841, %v840
    %s848 = scalar_lea.vmem [#allocation0], 485
    %849 = vst.msk [vmem:[%s848] sm:$0x8] %vm841, %v840
    %s850 = scalar_lea.vmem [#allocation0], 612
    %851 = vst.msk [vmem:[%s850] sm:$0x10] %vm841, %v840
    %s852 = scalar_lea.vmem [#allocation0], 739
    %853 = vst.msk [vmem:[%s852] sm:$0x20] %vm841, %v840
    %s854 = scalar_lea.vmem [#allocation0], 866
    %855 = vst.msk [vmem:[%s854] sm:$0x40] %vm841, %v840
    %s856 = scalar_lea.vmem [#allocation0], 993
    %857 = vst.msk [vmem:[%s856] sm:$0x80] %vm841, %v840
    %v858 = vld [vmem:[%s0] sm:$0xff]
    %859 = vrot.lane.b32.xlu0 %v858, 44
    %v860 = vpop.permute.xlu0 %859
    %vm861 = vcmask 31744
    %s862 = scalar_lea.vmem [#allocation0], 41
    %863 = vst.msk [vmem:[%s862] sm:$0x1] %vm861, %v860
    %s864 = scalar_lea.vmem [#allocation0], 168
    %865 = vst.msk [vmem:[%s864] sm:$0x2] %vm861, %v860
    %s866 = scalar_lea.vmem [#allocation0], 295
    %867 = vst.msk [vmem:[%s866] sm:$0x4] %vm861, %v860
    %s868 = scalar_lea.vmem [#allocation0], 422
    %869 = vst.msk [vmem:[%s868] sm:$0x8] %vm861, %v860
    %s870 = scalar_lea.vmem [#allocation0], 549
    %871 = vst.msk [vmem:[%s870] sm:$0x10] %vm861, %v860
    %s872 = scalar_lea.vmem [#allocation0], 676
    %873 = vst.msk [vmem:[%s872] sm:$0x20] %vm861, %v860
    %s874 = scalar_lea.vmem [#allocation0], 803
    %875 = vst.msk [vmem:[%s874] sm:$0x40] %vm861, %v860
    %s876 = scalar_lea.vmem [#allocation0], 930
    %877 = vst.msk [vmem:[%s876] sm:$0x80] %vm861, %v860
    %s878 = scalar_lea.vmem %s0, 8
    %v879 = vld [vmem:[%s878] sm:$0xff]
    %880 = vrot.lane.b32.xlu0 %v879, 44
    %v881 = vpop.permute.xlu0 %880
    %vm882 = vcmask 31744
    %s883 = scalar_lea.vmem [#allocation0], 105
    %884 = vst.msk [vmem:[%s883] sm:$0x1] %vm882, %v881
    %s885 = scalar_lea.vmem [#allocation0], 232
    %886 = vst.msk [vmem:[%s885] sm:$0x2] %vm882, %v881
    %s887 = scalar_lea.vmem [#allocation0], 359
    %888 = vst.msk [vmem:[%s887] sm:$0x4] %vm882, %v881
    %s889 = scalar_lea.vmem [#allocation0], 486
    %890 = vst.msk [vmem:[%s889] sm:$0x8] %vm882, %v881
    %s891 = scalar_lea.vmem [#allocation0], 613
    %892 = vst.msk [vmem:[%s891] sm:$0x10] %vm882, %v881
    %s893 = scalar_lea.vmem [#allocation0], 740
    %894 = vst.msk [vmem:[%s893] sm:$0x20] %vm882, %v881
    %s895 = scalar_lea.vmem [#allocation0], 867
    %896 = vst.msk [vmem:[%s895] sm:$0x40] %vm882, %v881
    %s897 = scalar_lea.vmem [#allocation0], 994
    %898 = vst.msk [vmem:[%s897] sm:$0x80] %vm882, %v881
    %v899 = vld [vmem:[%s0] sm:$0xff]
    %900 = vrot.lane.b32.xlu0 %v899, 40
    %v901 = vpop.permute.xlu0 %900
    %vm902 = vcmask 31744
    %s903 = scalar_lea.vmem [#allocation0], 42
    %904 = vst.msk [vmem:[%s903] sm:$0x1] %vm902, %v901
    %s905 = scalar_lea.vmem [#allocation0], 169
    %906 = vst.msk [vmem:[%s905] sm:$0x2] %vm902, %v901
    %s907 = scalar_lea.vmem [#allocation0], 296
    %908 = vst.msk [vmem:[%s907] sm:$0x4] %vm902, %v901
    %s909 = scalar_lea.vmem [#allocation0], 423
    %910 = vst.msk [vmem:[%s909] sm:$0x8] %vm902, %v901
    %s911 = scalar_lea.vmem [#allocation0], 550
    %912 = vst.msk [vmem:[%s911] sm:$0x10] %vm902, %v901
    %s913 = scalar_lea.vmem [#allocation0], 677
    %914 = vst.msk [vmem:[%s913] sm:$0x20] %vm902, %v901
    %s915 = scalar_lea.vmem [#allocation0], 804
    %916 = vst.msk [vmem:[%s915] sm:$0x40] %vm902, %v901
    %s917 = scalar_lea.vmem [#allocation0], 931
    %918 = vst.msk [vmem:[%s917] sm:$0x80] %vm902, %v901
    %s919 = scalar_lea.vmem %s0, 8
    %v920 = vld [vmem:[%s919] sm:$0xff]
    %921 = vrot.lane.b32.xlu0 %v920, 40
    %v922 = vpop.permute.xlu0 %921
    %vm923 = vcmask 31744
    %s924 = scalar_lea.vmem [#allocation0], 106
    %925 = vst.msk [vmem:[%s924] sm:$0x1] %vm923, %v922
    %s926 = scalar_lea.vmem [#allocation0], 233
    %927 = vst.msk [vmem:[%s926] sm:$0x2] %vm923, %v922
    %s928 = scalar_lea.vmem [#allocation0], 360
    %929 = vst.msk [vmem:[%s928] sm:$0x4] %vm923, %v922
    %s930 = scalar_lea.vmem [#allocation0], 487
    %931 = vst.msk [vmem:[%s930] sm:$0x8] %vm923, %v922
    %s932 = scalar_lea.vmem [#allocation0], 614
    %933 = vst.msk [vmem:[%s932] sm:$0x10] %vm923, %v922
    %s934 = scalar_lea.vmem [#allocation0], 741
    %935 = vst.msk [vmem:[%s934] sm:$0x20] %vm923, %v922
    %s936 = scalar_lea.vmem [#allocation0], 868
    %937 = vst.msk [vmem:[%s936] sm:$0x40] %vm923, %v922
    %s938 = scalar_lea.vmem [#allocation0], 995
    %939 = vst.msk [vmem:[%s938] sm:$0x80] %vm923, %v922
    %v940 = vld [vmem:[%s0] sm:$0xff]
    %941 = vrot.lane.b32.xlu0 %v940, 36
    %v942 = vpop.permute.xlu0 %941
    %vm943 = vcmask 31744
    %s944 = scalar_lea.vmem [#allocation0], 43
    %945 = vst.msk [vmem:[%s944] sm:$0x1] %vm943, %v942
    %s946 = scalar_lea.vmem [#allocation0], 170
    %947 = vst.msk [vmem:[%s946] sm:$0x2] %vm943, %v942
    %s948 = scalar_lea.vmem [#allocation0], 297
    %949 = vst.msk [vmem:[%s948] sm:$0x4] %vm943, %v942
    %s950 = scalar_lea.vmem [#allocation0], 424
    %951 = vst.msk [vmem:[%s950] sm:$0x8] %vm943, %v942
    %s952 = scalar_lea.vmem [#allocation0], 551
    %953 = vst.msk [vmem:[%s952] sm:$0x10] %vm943, %v942
    %s954 = scalar_lea.vmem [#allocation0], 678
    %955 = vst.msk [vmem:[%s954] sm:$0x20] %vm943, %v942
    %s956 = scalar_lea.vmem [#allocation0], 805
    %957 = vst.msk [vmem:[%s956] sm:$0x40] %vm943, %v942
    %s958 = scalar_lea.vmem [#allocation0], 932
    %959 = vst.msk [vmem:[%s958] sm:$0x80] %vm943, %v942
    %s960 = scalar_lea.vmem %s0, 8
    %v961 = vld [vmem:[%s960] sm:$0xff]
    %962 = vrot.lane.b32.xlu0 %v961, 36
    %v963 = vpop.permute.xlu0 %962
    %vm964 = vcmask 31744
    %s965 = scalar_lea.vmem [#allocation0], 107
    %966 = vst.msk [vmem:[%s965] sm:$0x1] %vm964, %v963
    %s967 = scalar_lea.vmem [#allocation0], 234
    %968 = vst.msk [vmem:[%s967] sm:$0x2] %vm964, %v963
    %s969 = scalar_lea.vmem [#allocation0], 361
    %970 = vst.msk [vmem:[%s969] sm:$0x4] %vm964, %v963
    %s971 = scalar_lea.vmem [#allocation0], 488
    %972 = vst.msk [vmem:[%s971] sm:$0x8] %vm964, %v963
    %s973 = scalar_lea.vmem [#allocation0], 615
    %974 = vst.msk [vmem:[%s973] sm:$0x10] %vm964, %v963
    %s975 = scalar_lea.vmem [#allocation0], 742
    %976 = vst.msk [vmem:[%s975] sm:$0x20] %vm964, %v963
    %s977 = scalar_lea.vmem [#allocation0], 869
    %978 = vst.msk [vmem:[%s977] sm:$0x40] %vm964, %v963
    %s979 = scalar_lea.vmem [#allocation0], 996
    %980 = vst.msk [vmem:[%s979] sm:$0x80] %vm964, %v963
    %v981 = vld [vmem:[%s0] sm:$0xff]
    %982 = vrot.lane.b32.xlu0 %v981, 32
    %v983 = vpop.permute.xlu0 %982
    %vm984 = vcmask 31744
    %s985 = scalar_lea.vmem [#allocation0], 48
    %986 = vst.msk [vmem:[%s985] sm:$0x1] %vm984, %v983
    %s987 = scalar_lea.vmem [#allocation0], 175
    %988 = vst.msk [vmem:[%s987] sm:$0x2] %vm984, %v983
    %s989 = scalar_lea.vmem [#allocation0], 302
    %990 = vst.msk [vmem:[%s989] sm:$0x4] %vm984, %v983
    %s991 = scalar_lea.vmem [#allocation0], 429
    %992 = vst.msk [vmem:[%s991] sm:$0x8] %vm984, %v983
    %s993 = scalar_lea.vmem [#allocation0], 556
    %994 = vst.msk [vmem:[%s993] sm:$0x10] %vm984, %v983
    %s995 = scalar_lea.vmem [#allocation0], 683
    %996 = vst.msk [vmem:[%s995] sm:$0x20] %vm984, %v983
    %s997 = scalar_lea.vmem [#allocation0], 810
    %998 = vst.msk [vmem:[%s997] sm:$0x40] %vm984, %v983
    %s999 = scalar_lea.vmem [#allocation0], 937
    %1000 = vst.msk [vmem:[%s999] sm:$0x80] %vm984, %v983
    %s1001 = scalar_lea.vmem %s0, 8
    %v1002 = vld [vmem:[%s1001] sm:$0xff]
    %1003 = vrot.lane.b32.xlu0 %v1002, 32
    %v1004 = vpop.permute.xlu0 %1003
    %vm1005 = vcmask 31744
    %s1006 = scalar_lea.vmem [#allocation0], 112
    %1007 = vst.msk [vmem:[%s1006] sm:$0x1] %vm1005, %v1004
    %s1008 = scalar_lea.vmem [#allocation0], 239
    %1009 = vst.msk [vmem:[%s1008] sm:$0x2] %vm1005, %v1004
    %s1010 = scalar_lea.vmem [#allocation0], 366
    %1011 = vst.msk [vmem:[%s1010] sm:$0x4] %vm1005, %v1004
    %s1012 = scalar_lea.vmem [#allocation0], 493
    %1013 = vst.msk [vmem:[%s1012] sm:$0x8] %vm1005, %v1004
    %s1014 = scalar_lea.vmem [#allocation0], 620
    %1015 = vst.msk [vmem:[%s1014] sm:$0x10] %vm1005, %v1004
    %s1016 = scalar_lea.vmem [#allocation0], 747
    %1017 = vst.msk [vmem:[%s1016] sm:$0x20] %vm1005, %v1004
    %s1018 = scalar_lea.vmem [#allocation0], 874
    %1019 = vst.msk [vmem:[%s1018] sm:$0x40] %vm1005, %v1004
    %s1020 = scalar_lea.vmem [#allocation0], 1001
    %1021 = vst.msk [vmem:[%s1020] sm:$0x80] %vm1005, %v1004
    %v1022 = vld [vmem:[%s0] sm:$0xff]
    %1023 = vrot.lane.b32.xlu0 %v1022, 28
    %v1024 = vpop.permute.xlu0 %1023
    %vm1025 = vcmask 31744
    %s1026 = scalar_lea.vmem [#allocation0], 49
    %1027 = vst.msk [vmem:[%s1026] sm:$0x1] %vm1025, %v1024
    %s1028 = scalar_lea.vmem [#allocation0], 176
    %1029 = vst.msk [vmem:[%s1028] sm:$0x2] %vm1025, %v1024
    %s1030 = scalar_lea.vmem [#allocation0], 303
    %1031 = vst.msk [vmem:[%s1030] sm:$0x4] %vm1025, %v1024
    %s1032 = scalar_lea.vmem [#allocation0], 430
    %1033 = vst.msk [vmem:[%s1032] sm:$0x8] %vm1025, %v1024
    %s1034 = scalar_lea.vmem [#allocation0], 557
    %1035 = vst.msk [vmem:[%s1034] sm:$0x10] %vm1025, %v1024
    %s1036 = scalar_lea.vmem [#allocation0], 684
    %1037 = vst.msk [vmem:[%s1036] sm:$0x20] %vm1025, %v1024
    %s1038 = scalar_lea.vmem [#allocation0], 811
    %1039 = vst.msk [vmem:[%s1038] sm:$0x40] %vm1025, %v1024
    %s1040 = scalar_lea.vmem [#allocation0], 938
    %1041 = vst.msk [vmem:[%s1040] sm:$0x80] %vm1025, %v1024
    %s1042 = scalar_lea.vmem %s0, 8
    %v1043 = vld [vmem:[%s1042] sm:$0xff]
    %1044 = vrot.lane.b32.xlu0 %v1043, 28
    %v1045 = vpop.permute.xlu0 %1044
    %vm1046 = vcmask 31744
    %s1047 = scalar_lea.vmem [#allocation0], 113
    %1048 = vst.msk [vmem:[%s1047] sm:$0x1] %vm1046, %v1045
    %s1049 = scalar_lea.vmem [#allocation0], 240
    %1050 = vst.msk [vmem:[%s1049] sm:$0x2] %vm1046, %v1045
    %s1051 = scalar_lea.vmem [#allocation0], 367
    %1052 = vst.msk [vmem:[%s1051] sm:$0x4] %vm1046, %v1045
    %s1053 = scalar_lea.vmem [#allocation0], 494
    %1054 = vst.msk [vmem:[%s1053] sm:$0x8] %vm1046, %v1045
    %s1055 = scalar_lea.vmem [#allocation0], 621
    %1056 = vst.msk [vmem:[%s1055] sm:$0x10] %vm1046, %v1045
    %s1057 = scalar_lea.vmem [#allocation0], 748
    %1058 = vst.msk [vmem:[%s1057] sm:$0x20] %vm1046, %v1045
    %s1059 = scalar_lea.vmem [#allocation0], 875
    %1060 = vst.msk [vmem:[%s1059] sm:$0x40] %vm1046, %v1045
    %s1061 = scalar_lea.vmem [#allocation0], 1002
    %1062 = vst.msk [vmem:[%s1061] sm:$0x80] %vm1046, %v1045
    %v1063 = vld [vmem:[%s0] sm:$0xff]
    %1064 = vrot.lane.b32.xlu0 %v1063, 24
    %v1065 = vpop.permute.xlu0 %1064
    %vm1066 = vcmask 31744
    %s1067 = scalar_lea.vmem [#allocation0], 50
    %1068 = vst.msk [vmem:[%s1067] sm:$0x1] %vm1066, %v1065
    %s1069 = scalar_lea.vmem [#allocation0], 177
    %1070 = vst.msk [vmem:[%s1069] sm:$0x2] %vm1066, %v1065
    %s1071 = scalar_lea.vmem [#allocation0], 304
    %1072 = vst.msk [vmem:[%s1071] sm:$0x4] %vm1066, %v1065
    %s1073 = scalar_lea.vmem [#allocation0], 431
    %1074 = vst.msk [vmem:[%s1073] sm:$0x8] %vm1066, %v1065
    %s1075 = scalar_lea.vmem [#allocation0], 558
    %1076 = vst.msk [vmem:[%s1075] sm:$0x10] %vm1066, %v1065
    %s1077 = scalar_lea.vmem [#allocation0], 685
    %1078 = vst.msk [vmem:[%s1077] sm:$0x20] %vm1066, %v1065
    %s1079 = scalar_lea.vmem [#allocation0], 812
    %1080 = vst.msk [vmem:[%s1079] sm:$0x40] %vm1066, %v1065
    %s1081 = scalar_lea.vmem [#allocation0], 939
    %1082 = vst.msk [vmem:[%s1081] sm:$0x80] %vm1066, %v1065
    %s1083 = scalar_lea.vmem %s0, 8
    %v1084 = vld [vmem:[%s1083] sm:$0xff]
    %1085 = vrot.lane.b32.xlu0 %v1084, 24
    %v1086 = vpop.permute.xlu0 %1085
    %vm1087 = vcmask 31744
    %s1088 = scalar_lea.vmem [#allocation0], 114
    %1089 = vst.msk [vmem:[%s1088] sm:$0x1] %vm1087, %v1086
    %s1090 = scalar_lea.vmem [#allocation0], 241
    %1091 = vst.msk [vmem:[%s1090] sm:$0x2] %vm1087, %v1086
    %s1092 = scalar_lea.vmem [#allocation0], 368
    %1093 = vst.msk [vmem:[%s1092] sm:$0x4] %vm1087, %v1086
    %s1094 = scalar_lea.vmem [#allocation0], 495
    %1095 = vst.msk [vmem:[%s1094] sm:$0x8] %vm1087, %v1086
    %s1096 = scalar_lea.vmem [#allocation0], 622
    %1097 = vst.msk [vmem:[%s1096] sm:$0x10] %vm1087, %v1086
    %s1098 = scalar_lea.vmem [#allocation0], 749
    %1099 = vst.msk [vmem:[%s1098] sm:$0x20] %vm1087, %v1086
    %s1100 = scalar_lea.vmem [#allocation0], 876
    %1101 = vst.msk [vmem:[%s1100] sm:$0x40] %vm1087, %v1086
    %s1102 = scalar_lea.vmem [#allocation0], 1003
    %1103 = vst.msk [vmem:[%s1102] sm:$0x80] %vm1087, %v1086
    %v1104 = vld [vmem:[%s0] sm:$0xff]
    %1105 = vrot.lane.b32.xlu0 %v1104, 20
    %v1106 = vpop.permute.xlu0 %1105
    %vm1107 = vcmask 31744
    %s1108 = scalar_lea.vmem [#allocation0], 51
    %1109 = vst.msk [vmem:[%s1108] sm:$0x1] %vm1107, %v1106
    %s1110 = scalar_lea.vmem [#allocation0], 178
    %1111 = vst.msk [vmem:[%s1110] sm:$0x2] %vm1107, %v1106
    %s1112 = scalar_lea.vmem [#allocation0], 305
    %1113 = vst.msk [vmem:[%s1112] sm:$0x4] %vm1107, %v1106
    %s1114 = scalar_lea.vmem [#allocation0], 432
    %1115 = vst.msk [vmem:[%s1114] sm:$0x8] %vm1107, %v1106
    %s1116 = scalar_lea.vmem [#allocation0], 559
    %1117 = vst.msk [vmem:[%s1116] sm:$0x10] %vm1107, %v1106
    %s1118 = scalar_lea.vmem [#allocation0], 686
    %1119 = vst.msk [vmem:[%s1118] sm:$0x20] %vm1107, %v1106
    %s1120 = scalar_lea.vmem [#allocation0], 813
    %1121 = vst.msk [vmem:[%s1120] sm:$0x40] %vm1107, %v1106
    %s1122 = scalar_lea.vmem [#allocation0], 940
    %1123 = vst.msk [vmem:[%s1122] sm:$0x80] %vm1107, %v1106
    %s1124 = scalar_lea.vmem %s0, 8
    %v1125 = vld [vmem:[%s1124] sm:$0xff]
    %1126 = vrot.lane.b32.xlu0 %v1125, 20
    %v1127 = vpop.permute.xlu0 %1126
    %vm1128 = vcmask 31744
    %s1129 = scalar_lea.vmem [#allocation0], 115
    %1130 = vst.msk [vmem:[%s1129] sm:$0x1] %vm1128, %v1127
    %s1131 = scalar_lea.vmem [#allocation0], 242
    %1132 = vst.msk [vmem:[%s1131] sm:$0x2] %vm1128, %v1127
    %s1133 = scalar_lea.vmem [#allocation0], 369
    %1134 = vst.msk [vmem:[%s1133] sm:$0x4] %vm1128, %v1127
    %s1135 = scalar_lea.vmem [#allocation0], 496
    %1136 = vst.msk [vmem:[%s1135] sm:$0x8] %vm1128, %v1127
    %s1137 = scalar_lea.vmem [#allocation0], 623
    %1138 = vst.msk [vmem:[%s1137] sm:$0x10] %vm1128, %v1127
    %s1139 = scalar_lea.vmem [#allocation0], 750
    %1140 = vst.msk [vmem:[%s1139] sm:$0x20] %vm1128, %v1127
    %s1141 = scalar_lea.vmem [#allocation0], 877
    %1142 = vst.msk [vmem:[%s1141] sm:$0x40] %vm1128, %v1127
    %s1143 = scalar_lea.vmem [#allocation0], 1004
    %1144 = vst.msk [vmem:[%s1143] sm:$0x80] %vm1128, %v1127
    %v1145 = vld [vmem:[%s0] sm:$0xff]
    %1146 = vrot.lane.b32.xlu0 %v1145, 16
    %v1147 = vpop.permute.xlu0 %1146
    %vm1148 = vcmask 31744
    %s1149 = scalar_lea.vmem [#allocation0], 56
    %1150 = vst.msk [vmem:[%s1149] sm:$0x1] %vm1148, %v1147
    %s1151 = scalar_lea.vmem [#allocation0], 183
    %1152 = vst.msk [vmem:[%s1151] sm:$0x2] %vm1148, %v1147
    %s1153 = scalar_lea.vmem [#allocation0], 310
    %1154 = vst.msk [vmem:[%s1153] sm:$0x4] %vm1148, %v1147
    %s1155 = scalar_lea.vmem [#allocation0], 437
    %1156 = vst.msk [vmem:[%s1155] sm:$0x8] %vm1148, %v1147
    %s1157 = scalar_lea.vmem [#allocation0], 564
    %1158 = vst.msk [vmem:[%s1157] sm:$0x10] %vm1148, %v1147
    %s1159 = scalar_lea.vmem [#allocation0], 691
    %1160 = vst.msk [vmem:[%s1159] sm:$0x20] %vm1148, %v1147
    %s1161 = scalar_lea.vmem [#allocation0], 818
    %1162 = vst.msk [vmem:[%s1161] sm:$0x40] %vm1148, %v1147
    %s1163 = scalar_lea.vmem [#allocation0], 945
    %1164 = vst.msk [vmem:[%s1163] sm:$0x80] %vm1148, %v1147
    %s1165 = scalar_lea.vmem %s0, 8
    %v1166 = vld [vmem:[%s1165] sm:$0xff]
    %1167 = vrot.lane.b32.xlu0 %v1166, 16
    %v1168 = vpop.permute.xlu0 %1167
    %vm1169 = vcmask 31744
    %s1170 = scalar_lea.vmem [#allocation0], 120
    %1171 = vst.msk [vmem:[%s1170] sm:$0x1] %vm1169, %v1168
    %s1172 = scalar_lea.vmem [#allocation0], 247
    %1173 = vst.msk [vmem:[%s1172] sm:$0x2] %vm1169, %v1168
    %s1174 = scalar_lea.vmem [#allocation0], 374
    %1175 = vst.msk [vmem:[%s1174] sm:$0x4] %vm1169, %v1168
    %s1176 = scalar_lea.vmem [#allocation0], 501
    %1177 = vst.msk [vmem:[%s1176] sm:$0x8] %vm1169, %v1168
    %s1178 = scalar_lea.vmem [#allocation0], 628
    %1179 = vst.msk [vmem:[%s1178] sm:$0x10] %vm1169, %v1168
    %s1180 = scalar_lea.vmem [#allocation0], 755
    %1181 = vst.msk [vmem:[%s1180] sm:$0x20] %vm1169, %v1168
    %s1182 = scalar_lea.vmem [#allocation0], 882
    %1183 = vst.msk [vmem:[%s1182] sm:$0x40] %vm1169, %v1168
    %s1184 = scalar_lea.vmem [#allocation0], 1009
    %1185 = vst.msk [vmem:[%s1184] sm:$0x80] %vm1169, %v1168
    %v1186 = vld [vmem:[%s0] sm:$0xff]
    %1187 = vrot.lane.b32.xlu0 %v1186, 12
    %v1188 = vpop.permute.xlu0 %1187
    %vm1189 = vcmask 31744
    %s1190 = scalar_lea.vmem [#allocation0], 57
    %1191 = vst.msk [vmem:[%s1190] sm:$0x1] %vm1189, %v1188
    %s1192 = scalar_lea.vmem [#allocation0], 184
    %1193 = vst.msk [vmem:[%s1192] sm:$0x2] %vm1189, %v1188
    %s1194 = scalar_lea.vmem [#allocation0], 311
    %1195 = vst.msk [vmem:[%s1194] sm:$0x4] %vm1189, %v1188
    %s1196 = scalar_lea.vmem [#allocation0], 438
    %1197 = vst.msk [vmem:[%s1196] sm:$0x8] %vm1189, %v1188
    %s1198 = scalar_lea.vmem [#allocation0], 565
    %1199 = vst.msk [vmem:[%s1198] sm:$0x10] %vm1189, %v1188
    %s1200 = scalar_lea.vmem [#allocation0], 692
    %1201 = vst.msk [vmem:[%s1200] sm:$0x20] %vm1189, %v1188
    %s1202 = scalar_lea.vmem [#allocation0], 819
    %1203 = vst.msk [vmem:[%s1202] sm:$0x40] %vm1189, %v1188
    %s1204 = scalar_lea.vmem [#allocation0], 946
    %1205 = vst.msk [vmem:[%s1204] sm:$0x80] %vm1189, %v1188
    %s1206 = scalar_lea.vmem %s0, 8
    %v1207 = vld [vmem:[%s1206] sm:$0xff]
    %1208 = vrot.lane.b32.xlu0 %v1207, 12
    %v1209 = vpop.permute.xlu0 %1208
    %vm1210 = vcmask 31744
    %s1211 = scalar_lea.vmem [#allocation0], 121
    %1212 = vst.msk [vmem:[%s1211] sm:$0x1] %vm1210, %v1209
    %s1213 = scalar_lea.vmem [#allocation0], 248
    %1214 = vst.msk [vmem:[%s1213] sm:$0x2] %vm1210, %v1209
    %s1215 = scalar_lea.vmem [#allocation0], 375
    %1216 = vst.msk [vmem:[%s1215] sm:$0x4] %vm1210, %v1209
    %s1217 = scalar_lea.vmem [#allocation0], 502
    %1218 = vst.msk [vmem:[%s1217] sm:$0x8] %vm1210, %v1209
    %s1219 = scalar_lea.vmem [#allocation0], 629
    %1220 = vst.msk [vmem:[%s1219] sm:$0x10] %vm1210, %v1209
    %s1221 = scalar_lea.vmem [#allocation0], 756
    %1222 = vst.msk [vmem:[%s1221] sm:$0x20] %vm1210, %v1209
    %s1223 = scalar_lea.vmem [#allocation0], 883
    %1224 = vst.msk [vmem:[%s1223] sm:$0x40] %vm1210, %v1209
    %s1225 = scalar_lea.vmem [#allocation0], 1010
    %1226 = vst.msk [vmem:[%s1225] sm:$0x80] %vm1210, %v1209
    %v1227 = vld [vmem:[%s0] sm:$0xff]
    %1228 = vrot.lane.b32.xlu0 %v1227, 8
    %v1229 = vpop.permute.xlu0 %1228
    %vm1230 = vcmask 31744
    %s1231 = scalar_lea.vmem [#allocation0], 58
    %1232 = vst.msk [vmem:[%s1231] sm:$0x1] %vm1230, %v1229
    %s1233 = scalar_lea.vmem [#allocation0], 185
    %1234 = vst.msk [vmem:[%s1233] sm:$0x2] %vm1230, %v1229
    %s1235 = scalar_lea.vmem [#allocation0], 312
    %1236 = vst.msk [vmem:[%s1235] sm:$0x4] %vm1230, %v1229
    %s1237 = scalar_lea.vmem [#allocation0], 439
    %1238 = vst.msk [vmem:[%s1237] sm:$0x8] %vm1230, %v1229
    %s1239 = scalar_lea.vmem [#allocation0], 566
    %1240 = vst.msk [vmem:[%s1239] sm:$0x10] %vm1230, %v1229
    %s1241 = scalar_lea.vmem [#allocation0], 693
    %1242 = vst.msk [vmem:[%s1241] sm:$0x20] %vm1230, %v1229
    %s1243 = scalar_lea.vmem [#allocation0], 820
    %1244 = vst.msk [vmem:[%s1243] sm:$0x40] %vm1230, %v1229
    %s1245 = scalar_lea.vmem [#allocation0], 947
    %1246 = vst.msk [vmem:[%s1245] sm:$0x80] %vm1230, %v1229
    %s1247 = scalar_lea.vmem %s0, 8
    %v1248 = vld [vmem:[%s1247] sm:$0xff]
    %1249 = vrot.lane.b32.xlu0 %v1248, 8
    %v1250 = vpop.permute.xlu0 %1249
    %vm1251 = vcmask 31744
    %s1252 = scalar_lea.vmem [#allocation0], 122
    %1253 = vst.msk [vmem:[%s1252] sm:$0x1] %vm1251, %v1250
    %s1254 = scalar_lea.vmem [#allocation0], 249
    %1255 = vst.msk [vmem:[%s1254] sm:$0x2] %vm1251, %v1250
    %s1256 = scalar_lea.vmem [#allocation0], 376
    %1257 = vst.msk [vmem:[%s1256] sm:$0x4] %vm1251, %v1250
    %s1258 = scalar_lea.vmem [#allocation0], 503
    %1259 = vst.msk [vmem:[%s1258] sm:$0x8] %vm1251, %v1250
    %s1260 = scalar_lea.vmem [#allocation0], 630
    %1261 = vst.msk [vmem:[%s1260] sm:$0x10] %vm1251, %v1250
    %s1262 = scalar_lea.vmem [#allocation0], 757
    %1263 = vst.msk [vmem:[%s1262] sm:$0x20] %vm1251, %v1250
    %s1264 = scalar_lea.vmem [#allocation0], 884
    %1265 = vst.msk [vmem:[%s1264] sm:$0x40] %vm1251, %v1250
    %s1266 = scalar_lea.vmem [#allocation0], 1011
    %1267 = vst.msk [vmem:[%s1266] sm:$0x80] %vm1251, %v1250
    %v1268 = vld [vmem:[%s0] sm:$0xff]
    %1269 = vrot.lane.b32.xlu0 %v1268, 4
    %v1270 = vpop.permute.xlu0 %1269
    %vm1271 = vcmask 31744
    %s1272 = scalar_lea.vmem [#allocation0], 59
    %1273 = vst.msk [vmem:[%s1272] sm:$0x1] %vm1271, %v1270
    %s1274 = scalar_lea.vmem [#allocation0], 186
    %1275 = vst.msk [vmem:[%s1274] sm:$0x2] %vm1271, %v1270
    %s1276 = scalar_lea.vmem [#allocation0], 313
    %1277 = vst.msk [vmem:[%s1276] sm:$0x4] %vm1271, %v1270
    %s1278 = scalar_lea.vmem [#allocation0], 440
    %1279 = vst.msk [vmem:[%s1278] sm:$0x8] %vm1271, %v1270
    %s1280 = scalar_lea.vmem [#allocation0], 567
    %1281 = vst.msk [vmem:[%s1280] sm:$0x10] %vm1271, %v1270
    %s1282 = scalar_lea.vmem [#allocation0], 694
    %1283 = vst.msk [vmem:[%s1282] sm:$0x20] %vm1271, %v1270
    %s1284 = scalar_lea.vmem [#allocation0], 821
    %1285 = vst.msk [vmem:[%s1284] sm:$0x40] %vm1271, %v1270
    %s1286 = scalar_lea.vmem [#allocation0], 948
    %1287 = vst.msk [vmem:[%s1286] sm:$0x80] %vm1271, %v1270
    %s1288 = scalar_lea.vmem %s0, 8
    %v1289 = vld [vmem:[%s1288] sm:$0xff]
    %1290 = vrot.lane.b32.xlu0 %v1289, 4
    %v1291 = vpop.permute.xlu0 %1290
    %vm1292 = vcmask 31744
    %s1293 = scalar_lea.vmem [#allocation0], 123
    %1294 = vst.msk [vmem:[%s1293] sm:$0x1] %vm1292, %v1291
    %s1295 = scalar_lea.vmem [#allocation0], 250
    %1296 = vst.msk [vmem:[%s1295] sm:$0x2] %vm1292, %v1291
    %s1297 = scalar_lea.vmem [#allocation0], 377
    %1298 = vst.msk [vmem:[%s1297] sm:$0x4] %vm1292, %v1291
    %s1299 = scalar_lea.vmem [#allocation0], 504
    %1300 = vst.msk [vmem:[%s1299] sm:$0x8] %vm1292, %v1291
    %s1301 = scalar_lea.vmem [#allocation0], 631
    %1302 = vst.msk [vmem:[%s1301] sm:$0x10] %vm1292, %v1291
    %s1303 = scalar_lea.vmem [#allocation0], 758
    %1304 = vst.msk [vmem:[%s1303] sm:$0x20] %vm1292, %v1291
    %s1305 = scalar_lea.vmem [#allocation0], 885
    %1306 = vst.msk [vmem:[%s1305] sm:$0x40] %vm1292, %v1291
    %s1307 = scalar_lea.vmem [#allocation0], 1012
    %1308 = vst.msk [vmem:[%s1307] sm:$0x80] %vm1292, %v1291
    %s1310 = ssub.s32 16, 1
    %v1311 = vld [vmem:[#allocation0] sm:%s1310]
    %s1313 = ssub.s32 16, 1
    %1314 = vst [vmem:[%s1] sm:%s1313] %v1311
    %s1315 = scalar_lea.vmem [#allocation0], 8
    %v1316 = vld [vmem:[%s1315] sm:%s1310]
    %s1318 = ssub.s32 16, 1
    %s1319 = scalar_lea.vmem %s1, 4
    %1320 = vst [vmem:[%s1319] sm:%s1318] %v1316
    %s1321 = scalar_lea.vmem [#allocation0], 16
    %v1322 = vld [vmem:[%s1321] sm:%s1310]
    %s1324 = ssub.s32 16, 1
    %s1325 = scalar_lea.vmem %s1, 8
    %1326 = vst [vmem:[%s1325] sm:%s1324] %v1322
    %s1327 = scalar_lea.vmem [#allocation0], 24
    %v1328 = vld [vmem:[%s1327] sm:%s1310]
    %s1330 = ssub.s32 16, 1
    %s1331 = scalar_lea.vmem %s1, 12
    %1332 = vst [vmem:[%s1331] sm:%s1330] %v1328
    %s1333 = scalar_lea.vmem [#allocation0], 32
    %v1334 = vld [vmem:[%s1333] sm:%s1310]
    %s1336 = ssub.s32 16, 1
    %s1337 = scalar_lea.vmem %s1, 16
    %1338 = vst [vmem:[%s1337] sm:%s1336] %v1334
    %s1339 = scalar_lea.vmem [#allocation0], 40
    %v1340 = vld [vmem:[%s1339] sm:%s1310]
    %s1342 = ssub.s32 16, 1
    %s1343 = scalar_lea.vmem %s1, 20
    %1344 = vst [vmem:[%s1343] sm:%s1342] %v1340
    %s1345 = scalar_lea.vmem [#allocation0], 48
    %v1346 = vld [vmem:[%s1345] sm:%s1310]
    %s1348 = ssub.s32 16, 1
    %s1349 = scalar_lea.vmem %s1, 24
    %1350 = vst [vmem:[%s1349] sm:%s1348] %v1346
    %s1351 = scalar_lea.vmem [#allocation0], 56
    %v1352 = vld [vmem:[%s1351] sm:%s1310]
    %s1354 = ssub.s32 16, 1
    %s1355 = scalar_lea.vmem %s1, 28
    %1356 = vst [vmem:[%s1355] sm:%s1354] %v1352
    %s1357 = scalar_lea.vmem [#allocation0], 64
    %v1358 = vld [vmem:[%s1357] sm:%s1310]
    %s1360 = ssub.s32 16, 1
    %s1361 = scalar_lea.vmem %s1, 32
    %1362 = vst [vmem:[%s1361] sm:%s1360] %v1358
    %s1363 = scalar_lea.vmem [#allocation0], 72
    %v1364 = vld [vmem:[%s1363] sm:%s1310]
    %s1366 = ssub.s32 16, 1
    %s1367 = scalar_lea.vmem %s1, 36
    %1368 = vst [vmem:[%s1367] sm:%s1366] %v1364
    %s1369 = scalar_lea.vmem [#allocation0], 80
    %v1370 = vld [vmem:[%s1369] sm:%s1310]
    %s1372 = ssub.s32 16, 1
    %s1373 = scalar_lea.vmem %s1, 40
    %1374 = vst [vmem:[%s1373] sm:%s1372] %v1370
    %s1375 = scalar_lea.vmem [#allocation0], 88
    %v1376 = vld [vmem:[%s1375] sm:%s1310]
    %s1378 = ssub.s32 16, 1
    %s1379 = scalar_lea.vmem %s1, 44
    %1380 = vst [vmem:[%s1379] sm:%s1378] %v1376
    %s1381 = scalar_lea.vmem [#allocation0], 96
    %v1382 = vld [vmem:[%s1381] sm:%s1310]
    %s1384 = ssub.s32 16, 1
    %s1385 = scalar_lea.vmem %s1, 48
    %1386 = vst [vmem:[%s1385] sm:%s1384] %v1382
    %s1387 = scalar_lea.vmem [#allocation0], 104
    %v1388 = vld [vmem:[%s1387] sm:%s1310]
    %s1390 = ssub.s32 16, 1
    %s1391 = scalar_lea.vmem %s1, 52
    %1392 = vst [vmem:[%s1391] sm:%s1390] %v1388
    %s1393 = scalar_lea.vmem [#allocation0], 112
    %v1394 = vld [vmem:[%s1393] sm:%s1310]
    %s1396 = ssub.s32 16, 1
    %s1397 = scalar_lea.vmem %s1, 56
    %1398 = vst [vmem:[%s1397] sm:%s1396] %v1394
    %s1399 = scalar_lea.vmem [#allocation0], 120
    %v1400 = vld [vmem:[%s1399] sm:%s1310]
    %s1402 = ssub.s32 16, 1
    %s1403 = scalar_lea.vmem %s1, 60
    %1404 = vst [vmem:[%s1403] sm:%s1402] %v1400
    %s1405 = scalar_lea.vmem [#allocation0], 128
    %v1406 = vld [vmem:[%s1405] sm:%s1310]
    %s1408 = ssub.s32 16, 1
    %s1409 = scalar_lea.vmem %s1, 64
    %1410 = vst [vmem:[%s1409] sm:%s1408] %v1406
    %s1411 = scalar_lea.vmem [#allocation0], 136
    %v1412 = vld [vmem:[%s1411] sm:%s1310]
    %s1414 = ssub.s32 16, 1
    %s1415 = scalar_lea.vmem %s1, 68
    %1416 = vst [vmem:[%s1415] sm:%s1414] %v1412
    %s1417 = scalar_lea.vmem [#allocation0], 144
    %v1418 = vld [vmem:[%s1417] sm:%s1310]
    %s1420 = ssub.s32 16, 1
    %s1421 = scalar_lea.vmem %s1, 72
    %1422 = vst [vmem:[%s1421] sm:%s1420] %v1418
    %s1423 = scalar_lea.vmem [#allocation0], 152
    %v1424 = vld [vmem:[%s1423] sm:%s1310]
    %s1426 = ssub.s32 16, 1
    %s1427 = scalar_lea.vmem %s1, 76
    %1428 = vst [vmem:[%s1427] sm:%s1426] %v1424
    %s1429 = scalar_lea.vmem [#allocation0], 160
    %v1430 = vld [vmem:[%s1429] sm:%s1310]
    %s1432 = ssub.s32 16, 1
    %s1433 = scalar_lea.vmem %s1, 80
    %1434 = vst [vmem:[%s1433] sm:%s1432] %v1430
    %s1435 = scalar_lea.vmem [#allocation0], 168
    %v1436 = vld [vmem:[%s1435] sm:%s1310]
    %s1438 = ssub.s32 16, 1
    %s1439 = scalar_lea.vmem %s1, 84
    %1440 = vst [vmem:[%s1439] sm:%s1438] %v1436
    %s1441 = scalar_lea.vmem [#allocation0], 176
    %v1442 = vld [vmem:[%s1441] sm:%s1310]
    %s1444 = ssub.s32 16, 1
    %s1445 = scalar_lea.vmem %s1, 88
    %1446 = vst [vmem:[%s1445] sm:%s1444] %v1442
    %s1447 = scalar_lea.vmem [#allocation0], 184
    %v1448 = vld [vmem:[%s1447] sm:%s1310]
    %s1450 = ssub.s32 16, 1
    %s1451 = scalar_lea.vmem %s1, 92
    %1452 = vst [vmem:[%s1451] sm:%s1450] %v1448
    %s1453 = scalar_lea.vmem [#allocation0], 192
    %v1454 = vld [vmem:[%s1453] sm:%s1310]
    %s1456 = ssub.s32 16, 1
    %s1457 = scalar_lea.vmem %s1, 96
    %1458 = vst [vmem:[%s1457] sm:%s1456] %v1454
    %s1459 = scalar_lea.vmem [#allocation0], 200
    %v1460 = vld [vmem:[%s1459] sm:%s1310]
    %s1462 = ssub.s32 16, 1
    %s1463 = scalar_lea.vmem %s1, 100
    %1464 = vst [vmem:[%s1463] sm:%s1462] %v1460
    %s1465 = scalar_lea.vmem [#allocation0], 208
    %v1466 = vld [vmem:[%s1465] sm:%s1310]
    %s1468 = ssub.s32 16, 1
    %s1469 = scalar_lea.vmem %s1, 104
    %1470 = vst [vmem:[%s1469] sm:%s1468] %v1466
    %s1471 = scalar_lea.vmem [#allocation0], 216
    %v1472 = vld [vmem:[%s1471] sm:%s1310]
    %s1474 = ssub.s32 16, 1
    %s1475 = scalar_lea.vmem %s1, 108
    %1476 = vst [vmem:[%s1475] sm:%s1474] %v1472
    %s1477 = scalar_lea.vmem [#allocation0], 224
    %v1478 = vld [vmem:[%s1477] sm:%s1310]
    %s1480 = ssub.s32 16, 1
    %s1481 = scalar_lea.vmem %s1, 112
    %1482 = vst [vmem:[%s1481] sm:%s1480] %v1478
    %s1483 = scalar_lea.vmem [#allocation0], 232
    %v1484 = vld [vmem:[%s1483] sm:%s1310]
    %s1486 = ssub.s32 16, 1
    %s1487 = scalar_lea.vmem %s1, 116
    %1488 = vst [vmem:[%s1487] sm:%s1486] %v1484
    %s1489 = scalar_lea.vmem [#allocation0], 240
    %v1490 = vld [vmem:[%s1489] sm:%s1310]
    %s1492 = ssub.s32 16, 1
    %s1493 = scalar_lea.vmem %s1, 120
    %1494 = vst [vmem:[%s1493] sm:%s1492] %v1490
    %s1495 = scalar_lea.vmem [#allocation0], 248
    %v1496 = vld [vmem:[%s1495] sm:%s1310]
    %s1498 = ssub.s32 16, 1
    %s1499 = scalar_lea.vmem %s1, 124
    %1500 = vst [vmem:[%s1499] sm:%s1498] %v1496
    %s1501 = scalar_lea.vmem [#allocation0], 256
    %v1502 = vld [vmem:[%s1501] sm:%s1310]
    %s1504 = ssub.s32 16, 1
    %s1505 = scalar_lea.vmem %s1, 128
    %1506 = vst [vmem:[%s1505] sm:%s1504] %v1502
    %s1507 = scalar_lea.vmem [#allocation0], 264
    %v1508 = vld [vmem:[%s1507] sm:%s1310]
    %s1510 = ssub.s32 16, 1
    %s1511 = scalar_lea.vmem %s1, 132
    %1512 = vst [vmem:[%s1511] sm:%s1510] %v1508
    %s1513 = scalar_lea.vmem [#allocation0], 272
    %v1514 = vld [vmem:[%s1513] sm:%s1310]
    %s1516 = ssub.s32 16, 1
    %s1517 = scalar_lea.vmem %s1, 136
    %1518 = vst [vmem:[%s1517] sm:%s1516] %v1514
    %s1519 = scalar_lea.vmem [#allocation0], 280
    %v1520 = vld [vmem:[%s1519] sm:%s1310]
    %s1522 = ssub.s32 16, 1
    %s1523 = scalar_lea.vmem %s1, 140
    %1524 = vst [vmem:[%s1523] sm:%s1522] %v1520
    %s1525 = scalar_lea.vmem [#allocation0], 288
    %v1526 = vld [vmem:[%s1525] sm:%s1310]
    %s1528 = ssub.s32 16, 1
    %s1529 = scalar_lea.vmem %s1, 144
    %1530 = vst [vmem:[%s1529] sm:%s1528] %v1526
    %s1531 = scalar_lea.vmem [#allocation0], 296
    %v1532 = vld [vmem:[%s1531] sm:%s1310]
    %s1534 = ssub.s32 16, 1
    %s1535 = scalar_lea.vmem %s1, 148
    %1536 = vst [vmem:[%s1535] sm:%s1534] %v1532
    %s1537 = scalar_lea.vmem [#allocation0], 304
    %v1538 = vld [vmem:[%s1537] sm:%s1310]
    %s1540 = ssub.s32 16, 1
    %s1541 = scalar_lea.vmem %s1, 152
    %1542 = vst [vmem:[%s1541] sm:%s1540] %v1538
    %s1543 = scalar_lea.vmem [#allocation0], 312
    %v1544 = vld [vmem:[%s1543] sm:%s1310]
    %s1546 = ssub.s32 16, 1
    %s1547 = scalar_lea.vmem %s1, 156
    %1548 = vst [vmem:[%s1547] sm:%s1546] %v1544
    %s1549 = scalar_lea.vmem [#allocation0], 320
    %v1550 = vld [vmem:[%s1549] sm:%s1310]
    %s1552 = ssub.s32 16, 1
    %s1553 = scalar_lea.vmem %s1, 160
    %1554 = vst [vmem:[%s1553] sm:%s1552] %v1550
    %s1555 = scalar_lea.vmem [#allocation0], 328
    %v1556 = vld [vmem:[%s1555] sm:%s1310]
    %s1558 = ssub.s32 16, 1
    %s1559 = scalar_lea.vmem %s1, 164
    %1560 = vst [vmem:[%s1559] sm:%s1558] %v1556
    %s1561 = scalar_lea.vmem [#allocation0], 336
    %v1562 = vld [vmem:[%s1561] sm:%s1310]
    %s1564 = ssub.s32 16, 1
    %s1565 = scalar_lea.vmem %s1, 168
    %1566 = vst [vmem:[%s1565] sm:%s1564] %v1562
    %s1567 = scalar_lea.vmem [#allocation0], 344
    %v1568 = vld [vmem:[%s1567] sm:%s1310]
    %s1570 = ssub.s32 16, 1
    %s1571 = scalar_lea.vmem %s1, 172
    %1572 = vst [vmem:[%s1571] sm:%s1570] %v1568
    %s1573 = scalar_lea.vmem [#allocation0], 352
    %v1574 = vld [vmem:[%s1573] sm:%s1310]
    %s1576 = ssub.s32 16, 1
    %s1577 = scalar_lea.vmem %s1, 176
    %1578 = vst [vmem:[%s1577] sm:%s1576] %v1574
    %s1579 = scalar_lea.vmem [#allocation0], 360
    %v1580 = vld [vmem:[%s1579] sm:%s1310]
    %s1582 = ssub.s32 16, 1
    %s1583 = scalar_lea.vmem %s1, 180
    %1584 = vst [vmem:[%s1583] sm:%s1582] %v1580
    %s1585 = scalar_lea.vmem [#allocation0], 368
    %v1586 = vld [vmem:[%s1585] sm:%s1310]
    %s1588 = ssub.s32 16, 1
    %s1589 = scalar_lea.vmem %s1, 184
    %1590 = vst [vmem:[%s1589] sm:%s1588] %v1586
    %s1591 = scalar_lea.vmem [#allocation0], 376
    %v1592 = vld [vmem:[%s1591] sm:%s1310]
    %s1594 = ssub.s32 16, 1
    %s1595 = scalar_lea.vmem %s1, 188
    %1596 = vst [vmem:[%s1595] sm:%s1594] %v1592
    %s1597 = scalar_lea.vmem [#allocation0], 384
    %v1598 = vld [vmem:[%s1597] sm:%s1310]
    %s1600 = ssub.s32 16, 1
    %s1601 = scalar_lea.vmem %s1, 192
    %1602 = vst [vmem:[%s1601] sm:%s1600] %v1598
    %s1603 = scalar_lea.vmem [#allocation0], 392
    %v1604 = vld [vmem:[%s1603] sm:%s1310]
    %s1606 = ssub.s32 16, 1
    %s1607 = scalar_lea.vmem %s1, 196
    %1608 = vst [vmem:[%s1607] sm:%s1606] %v1604
    %s1609 = scalar_lea.vmem [#allocation0], 400
    %v1610 = vld [vmem:[%s1609] sm:%s1310]
    %s1612 = ssub.s32 16, 1
    %s1613 = scalar_lea.vmem %s1, 200
    %1614 = vst [vmem:[%s1613] sm:%s1612] %v1610
    %s1615 = scalar_lea.vmem [#allocation0], 408
    %v1616 = vld [vmem:[%s1615] sm:%s1310]
    %s1618 = ssub.s32 16, 1
    %s1619 = scalar_lea.vmem %s1, 204
    %1620 = vst [vmem:[%s1619] sm:%s1618] %v1616
    %s1621 = scalar_lea.vmem [#allocation0], 416
    %v1622 = vld [vmem:[%s1621] sm:%s1310]
    %s1624 = ssub.s32 16, 1
    %s1625 = scalar_lea.vmem %s1, 208
    %1626 = vst [vmem:[%s1625] sm:%s1624] %v1622
    %s1627 = scalar_lea.vmem [#allocation0], 424
    %v1628 = vld [vmem:[%s1627] sm:%s1310]
    %s1630 = ssub.s32 16, 1
    %s1631 = scalar_lea.vmem %s1, 212
    %1632 = vst [vmem:[%s1631] sm:%s1630] %v1628
    %s1633 = scalar_lea.vmem [#allocation0], 432
    %v1634 = vld [vmem:[%s1633] sm:%s1310]
    %s1636 = ssub.s32 16, 1
    %s1637 = scalar_lea.vmem %s1, 216
    %1638 = vst [vmem:[%s1637] sm:%s1636] %v1634
    %s1639 = scalar_lea.vmem [#allocation0], 440
    %v1640 = vld [vmem:[%s1639] sm:%s1310]
    %s1642 = ssub.s32 16, 1
    %s1643 = scalar_lea.vmem %s1, 220
    %1644 = vst [vmem:[%s1643] sm:%s1642] %v1640
    %s1645 = scalar_lea.vmem [#allocation0], 448
    %v1646 = vld [vmem:[%s1645] sm:%s1310]
    %s1648 = ssub.s32 16, 1
    %s1649 = scalar_lea.vmem %s1, 224
    %1650 = vst [vmem:[%s1649] sm:%s1648] %v1646
    %s1651 = scalar_lea.vmem [#allocation0], 456
    %v1652 = vld [vmem:[%s1651] sm:%s1310]
    %s1654 = ssub.s32 16, 1
    %s1655 = scalar_lea.vmem %s1, 228
    %1656 = vst [vmem:[%s1655] sm:%s1654] %v1652
    %s1657 = scalar_lea.vmem [#allocation0], 464
    %v1658 = vld [vmem:[%s1657] sm:%s1310]
    %s1660 = ssub.s32 16, 1
    %s1661 = scalar_lea.vmem %s1, 232
    %1662 = vst [vmem:[%s1661] sm:%s1660] %v1658
    %s1663 = scalar_lea.vmem [#allocation0], 472
    %v1664 = vld [vmem:[%s1663] sm:%s1310]
    %s1666 = ssub.s32 16, 1
    %s1667 = scalar_lea.vmem %s1, 236
    %1668 = vst [vmem:[%s1667] sm:%s1666] %v1664
    %s1669 = scalar_lea.vmem [#allocation0], 480
    %v1670 = vld [vmem:[%s1669] sm:%s1310]
    %s1672 = ssub.s32 16, 1
    %s1673 = scalar_lea.vmem %s1, 240
    %1674 = vst [vmem:[%s1673] sm:%s1672] %v1670
    %s1675 = scalar_lea.vmem [#allocation0], 488
    %v1676 = vld [vmem:[%s1675] sm:%s1310]
    %s1678 = ssub.s32 16, 1
    %s1679 = scalar_lea.vmem %s1, 244
    %1680 = vst [vmem:[%s1679] sm:%s1678] %v1676
    %s1681 = scalar_lea.vmem [#allocation0], 496
    %v1682 = vld [vmem:[%s1681] sm:%s1310]
    %s1684 = ssub.s32 16, 1
    %s1685 = scalar_lea.vmem %s1, 248
    %1686 = vst [vmem:[%s1685] sm:%s1684] %v1682
    %s1687 = scalar_lea.vmem [#allocation0], 504
    %v1688 = vld [vmem:[%s1687] sm:%s1310]
    %s1690 = ssub.s32 16, 1
    %s1691 = scalar_lea.vmem %s1, 252
    %1692 = vst [vmem:[%s1691] sm:%s1690] %v1688
    %s1693 = scalar_lea.vmem [#allocation0], 512
    %v1694 = vld [vmem:[%s1693] sm:%s1310]
    %s1696 = ssub.s32 16, 1
    %s1697 = scalar_lea.vmem %s1, 256
    %1698 = vst [vmem:[%s1697] sm:%s1696] %v1694
    %s1699 = scalar_lea.vmem [#allocation0], 520
    %v1700 = vld [vmem:[%s1699] sm:%s1310]
    %s1702 = ssub.s32 16, 1
    %s1703 = scalar_lea.vmem %s1, 260
    %1704 = vst [vmem:[%s1703] sm:%s1702] %v1700
    %s1705 = scalar_lea.vmem [#allocation0], 528
    %v1706 = vld [vmem:[%s1705] sm:%s1310]
    %s1708 = ssub.s32 16, 1
    %s1709 = scalar_lea.vmem %s1, 264
    %1710 = vst [vmem:[%s1709] sm:%s1708] %v1706
    %s1711 = scalar_lea.vmem [#allocation0], 536
    %v1712 = vld [vmem:[%s1711] sm:%s1310]
    %s1714 = ssub.s32 16, 1
    %s1715 = scalar_lea.vmem %s1, 268
    %1716 = vst [vmem:[%s1715] sm:%s1714] %v1712
    %s1717 = scalar_lea.vmem [#allocation0], 544
    %v1718 = vld [vmem:[%s1717] sm:%s1310]
    %s1720 = ssub.s32 16, 1
    %s1721 = scalar_lea.vmem %s1, 272
    %1722 = vst [vmem:[%s1721] sm:%s1720] %v1718
    %s1723 = scalar_lea.vmem [#allocation0], 552
    %v1724 = vld [vmem:[%s1723] sm:%s1310]
    %s1726 = ssub.s32 16, 1
    %s1727 = scalar_lea.vmem %s1, 276
    %1728 = vst [vmem:[%s1727] sm:%s1726] %v1724
    %s1729 = scalar_lea.vmem [#allocation0], 560
    %v1730 = vld [vmem:[%s1729] sm:%s1310]
    %s1732 = ssub.s32 16, 1
    %s1733 = scalar_lea.vmem %s1, 280
    %1734 = vst [vmem:[%s1733] sm:%s1732] %v1730
    %s1735 = scalar_lea.vmem [#allocation0], 568
    %v1736 = vld [vmem:[%s1735] sm:%s1310]
    %s1738 = ssub.s32 16, 1
    %s1739 = scalar_lea.vmem %s1, 284
    %1740 = vst [vmem:[%s1739] sm:%s1738] %v1736
    %s1741 = scalar_lea.vmem [#allocation0], 576
    %v1742 = vld [vmem:[%s1741] sm:%s1310]
    %s1744 = ssub.s32 16, 1
    %s1745 = scalar_lea.vmem %s1, 288
    %1746 = vst [vmem:[%s1745] sm:%s1744] %v1742
    %s1747 = scalar_lea.vmem [#allocation0], 584
    %v1748 = vld [vmem:[%s1747] sm:%s1310]
    %s1750 = ssub.s32 16, 1
    %s1751 = scalar_lea.vmem %s1, 292
    %1752 = vst [vmem:[%s1751] sm:%s1750] %v1748
    %s1753 = scalar_lea.vmem [#allocation0], 592
    %v1754 = vld [vmem:[%s1753] sm:%s1310]
    %s1756 = ssub.s32 16, 1
    %s1757 = scalar_lea.vmem %s1, 296
    %1758 = vst [vmem:[%s1757] sm:%s1756] %v1754
    %s1759 = scalar_lea.vmem [#allocation0], 600
    %v1760 = vld [vmem:[%s1759] sm:%s1310]
    %s1762 = ssub.s32 16, 1
    %s1763 = scalar_lea.vmem %s1, 300
    %1764 = vst [vmem:[%s1763] sm:%s1762] %v1760
    %s1765 = scalar_lea.vmem [#allocation0], 608
    %v1766 = vld [vmem:[%s1765] sm:%s1310]
    %s1768 = ssub.s32 16, 1
    %s1769 = scalar_lea.vmem %s1, 304
    %1770 = vst [vmem:[%s1769] sm:%s1768] %v1766
    %s1771 = scalar_lea.vmem [#allocation0], 616
    %v1772 = vld [vmem:[%s1771] sm:%s1310]
    %s1774 = ssub.s32 16, 1
    %s1775 = scalar_lea.vmem %s1, 308
    %1776 = vst [vmem:[%s1775] sm:%s1774] %v1772
    %s1777 = scalar_lea.vmem [#allocation0], 624
    %v1778 = vld [vmem:[%s1777] sm:%s1310]
    %s1780 = ssub.s32 16, 1
    %s1781 = scalar_lea.vmem %s1, 312
    %1782 = vst [vmem:[%s1781] sm:%s1780] %v1778
    %s1783 = scalar_lea.vmem [#allocation0], 632
    %v1784 = vld [vmem:[%s1783] sm:%s1310]
    %s1786 = ssub.s32 16, 1
    %s1787 = scalar_lea.vmem %s1, 316
    %1788 = vst [vmem:[%s1787] sm:%s1786] %v1784
    %s1789 = scalar_lea.vmem [#allocation0], 640
    %v1790 = vld [vmem:[%s1789] sm:%s1310]
    %s1792 = ssub.s32 16, 1
    %s1793 = scalar_lea.vmem %s1, 320
    %1794 = vst [vmem:[%s1793] sm:%s1792] %v1790
    %s1795 = scalar_lea.vmem [#allocation0], 648
    %v1796 = vld [vmem:[%s1795] sm:%s1310]
    %s1798 = ssub.s32 16, 1
    %s1799 = scalar_lea.vmem %s1, 324
    %1800 = vst [vmem:[%s1799] sm:%s1798] %v1796
    %s1801 = scalar_lea.vmem [#allocation0], 656
    %v1802 = vld [vmem:[%s1801] sm:%s1310]
    %s1804 = ssub.s32 16, 1
    %s1805 = scalar_lea.vmem %s1, 328
    %1806 = vst [vmem:[%s1805] sm:%s1804] %v1802
    %s1807 = scalar_lea.vmem [#allocation0], 664
    %v1808 = vld [vmem:[%s1807] sm:%s1310]
    %s1810 = ssub.s32 16, 1
    %s1811 = scalar_lea.vmem %s1, 332
    %1812 = vst [vmem:[%s1811] sm:%s1810] %v1808
    %s1813 = scalar_lea.vmem [#allocation0], 672
    %v1814 = vld [vmem:[%s1813] sm:%s1310]
    %s1816 = ssub.s32 16, 1
    %s1817 = scalar_lea.vmem %s1, 336
    %1818 = vst [vmem:[%s1817] sm:%s1816] %v1814
    %s1819 = scalar_lea.vmem [#allocation0], 680
    %v1820 = vld [vmem:[%s1819] sm:%s1310]
    %s1822 = ssub.s32 16, 1
    %s1823 = scalar_lea.vmem %s1, 340
    %1824 = vst [vmem:[%s1823] sm:%s1822] %v1820
    %s1825 = scalar_lea.vmem [#allocation0], 688
    %v1826 = vld [vmem:[%s1825] sm:%s1310]
    %s1828 = ssub.s32 16, 1
    %s1829 = scalar_lea.vmem %s1, 344
    %1830 = vst [vmem:[%s1829] sm:%s1828] %v1826
    %s1831 = scalar_lea.vmem [#allocation0], 696
    %v1832 = vld [vmem:[%s1831] sm:%s1310]
    %s1834 = ssub.s32 16, 1
    %s1835 = scalar_lea.vmem %s1, 348
    %1836 = vst [vmem:[%s1835] sm:%s1834] %v1832
    %s1837 = scalar_lea.vmem [#allocation0], 704
    %v1838 = vld [vmem:[%s1837] sm:%s1310]
    %s1840 = ssub.s32 16, 1
    %s1841 = scalar_lea.vmem %s1, 352
    %1842 = vst [vmem:[%s1841] sm:%s1840] %v1838
    %s1843 = scalar_lea.vmem [#allocation0], 712
    %v1844 = vld [vmem:[%s1843] sm:%s1310]
    %s1846 = ssub.s32 16, 1
    %s1847 = scalar_lea.vmem %s1, 356
    %1848 = vst [vmem:[%s1847] sm:%s1846] %v1844
    %s1849 = scalar_lea.vmem [#allocation0], 720
    %v1850 = vld [vmem:[%s1849] sm:%s1310]
    %s1852 = ssub.s32 16, 1
    %s1853 = scalar_lea.vmem %s1, 360
    %1854 = vst [vmem:[%s1853] sm:%s1852] %v1850
    %s1855 = scalar_lea.vmem [#allocation0], 728
    %v1856 = vld [vmem:[%s1855] sm:%s1310]
    %s1858 = ssub.s32 16, 1
    %s1859 = scalar_lea.vmem %s1, 364
    %1860 = vst [vmem:[%s1859] sm:%s1858] %v1856
    %s1861 = scalar_lea.vmem [#allocation0], 736
    %v1862 = vld [vmem:[%s1861] sm:%s1310]
    %s1864 = ssub.s32 16, 1
    %s1865 = scalar_lea.vmem %s1, 368
    %1866 = vst [vmem:[%s1865] sm:%s1864] %v1862
    %s1867 = scalar_lea.vmem [#allocation0], 744
    %v1868 = vld [vmem:[%s1867] sm:%s1310]
    %s1870 = ssub.s32 16, 1
    %s1871 = scalar_lea.vmem %s1, 372
    %1872 = vst [vmem:[%s1871] sm:%s1870] %v1868
    %s1873 = scalar_lea.vmem [#allocation0], 752
    %v1874 = vld [vmem:[%s1873] sm:%s1310]
    %s1876 = ssub.s32 16, 1
    %s1877 = scalar_lea.vmem %s1, 376
    %1878 = vst [vmem:[%s1877] sm:%s1876] %v1874
    %s1879 = scalar_lea.vmem [#allocation0], 760
    %v1880 = vld [vmem:[%s1879] sm:%s1310]
    %s1882 = ssub.s32 16, 1
    %s1883 = scalar_lea.vmem %s1, 380
    %1884 = vst [vmem:[%s1883] sm:%s1882] %v1880
    %s1885 = scalar_lea.vmem [#allocation0], 768
    %v1886 = vld [vmem:[%s1885] sm:%s1310]
    %s1888 = ssub.s32 16, 1
    %s1889 = scalar_lea.vmem %s1, 384
    %1890 = vst [vmem:[%s1889] sm:%s1888] %v1886
    %s1891 = scalar_lea.vmem [#allocation0], 776
    %v1892 = vld [vmem:[%s1891] sm:%s1310]
    %s1894 = ssub.s32 16, 1
    %s1895 = scalar_lea.vmem %s1, 388
    %1896 = vst [vmem:[%s1895] sm:%s1894] %v1892
    %s1897 = scalar_lea.vmem [#allocation0], 784
    %v1898 = vld [vmem:[%s1897] sm:%s1310]
    %s1900 = ssub.s32 16, 1
    %s1901 = scalar_lea.vmem %s1, 392
    %1902 = vst [vmem:[%s1901] sm:%s1900] %v1898
    %s1903 = scalar_lea.vmem [#allocation0], 792
    %v1904 = vld [vmem:[%s1903] sm:%s1310]
    %s1906 = ssub.s32 16, 1
    %s1907 = scalar_lea.vmem %s1, 396
    %1908 = vst [vmem:[%s1907] sm:%s1906] %v1904
    %s1909 = scalar_lea.vmem [#allocation0], 800
    %v1910 = vld [vmem:[%s1909] sm:%s1310]
    %s1912 = ssub.s32 16, 1
    %s1913 = scalar_lea.vmem %s1, 400
    %1914 = vst [vmem:[%s1913] sm:%s1912] %v1910
    %s1915 = scalar_lea.vmem [#allocation0], 808
    %v1916 = vld [vmem:[%s1915] sm:%s1310]
    %s1918 = ssub.s32 16, 1
    %s1919 = scalar_lea.vmem %s1, 404
    %1920 = vst [vmem:[%s1919] sm:%s1918] %v1916
    %s1921 = scalar_lea.vmem [#allocation0], 816
    %v1922 = vld [vmem:[%s1921] sm:%s1310]
    %s1924 = ssub.s32 16, 1
    %s1925 = scalar_lea.vmem %s1, 408
    %1926 = vst [vmem:[%s1925] sm:%s1924] %v1922
    %s1927 = scalar_lea.vmem [#allocation0], 824
    %v1928 = vld [vmem:[%s1927] sm:%s1310]
    %s1930 = ssub.s32 16, 1
    %s1931 = scalar_lea.vmem %s1, 412
    %1932 = vst [vmem:[%s1931] sm:%s1930] %v1928
    %s1933 = scalar_lea.vmem [#allocation0], 832
    %v1934 = vld [vmem:[%s1933] sm:%s1310]
    %s1936 = ssub.s32 16, 1
    %s1937 = scalar_lea.vmem %s1, 416
    %1938 = vst [vmem:[%s1937] sm:%s1936] %v1934
    %s1939 = scalar_lea.vmem [#allocation0], 840
    %v1940 = vld [vmem:[%s1939] sm:%s1310]
    %s1942 = ssub.s32 16, 1
    %s1943 = scalar_lea.vmem %s1, 420
    %1944 = vst [vmem:[%s1943] sm:%s1942] %v1940
    %s1945 = scalar_lea.vmem [#allocation0], 848
    %v1946 = vld [vmem:[%s1945] sm:%s1310]
    %s1948 = ssub.s32 16, 1
    %s1949 = scalar_lea.vmem %s1, 424
    %1950 = vst [vmem:[%s1949] sm:%s1948] %v1946
    %s1951 = scalar_lea.vmem [#allocation0], 856
    %v1952 = vld [vmem:[%s1951] sm:%s1310]
    %s1954 = ssub.s32 16, 1
    %s1955 = scalar_lea.vmem %s1, 428
    %1956 = vst [vmem:[%s1955] sm:%s1954] %v1952
    %s1957 = scalar_lea.vmem [#allocation0], 864
    %v1958 = vld [vmem:[%s1957] sm:%s1310]
    %s1960 = ssub.s32 16, 1
    %s1961 = scalar_lea.vmem %s1, 432
    %1962 = vst [vmem:[%s1961] sm:%s1960] %v1958
    %s1963 = scalar_lea.vmem [#allocation0], 872
    %v1964 = vld [vmem:[%s1963] sm:%s1310]
    %s1966 = ssub.s32 16, 1
    %s1967 = scalar_lea.vmem %s1, 436
    %1968 = vst [vmem:[%s1967] sm:%s1966] %v1964
    %s1969 = scalar_lea.vmem [#allocation0], 880
    %v1970 = vld [vmem:[%s1969] sm:%s1310]
    %s1972 = ssub.s32 16, 1
    %s1973 = scalar_lea.vmem %s1, 440
    %1974 = vst [vmem:[%s1973] sm:%s1972] %v1970
    %s1975 = scalar_lea.vmem [#allocation0], 888
    %v1976 = vld [vmem:[%s1975] sm:%s1310]
    %s1978 = ssub.s32 16, 1
    %s1979 = scalar_lea.vmem %s1, 444
    %1980 = vst [vmem:[%s1979] sm:%s1978] %v1976
    %s1981 = scalar_lea.vmem [#allocation0], 896
    %v1982 = vld [vmem:[%s1981] sm:%s1310]
    %s1984 = ssub.s32 16, 1
    %s1985 = scalar_lea.vmem %s1, 448
    %1986 = vst [vmem:[%s1985] sm:%s1984] %v1982
    %s1987 = scalar_lea.vmem [#allocation0], 904
    %v1988 = vld [vmem:[%s1987] sm:%s1310]
    %s1990 = ssub.s32 16, 1
    %s1991 = scalar_lea.vmem %s1, 452
    %1992 = vst [vmem:[%s1991] sm:%s1990] %v1988
    %s1993 = scalar_lea.vmem [#allocation0], 912
    %v1994 = vld [vmem:[%s1993] sm:%s1310]
    %s1996 = ssub.s32 16, 1
    %s1997 = scalar_lea.vmem %s1, 456
    %1998 = vst [vmem:[%s1997] sm:%s1996] %v1994
    %s1999 = scalar_lea.vmem [#allocation0], 920
    %v2000 = vld [vmem:[%s1999] sm:%s1310]
    %s2002 = ssub.s32 16, 1
    %s2003 = scalar_lea.vmem %s1, 460
    %2004 = vst [vmem:[%s2003] sm:%s2002] %v2000
    %s2005 = scalar_lea.vmem [#allocation0], 928
    %v2006 = vld [vmem:[%s2005] sm:%s1310]
    %s2008 = ssub.s32 16, 1
    %s2009 = scalar_lea.vmem %s1, 464
    %2010 = vst [vmem:[%s2009] sm:%s2008] %v2006
    %s2011 = scalar_lea.vmem [#allocation0], 936
    %v2012 = vld [vmem:[%s2011] sm:%s1310]
    %s2014 = ssub.s32 16, 1
    %s2015 = scalar_lea.vmem %s1, 468
    %2016 = vst [vmem:[%s2015] sm:%s2014] %v2012
    %s2017 = scalar_lea.vmem [#allocation0], 944
    %v2018 = vld [vmem:[%s2017] sm:%s1310]
    %s2020 = ssub.s32 16, 1
    %s2021 = scalar_lea.vmem %s1, 472
    %2022 = vst [vmem:[%s2021] sm:%s2020] %v2018
    %s2023 = scalar_lea.vmem [#allocation0], 952
    %v2024 = vld [vmem:[%s2023] sm:%s1310]
    %s2026 = ssub.s32 16, 1
    %s2027 = scalar_lea.vmem %s1, 476
    %2028 = vst [vmem:[%s2027] sm:%s2026] %v2024
    %s2029 = scalar_lea.vmem [#allocation0], 960
    %v2030 = vld [vmem:[%s2029] sm:%s1310]
    %s2032 = ssub.s32 16, 1
    %s2033 = scalar_lea.vmem %s1, 480
    %2034 = vst [vmem:[%s2033] sm:%s2032] %v2030
    %s2035 = scalar_lea.vmem [#allocation0], 968
    %v2036 = vld [vmem:[%s2035] sm:%s1310]
    %s2038 = ssub.s32 16, 1
    %s2039 = scalar_lea.vmem %s1, 484
    %2040 = vst [vmem:[%s2039] sm:%s2038] %v2036
    %s2041 = scalar_lea.vmem [#allocation0], 976
    %v2042 = vld [vmem:[%s2041] sm:%s1310]
    %s2044 = ssub.s32 16, 1
    %s2045 = scalar_lea.vmem %s1, 488
    %2046 = vst [vmem:[%s2045] sm:%s2044] %v2042
    %s2047 = scalar_lea.vmem [#allocation0], 984
    %v2048 = vld [vmem:[%s2047] sm:%s1310]
    %s2050 = ssub.s32 16, 1
    %s2051 = scalar_lea.vmem %s1, 492
    %2052 = vst [vmem:[%s2051] sm:%s2050] %v2048
    %s2053 = scalar_lea.vmem [#allocation0], 992
    %v2054 = vld [vmem:[%s2053] sm:%s1310]
    %s2056 = ssub.s32 16, 1
    %s2057 = scalar_lea.vmem %s1, 496
    %2058 = vst [vmem:[%s2057] sm:%s2056] %v2054
    %s2059 = scalar_lea.vmem [#allocation0], 1000
    %v2060 = vld [vmem:[%s2059] sm:%s1310]
    %s2062 = ssub.s32 16, 1
    %s2063 = scalar_lea.vmem %s1, 500
    %2064 = vst [vmem:[%s2063] sm:%s2062] %v2060
    %s2065 = scalar_lea.vmem [#allocation0], 1008
    %v2066 = vld [vmem:[%s2065] sm:%s1310]
    %s2068 = ssub.s32 16, 1
    %s2069 = scalar_lea.vmem %s1, 504
    %2070 = vst [vmem:[%s2069] sm:%s2068] %v2066
    %s2071 = scalar_lea.vmem [#allocation0], 1016
    %v2072 = vld [vmem:[%s2071] sm:%s1310]
    %s2074 = ssub.s32 16, 1
    %s2075 = scalar_lea.vmem %s1, 508
    %2076 = vst [vmem:[%s2075] sm:%s2074] %v2072

// kernel: reverse.1
$region0: #{reverse.1}
  #allocation0 [shape = 's32[1]{0}', space=sflag, size = 0x4, scoped, tag = 'scoped memory for reverse.1']
  %s0 = inlined_call_operand.vmem [shape: f32[2,4,16,16,7], index: 0, kind: input, shape index: {}]
  %s1 = inlined_call_operand.vmem [shape: f32[2,4,16,16,7], index: 1, kind: output, shape index: {}]
  %s2 = scalar_lea.vmem %s0, 96
  %v3 = vld [vmem:[%s2] sm:$0xff]
  %4 = vst [vmem:[%s1] sm:$0xff] %v3
  %s5 = scalar_lea.vmem %s0, 544
  %v6 = vld [vmem:[%s5] sm:$0xff]
  %s7 = scalar_lea.vmem %s1, 448
  %8 = vst [vmem:[%s7] sm:$0xff] %v6
  %s9 = scalar_lea.vmem %s0, 208
  %v10 = vld [vmem:[%s9] sm:$0xff]
  %s11 = scalar_lea.vmem %s1, 112
  %12 = vst [vmem:[%s11] sm:$0xff] %v10
  %s13 = scalar_lea.vmem %s0, 656
  %v14 = vld [vmem:[%s13] sm:$0xff]
  %s15 = scalar_lea.vmem %s1, 560
  %16 = vst [vmem:[%s15] sm:$0xff] %v14
  %s17 = scalar_lea.vmem %s0, 320
  %v18 = vld [vmem:[%s17] sm:$0xff]
  %s19 = scalar_lea.vmem %s1, 224
  %20 = vst [vmem:[%s19] sm:$0xff] %v18
  %s21 = scalar_lea.vmem %s0, 768
  %v22 = vld [vmem:[%s21] sm:$0xff]
  %s23 = scalar_lea.vmem %s1, 672
  %24 = vst [vmem:[%s23] sm:$0xff] %v22
  %s25 = scalar_lea.vmem %s0, 432
  %v26 = vld [vmem:[%s25] sm:$0xff]
  %s27 = scalar_lea.vmem %s1, 336
  %28 = vst [vmem:[%s27] sm:$0xff] %v26
  %s29 = scalar_lea.vmem %s0, 880
  %v30 = vld [vmem:[%s29] sm:$0xff]
  %s31 = scalar_lea.vmem %s1, 784
  %32 = vst [vmem:[%s31] sm:$0xff] %v30
  %s33 = scalar_lea.vmem %s0, 80
  %v34 = vld [vmem:[%s33] sm:$0xff]
  %s35 = scalar_lea.vmem %s1, 16
  %36 = vst [vmem:[%s35] sm:$0xff] %v34
  %s37 = scalar_lea.vmem %s0, 528
  %v38 = vld [vmem:[%s37] sm:$0xff]
  %s39 = scalar_lea.vmem %s1, 464
  %40 = vst [vmem:[%s39] sm:$0xff] %v38
  %s41 = scalar_lea.vmem %s0, 192
  %v42 = vld [vmem:[%s41] sm:$0xff]
  %s43 = scalar_lea.vmem %s1, 128
  %44 = vst [vmem:[%s43] sm:$0xff] %v42
  %s45 = scalar_lea.vmem %s0, 640
  %v46 = vld [vmem:[%s45] sm:$0xff]
  %s47 = scalar_lea.vmem %s1, 576
  %48 = vst [vmem:[%s47] sm:$0xff] %v46
  %s49 = scalar_lea.vmem %s0, 304
  %v50 = vld [vmem:[%s49] sm:$0xff]
  %s51 = scalar_lea.vmem %s1, 240
  %52 = vst [vmem:[%s51] sm:$0xff] %v50
  %s53 = scalar_lea.vmem %s0, 752
  %v54 = vld [vmem:[%s53] sm:$0xff]
  %s55 = scalar_lea.vmem %s1, 688
  %56 = vst [vmem:[%s55] sm:$0xff] %v54
  %s57 = scalar_lea.vmem %s0, 416
  %v58 = vld [vmem:[%s57] sm:$0xff]
  %s59 = scalar_lea.vmem %s1, 352
  %60 = vst [vmem:[%s59] sm:$0xff] %v58
  %s61 = scalar_lea.vmem %s0, 864
  %v62 = vld [vmem:[%s61] sm:$0xff]
  %s63 = scalar_lea.vmem %s1, 800
  %64 = vst [vmem:[%s63] sm:$0xff] %v62
  %s65 = scalar_lea.vmem %s0, 64
  %v66 = vld [vmem:[%s65] sm:$0xff]
  %s67 = scalar_lea.vmem %s1, 32
  %68 = vst [vmem:[%s67] sm:$0xff] %v66
  %s69 = scalar_lea.vmem %s0, 512
  %v70 = vld [vmem:[%s69] sm:$0xff]
  %s71 = scalar_lea.vmem %s1, 480
  %72 = vst [vmem:[%s71] sm:$0xff] %v70
  %s73 = scalar_lea.vmem %s0, 176
  %v74 = vld [vmem:[%s73] sm:$0xff]
  %s75 = scalar_lea.vmem %s1, 144
  %76 = vst [vmem:[%s75] sm:$0xff] %v74
  %s77 = scalar_lea.vmem %s0, 624
  %v78 = vld [vmem:[%s77] sm:$0xff]
  %s79 = scalar_lea.vmem %s1, 592
  %80 = vst [vmem:[%s79] sm:$0xff] %v78
  %s81 = scalar_lea.vmem %s0, 288
  %v82 = vld [vmem:[%s81] sm:$0xff]
  %s83 = scalar_lea.vmem %s1, 256
  %84 = vst [vmem:[%s83] sm:$0xff] %v82
  %s85 = scalar_lea.vmem %s0, 736
  %v86 = vld [vmem:[%s85] sm:$0xff]
  %s87 = scalar_lea.vmem %s1, 704
  %88 = vst [vmem:[%s87] sm:$0xff] %v86
  %s89 = scalar_lea.vmem %s0, 400
  %v90 = vld [vmem:[%s89] sm:$0xff]
  %s91 = scalar_lea.vmem %s1, 368
  %92 = vst [vmem:[%s91] sm:$0xff] %v90
  %s93 = scalar_lea.vmem %s0, 848
  %v94 = vld [vmem:[%s93] sm:$0xff]
  %s95 = scalar_lea.vmem %s1, 816
  %96 = vst [vmem:[%s95] sm:$0xff] %v94
  %s97 = scalar_lea.vmem %s0, 48
  %v98 = vld [vmem:[%s97] sm:$0xff]
  %s99 = scalar_lea.vmem %s1, 48
  %100 = vst [vmem:[%s99] sm:$0xff] %v98
  %s101 = scalar_lea.vmem %s0, 496
  %v102 = vld [vmem:[%s101] sm:$0xff]
  %s103 = scalar_lea.vmem %s1, 496
  %104 = vst [vmem:[%s103] sm:$0xff] %v102
  %s105 = scalar_lea.vmem %s0, 160
  %v106 = vld [vmem:[%s105] sm:$0xff]
  %s107 = scalar_lea.vmem %s1, 160
  %108 = vst [vmem:[%s107] sm:$0xff] %v106
  %s109 = scalar_lea.vmem %s0, 608
  %v110 = vld [vmem:[%s109] sm:$0xff]
  %s111 = scalar_lea.vmem %s1, 608
  %112 = vst [vmem:[%s111] sm:$0xff] %v110
  %s113 = scalar_lea.vmem %s0, 272
  %v114 = vld [vmem:[%s113] sm:$0xff]
  %s115 = scalar_lea.vmem %s1, 272
  %116 = vst [vmem:[%s115] sm:$0xff] %v114
  %s117 = scalar_lea.vmem %s0, 720
  %v118 = vld [vmem:[%s117] sm:$0xff]
  %s119 = scalar_lea.vmem %s1, 720
  %120 = vst [vmem:[%s119] sm:$0xff] %v118
  %s121 = scalar_lea.vmem %s0, 384
  %v122 = vld [vmem:[%s121] sm:$0xff]
  %s123 = scalar_lea.vmem %s1, 384
  %124 = vst [vmem:[%s123] sm:$0xff] %v122
  %s125 = scalar_lea.vmem %s0, 832
  %v126 = vld [vmem:[%s125] sm:$0xff]
  %s127 = scalar_lea.vmem %s1, 832
  %128 = vst [vmem:[%s127] sm:$0xff] %v126
  %s129 = scalar_lea.vmem %s0, 32
  %v130 = vld [vmem:[%s129] sm:$0xff]
  %s131 = scalar_lea.vmem %s1, 64
  %132 = vst [vmem:[%s131] sm:$0xff] %v130
  %s133 = scalar_lea.vmem %s0, 480
  %v134 = vld [vmem:[%s133] sm:$0xff]
  %s135 = scalar_lea.vmem %s1, 512
  %136 = vst [vmem:[%s135] sm:$0xff] %v134
  %s137 = scalar_lea.vmem %s0, 144
  %v138 = vld [vmem:[%s137] sm:$0xff]
  %s139 = scalar_lea.vmem %s1, 176
  %140 = vst [vmem:[%s139] sm:$0xff] %v138
  %s141 = scalar_lea.vmem %s0, 592
  %v142 = vld [vmem:[%s141] sm:$0xff]
  %s143 = scalar_lea.vmem %s1, 624
  %144 = vst [vmem:[%s143] sm:$0xff] %v142
  %s145 = scalar_lea.vmem %s0, 256
  %v146 = vld [vmem:[%s145] sm:$0xff]
  %s147 = scalar_lea.vmem %s1, 288
  %148 = vst [vmem:[%s147] sm:$0xff] %v146
  %s149 = scalar_lea.vmem %s0, 704
  %v150 = vld [vmem:[%s149] sm:$0xff]
  %s151 = scalar_lea.vmem %s1, 736
  %152 = vst [vmem:[%s151] sm:$0xff] %v150
  %s153 = scalar_lea.vmem %s0, 368
  %v154 = vld [vmem:[%s153] sm:$0xff]
  %s155 = scalar_lea.vmem %s1, 400
  %156 = vst [vmem:[%s155] sm:$0xff] %v154
  %s157 = scalar_lea.vmem %s0, 816
  %v158 = vld [vmem:[%s157] sm:$0xff]
  %s159 = scalar_lea.vmem %s1, 848
  %160 = vst [vmem:[%s159] sm:$0xff] %v158
  %s161 = scalar_lea.vmem %s0, 16
  %v162 = vld [vmem:[%s161] sm:$0xff]
  %s163 = scalar_lea.vmem %s1, 80
  %164 = vst [vmem:[%s163] sm:$0xff] %v162
  %s165 = scalar_lea.vmem %s0, 464
  %v166 = vld [vmem:[%s165] sm:$0xff]
  %s167 = scalar_lea.vmem %s1, 528
  %168 = vst [vmem:[%s167] sm:$0xff] %v166
  %s169 = scalar_lea.vmem %s0, 128
  %v170 = vld [vmem:[%s169] sm:$0xff]
  %s171 = scalar_lea.vmem %s1, 192
  %172 = vst [vmem:[%s171] sm:$0xff] %v170
  %s173 = scalar_lea.vmem %s0, 576
  %v174 = vld [vmem:[%s173] sm:$0xff]
  %s175 = scalar_lea.vmem %s1, 640
  %176 = vst [vmem:[%s175] sm:$0xff] %v174
  %s177 = scalar_lea.vmem %s0, 240
  %v178 = vld [vmem:[%s177] sm:$0xff]
  %s179 = scalar_lea.vmem %s1, 304
  %180 = vst [vmem:[%s179] sm:$0xff] %v178
  %s181 = scalar_lea.vmem %s0, 688
  %v182 = vld [vmem:[%s181] sm:$0xff]
  %s183 = scalar_lea.vmem %s1, 752
  %184 = vst [vmem:[%s183] sm:$0xff] %v182
  %s185 = scalar_lea.vmem %s0, 352
  %v186 = vld [vmem:[%s185] sm:$0xff]
  %s187 = scalar_lea.vmem %s1, 416
  %188 = vst [vmem:[%s187] sm:$0xff] %v186
  %s189 = scalar_lea.vmem %s0, 800
  %v190 = vld [vmem:[%s189] sm:$0xff]
  %s191 = scalar_lea.vmem %s1, 864
  %192 = vst [vmem:[%s191] sm:$0xff] %v190
  %v193 = vld [vmem:[%s0] sm:$0xff]
  %s194 = scalar_lea.vmem %s1, 96
  %195 = vst [vmem:[%s194] sm:$0xff] %v193
  %s196 = scalar_lea.vmem %s0, 448
  %v197 = vld [vmem:[%s196] sm:$0xff]
  %s198 = scalar_lea.vmem %s1, 544
  %199 = vst [vmem:[%s198] sm:$0xff] %v197
  %s200 = scalar_lea.vmem %s0, 112
  %v201 = vld [vmem:[%s200] sm:$0xff]
  %s202 = scalar_lea.vmem %s1, 208
  %203 = vst [vmem:[%s202] sm:$0xff] %v201
  %s204 = scalar_lea.vmem %s0, 560
  %v205 = vld [vmem:[%s204] sm:$0xff]
  %s206 = scalar_lea.vmem %s1, 656
  %207 = vst [vmem:[%s206] sm:$0xff] %v205
  %s208 = scalar_lea.vmem %s0, 224
  %v209 = vld [vmem:[%s208] sm:$0xff]
  %s210 = scalar_lea.vmem %s1, 320
  %211 = vst [vmem:[%s210] sm:$0xff] %v209
  %s212 = scalar_lea.vmem %s0, 672
  %v213 = vld [vmem:[%s212] sm:$0xff]
  %s214 = scalar_lea.vmem %s1, 768
  %215 = vst [vmem:[%s214] sm:$0xff] %v213
  %s216 = scalar_lea.vmem %s0, 336
  %v217 = vld [vmem:[%s216] sm:$0xff]
  %s218 = scalar_lea.vmem %s1, 432
  %219 = vst [vmem:[%s218] sm:$0xff] %v217
  %s220 = scalar_lea.vmem %s0, 784
  %v221 = vld [vmem:[%s220] sm:$0xff]
  %s222 = scalar_lea.vmem %s1, 880
  %223 = vst [vmem:[%s222] sm:$0xff] %v221
  %s224 = scalar_lea.vmem %s0, 104
  %v225 = vld [vmem:[%s224] sm:$0xff]
  %s226 = scalar_lea.vmem %s1, 8
  %227 = vst [vmem:[%s226] sm:$0xff] %v225
  %s228 = scalar_lea.vmem %s0, 552
  %v229 = vld [vmem:[%s228] sm:$0xff]
  %s230 = scalar_lea.vmem %s1, 456
  %231 = vst [vmem:[%s230] sm:$0xff] %v229
  %s232 = scalar_lea.vmem %s0, 216
  %v233 = vld [vmem:[%s232] sm:$0xff]
  %s234 = scalar_lea.vmem %s1, 120
  %235 = vst [vmem:[%s234] sm:$0xff] %v233
  %s236 = scalar_lea.vmem %s0, 664
  %v237 = vld [vmem:[%s236] sm:$0xff]
  %s238 = scalar_lea.vmem %s1, 568
  %239 = vst [vmem:[%s238] sm:$0xff] %v237
  %s240 = scalar_lea.vmem %s0, 328
  %v241 = vld [vmem:[%s240] sm:$0xff]
  %s242 = scalar_lea.vmem %s1, 232
  %243 = vst [vmem:[%s242] sm:$0xff] %v241
  %s244 = scalar_lea.vmem %s0, 776
  %v245 = vld [vmem:[%s244] sm:$0xff]
  %s246 = scalar_lea.vmem %s1, 680
  %247 = vst [vmem:[%s246] sm:$0xff] %v245
  %s248 = scalar_lea.vmem %s0, 440
  %v249 = vld [vmem:[%s248] sm:$0xff]
  %s250 = scalar_lea.vmem %s1, 344
  %251 = vst [vmem:[%s250] sm:$0xff] %v249
  %s252 = scalar_lea.vmem %s0, 888
  %v253 = vld [vmem:[%s252] sm:$0xff]
  %s254 = scalar_lea.vmem %s1, 792
  %255 = vst [vmem:[%s254] sm:$0xff] %v253
  %s256 = scalar_lea.vmem %s0, 88
  %v257 = vld [vmem:[%s256] sm:$0xff]
  %s258 = scalar_lea.vmem %s1, 24
  %259 = vst [vmem:[%s258] sm:$0xff] %v257
  %s260 = scalar_lea.vmem %s0, 536
  %v261 = vld [vmem:[%s260] sm:$0xff]
  %s262 = scalar_lea.vmem %s1, 472
  %263 = vst [vmem:[%s262] sm:$0xff] %v261
  %s264 = scalar_lea.vmem %s0, 200
  %v265 = vld [vmem:[%s264] sm:$0xff]
  %s266 = scalar_lea.vmem %s1, 136
  %267 = vst [vmem:[%s266] sm:$0xff] %v265
  %s268 = scalar_lea.vmem %s0, 648
  %v269 = vld [vmem:[%s268] sm:$0xff]
  %s270 = scalar_lea.vmem %s1, 584
  %271 = vst [vmem:[%s270] sm:$0xff] %v269
  %s272 = scalar_lea.vmem %s0, 312
  %v273 = vld [vmem:[%s272] sm:$0xff]
  %s274 = scalar_lea.vmem %s1, 248
  %275 = vst [vmem:[%s274] sm:$0xff] %v273
  %s276 = scalar_lea.vmem %s0, 760
  %v277 = vld [vmem:[%s276] sm:$0xff]
  %s278 = scalar_lea.vmem %s1, 696
  %279 = vst [vmem:[%s278] sm:$0xff] %v277
  %s280 = scalar_lea.vmem %s0, 424
  %v281 = vld [vmem:[%s280] sm:$0xff]
  %s282 = scalar_lea.vmem %s1, 360
  %283 = vst [vmem:[%s282] sm:$0xff] %v281
  %s284 = scalar_lea.vmem %s0, 872
  %v285 = vld [vmem:[%s284] sm:$0xff]
  %s286 = scalar_lea.vmem %s1, 808
  %287 = vst [vmem:[%s286] sm:$0xff] %v285
  %s288 = scalar_lea.vmem %s0, 72
  %v289 = vld [vmem:[%s288] sm:$0xff]
  %s290 = scalar_lea.vmem %s1, 40
  %291 = vst [vmem:[%s290] sm:$0xff] %v289
  %s292 = scalar_lea.vmem %s0, 520
  %v293 = vld [vmem:[%s292] sm:$0xff]
  %s294 = scalar_lea.vmem %s1, 488
  %295 = vst [vmem:[%s294] sm:$0xff] %v293
  %s296 = scalar_lea.vmem %s0, 184
  %v297 = vld [vmem:[%s296] sm:$0xff]
  %s298 = scalar_lea.vmem %s1, 152
  %299 = vst [vmem:[%s298] sm:$0xff] %v297
  %s300 = scalar_lea.vmem %s0, 632
  %v301 = vld [vmem:[%s300] sm:$0xff]
  %s302 = scalar_lea.vmem %s1, 600
  %303 = vst [vmem:[%s302] sm:$0xff] %v301
  %s304 = scalar_lea.vmem %s0, 296
  %v305 = vld [vmem:[%s304] sm:$0xff]
  %s306 = scalar_lea.vmem %s1, 264
  %307 = vst [vmem:[%s306] sm:$0xff] %v305
  %s308 = scalar_lea.vmem %s0, 744
  %v309 = vld [vmem:[%s308] sm:$0xff]
  %s310 = scalar_lea.vmem %s1, 712
  %311 = vst [vmem:[%s310] sm:$0xff] %v309
  %s312 = scalar_lea.vmem %s0, 408
  %v313 = vld [vmem:[%s312] sm:$0xff]
  %s314 = scalar_lea.vmem %s1, 376
  %315 = vst [vmem:[%s314] sm:$0xff] %v313
  %s316 = scalar_lea.vmem %s0, 856
  %v317 = vld [vmem:[%s316] sm:$0xff]
  %s318 = scalar_lea.vmem %s1, 824
  %319 = vst [vmem:[%s318] sm:$0xff] %v317
  %s320 = scalar_lea.vmem %s0, 56
  %v321 = vld [vmem:[%s320] sm:$0xff]
  %s322 = scalar_lea.vmem %s1, 56
  %323 = vst [vmem:[%s322] sm:$0xff] %v321
  %s324 = scalar_lea.vmem %s0, 504
  %v325 = vld [vmem:[%s324] sm:$0xff]
  %s326 = scalar_lea.vmem %s1, 504
  %327 = vst [vmem:[%s326] sm:$0xff] %v325
  %s328 = scalar_lea.vmem %s0, 168
  %v329 = vld [vmem:[%s328] sm:$0xff]
  %s330 = scalar_lea.vmem %s1, 168
  %331 = vst [vmem:[%s330] sm:$0xff] %v329
  %s332 = scalar_lea.vmem %s0, 616
  %v333 = vld [vmem:[%s332] sm:$0xff]
  %s334 = scalar_lea.vmem %s1, 616
  %335 = vst [vmem:[%s334] sm:$0xff] %v333
  %s336 = scalar_lea.vmem %s0, 280
  %v337 = vld [vmem:[%s336] sm:$0xff]
  %s338 = scalar_lea.vmem %s1, 280
  %339 = vst [vmem:[%s338] sm:$0xff] %v337
  %s340 = scalar_lea.vmem %s0, 728
  %v341 = vld [vmem:[%s340] sm:$0xff]
  %s342 = scalar_lea.vmem %s1, 728
  %343 = vst [vmem:[%s342] sm:$0xff] %v341
  %s344 = scalar_lea.vmem %s0, 392
  %v345 = vld [vmem:[%s344] sm:$0xff]
  %s346 = scalar_lea.vmem %s1, 392
  %347 = vst [vmem:[%s346] sm:$0xff] %v345
  %s348 = scalar_lea.vmem %s0, 840
  %v349 = vld [vmem:[%s348] sm:$0xff]
  %s350 = scalar_lea.vmem %s1, 840
  %351 = vst [vmem:[%s350] sm:$0xff] %v349
  %s352 = scalar_lea.vmem %s0, 40
  %v353 = vld [vmem:[%s352] sm:$0xff]
  %s354 = scalar_lea.vmem %s1, 72
  %355 = vst [vmem:[%s354] sm:$0xff] %v353
  %s356 = scalar_lea.vmem %s0, 488
  %v357 = vld [vmem:[%s356] sm:$0xff]
  %s358 = scalar_lea.vmem %s1, 520
  %359 = vst [vmem:[%s358] sm:$0xff] %v357
  %s360 = scalar_lea.vmem %s0, 152
  %v361 = vld [vmem:[%s360] sm:$0xff]
  %s362 = scalar_lea.vmem %s1, 184
  %363 = vst [vmem:[%s362] sm:$0xff] %v361
  %s364 = scalar_lea.vmem %s0, 600
  %v365 = vld [vmem:[%s364] sm:$0xff]
  %s366 = scalar_lea.vmem %s1, 632
  %367 = vst [vmem:[%s366] sm:$0xff] %v365
  %s368 = scalar_lea.vmem %s0, 264
  %v369 = vld [vmem:[%s368] sm:$0xff]
  %s370 = scalar_lea.vmem %s1, 296
  %371 = vst [vmem:[%s370] sm:$0xff] %v369
  %s372 = scalar_lea.vmem %s0, 712
  %v373 = vld [vmem:[%s372] sm:$0xff]
  %s374 = scalar_lea.vmem %s1, 744
  %375 = vst [vmem:[%s374] sm:$0xff] %v373
  %s376 = scalar_lea.vmem %s0, 376
  %v377 = vld [vmem:[%s376] sm:$0xff]
  %s378 = scalar_lea.vmem %s1, 408
  %379 = vst [vmem:[%s378] sm:$0xff] %v377
  %s380 = scalar_lea.vmem %s0, 824
  %v381 = vld [vmem:[%s380] sm:$0xff]
  %s382 = scalar_lea.vmem %s1, 856
  %383 = vst [vmem:[%s382] sm:$0xff] %v381
  %s384 = scalar_lea.vmem %s0, 24
  %v385 = vld [vmem:[%s384] sm:$0xff]
  %s386 = scalar_lea.vmem %s1, 88
  %387 = vst [vmem:[%s386] sm:$0xff] %v385
  %s388 = scalar_lea.vmem %s0, 472
  %v389 = vld [vmem:[%s388] sm:$0xff]
  %s390 = scalar_lea.vmem %s1, 536
  %391 = vst [vmem:[%s390] sm:$0xff] %v389
  %s392 = scalar_lea.vmem %s0, 136
  %v393 = vld [vmem:[%s392] sm:$0xff]
  %s394 = scalar_lea.vmem %s1, 200
  %395 = vst [vmem:[%s394] sm:$0xff] %v393
  %s396 = scalar_lea.vmem %s0, 584
  %v397 = vld [vmem:[%s396] sm:$0xff]
  %s398 = scalar_lea.vmem %s1, 648
  %399 = vst [vmem:[%s398] sm:$0xff] %v397
  %s400 = scalar_lea.vmem %s0, 248
  %v401 = vld [vmem:[%s400] sm:$0xff]
  %s402 = scalar_lea.vmem %s1, 312
  %403 = vst [vmem:[%s402] sm:$0xff] %v401
  %s404 = scalar_lea.vmem %s0, 696
  %v405 = vld [vmem:[%s404] sm:$0xff]
  %s406 = scalar_lea.vmem %s1, 760
  %407 = vst [vmem:[%s406] sm:$0xff] %v405
  %s408 = scalar_lea.vmem %s0, 360
  %v409 = vld [vmem:[%s408] sm:$0xff]
  %s410 = scalar_lea.vmem %s1, 424
  %411 = vst [vmem:[%s410] sm:$0xff] %v409
  %s412 = scalar_lea.vmem %s0, 808
  %v413 = vld [vmem:[%s412] sm:$0xff]
  %s414 = scalar_lea.vmem %s1, 872
  %415 = vst [vmem:[%s414] sm:$0xff] %v413
  %s416 = scalar_lea.vmem %s0, 8
  %v417 = vld [vmem:[%s416] sm:$0xff]
  %s418 = scalar_lea.vmem %s1, 104
  %419 = vst [vmem:[%s418] sm:$0xff] %v417
  %s420 = scalar_lea.vmem %s0, 456
  %v421 = vld [vmem:[%s420] sm:$0xff]
  %s422 = scalar_lea.vmem %s1, 552
  %423 = vst [vmem:[%s422] sm:$0xff] %v421
  %s424 = scalar_lea.vmem %s0, 120
  %v425 = vld [vmem:[%s424] sm:$0xff]
  %s426 = scalar_lea.vmem %s1, 216
  %427 = vst [vmem:[%s426] sm:$0xff] %v425
  %s428 = scalar_lea.vmem %s0, 568
  %v429 = vld [vmem:[%s428] sm:$0xff]
  %s430 = scalar_lea.vmem %s1, 664
  %431 = vst [vmem:[%s430] sm:$0xff] %v429
  %s432 = scalar_lea.vmem %s0, 232
  %v433 = vld [vmem:[%s432] sm:$0xff]
  %s434 = scalar_lea.vmem %s1, 328
  %435 = vst [vmem:[%s434] sm:$0xff] %v433
  %s436 = scalar_lea.vmem %s0, 680
  %v437 = vld [vmem:[%s436] sm:$0xff]
  %s438 = scalar_lea.vmem %s1, 776
  %439 = vst [vmem:[%s438] sm:$0xff] %v437
  %s440 = scalar_lea.vmem %s0, 344
  %v441 = vld [vmem:[%s440] sm:$0xff]
  %s442 = scalar_lea.vmem %s1, 440
  %443 = vst [vmem:[%s442] sm:$0xff] %v441
  %s444 = scalar_lea.vmem %s0, 792
  %v445 = vld [vmem:[%s444] sm:$0xff]
  %s446 = scalar_lea.vmem %s1, 888
  %447 = vst [vmem:[%s446] sm:$0xff] %v445

</llo_original>
